<compile_context>
chip_gen: v7x
topology: tpu7x:2x2x1
jax: 0.10.0
libtpu: 0.0.40
codegen_flags: <defaults>
</compile_context>

<pallas_src>
import functools

import jax
import jax.numpy as jnp
from jax import lax
from jax.experimental import pallas as pl
from jax.experimental.pallas import tpu as pltpu


def _nn_kernel(x_ref, t1_ref, b1_ref, bd2_ref, b2_ref, t3_ref, b3_ref,
               out_ref, h1_ref, pad_ref, *, B, H, W, Hid, Cout):
    f32 = jnp.float32
    bf16 = jnp.bfloat16

    # Hoisted bias broadcasts (JAX does not CSE broadcast_in_dim inside loops).
    b1_full = jnp.broadcast_to(b1_ref[...], (H, W * Hid))
    b2_full = jnp.broadcast_to(b2_ref[...], (B * H, W * Hid))

    # ---- conv1: 3x3 zero-pad conv = 3 row-slab matmuls per image (bf16 MXU) --
    for b in range(B):
        xb = x_ref[b]                                     # (H+2, (W+2)*Cin) bf16
        acc1 = jnp.dot(xb[0:H, :], t1_ref[0], preferred_element_type=f32)
        acc1 = acc1 + jnp.dot(xb[1:H + 1, :], t1_ref[1], preferred_element_type=f32)
        acc1 = acc1 + jnp.dot(xb[2:H + 2, :], t1_ref[2], preferred_element_type=f32)
        # ReLU1, cast once to bf16, aligned full-width store into the h1 stack.
        h1_ref[b * H:(b + 1) * H, :] = jnp.maximum(acc1 + b1_full, 0.0).astype(bf16)

    # ---- conv2: 1x1 conv = ONE block-diagonal matmul with M = B*H ------------
    acc2 = jnp.dot(h1_ref[...], bd2_ref[...], preferred_element_type=f32)
    h2 = jnp.maximum(acc2 + b2_full, 0.0).astype(bf16)    # (B*H, W*Hid) bf16

    # ---- ZeroConv2d: zero-pad only in height via bf16 scratch ----------------
    # (width zero-pad, the value-1 border, b3 and exp(3*scale) are folded into
    #  t3_ref / b3_ref at trace time)
    zrow = jnp.zeros((1, W * Hid), bf16)
    for b in range(B):
        base = b * (H + 2)
        pad_ref[base:base + 1, :] = zrow                          # top zero row
        pad_ref[base + H + 1:base + H + 2, :] = zrow              # bottom zero row
        pad_ref[base + 1:base + H + 1, :] = h2[b * H:(b + 1) * H, :]  # interior

    for b in range(B):
        base = b * (H + 2)
        acc3 = jnp.dot(pad_ref[base:base + H, :], t3_ref[0],
                       preferred_element_type=f32)
        acc3 = acc3 + jnp.dot(pad_ref[base + 1:base + H + 1, :], t3_ref[1],
                              preferred_element_type=f32)
        acc3 = acc3 + jnp.dot(pad_ref[base + 2:base + H + 2, :], t3_ref[2],
                              preferred_element_type=f32)
        out_ref[b] = (acc3 + b3_ref[...]).astype(out_ref.dtype)   # (H, W*Cout)


def _pick_batch_block(n, max_b=8):
    b = min(n, max_b)
    while n % b:
        b -= 1
    return b


def nn_forward(x_nchw, params):
    """x_nchw: (N, Cin, H, W) float32  ->  (N, Cout, H, W) float32."""
    w1, b1, w2, b2, w3, b3, scale = params
    N, Cin, H, W = x_nchw.shape
    Hid = w1.shape[3]
    Cout = w3.shape[3]
    Wp = W + 2
    B = _pick_batch_block(N)
    steps = N // B

    # NCHW -> NHWC, zero pad H and W, flatten (W, C) -> lane-dense rows, bf16.
    x = jnp.transpose(x_nchw, (0, 2, 3, 1))
    xp = jnp.pad(x, ((0, 0), (1, 1), (1, 1), (0, 0)))
    xp = xp.reshape(N, H + 2, Wp * Cin).astype(jnp.bfloat16)

    # conv1 block-Toeplitz over the PADDED width: E[kw, p, w] = 1 iff p == w+kw.
    p_idx = jnp.arange(Wp)[:, None]
    w_idx = jnp.arange(W)[None, :]
    E = jnp.stack([(p_idx == (w_idx + kw)) for kw in range(3)],
                  axis=0).astype(jnp.float32)                      # (3, W+2, W)
    T1 = jnp.einsum('kpw,hkcd->hpcwd', E, w1).reshape(3, Wp * Cin, W * Hid)

    # conv2 (1x1) as a block-diagonal matmul in the (rows, W*Hid) layout.
    BD2 = jnp.einsum('ij,cd->icjd', jnp.eye(W, dtype=w2.dtype),
                     w2).reshape(W * Hid, W * Hid)

    # ZeroConv2d: fold exp(3*scale) into the weights, build the Toeplitz over
    # the UNPADDED width with zero boundary: E0[kw, i, w] = 1 iff i == w+kw-1.
    exp3s = jnp.exp(3.0 * scale)                                   # (Cout,)
    w3s = w3 * exp3s[None, None, None, :]
    wi = jnp.arange(W)[:, None]
    wo = jnp.arange(W)[None, :]
    E0 = jnp.stack([(wi == (wo + kw - 1)) for kw in range(3)],
                   axis=0).astype(jnp.float32)                     # (3, W, W)
    T3 = jnp.einsum('kiw,hkcd->hicwd', E0, w3s).reshape(3, W * Hid, W * Cout)

    # Constant contribution of the value-1 border (pad value 1, zero interior).
    mask = jnp.zeros((H + 2, W + 2), jnp.float32)
    mask = mask.at[0, :].set(1.0).at[H + 1, :].set(1.0)
    mask = mask.at[:, 0].set(1.0).at[:, W + 1].set(1.0)
    w3sum = jnp.sum(w3, axis=2)                                    # (3, 3, Cout)
    border = jnp.zeros((H, W, Cout), jnp.float32)
    for kh in range(3):
        for kw in range(3):
            border = border + (mask[kh:kh + H, kw:kw + W][:, :, None] *
                               w3sum[kh, kw][None, None, :])
    b3_slab = ((border + b3[None, None, :]) * exp3s[None, None, :]
               ).reshape(H, W * Cout).astype(jnp.float32)

    # bf16 MXU operands, f32 accumulation.
    T1 = T1.astype(jnp.bfloat16)
    BD2 = BD2.astype(jnp.bfloat16)
    T3 = T3.astype(jnp.bfloat16)

    b1w = jnp.tile(b1, W).reshape(1, W * Hid).astype(jnp.float32)
    b2w = jnp.tile(b2, W).reshape(1, W * Hid).astype(jnp.float32)

    kernel = functools.partial(_nn_kernel, B=B, H=H, W=W, Hid=Hid, Cout=Cout)
    sem = ("arbitrary",) if steps == 1 else ("parallel",)

    out_flat = pl.pallas_call(
        kernel,
        out_shape=jax.ShapeDtypeStruct((N, H, W * Cout), jnp.float32),
        grid_spec=pltpu.PrefetchScalarGridSpec(
            num_scalar_prefetch=0,
            grid=(steps,),
            in_specs=[
                pl.BlockSpec((B, H + 2, Wp * Cin), lambda n: (n, 0, 0)),
                pl.BlockSpec((3, Wp * Cin, W * Hid), lambda n: (0, 0, 0)),
                pl.BlockSpec((1, W * Hid), lambda n: (0, 0)),
                pl.BlockSpec((W * Hid, W * Hid), lambda n: (0, 0)),
                pl.BlockSpec((1, W * Hid), lambda n: (0, 0)),
                pl.BlockSpec((3, W * Hid, W * Cout), lambda n: (0, 0, 0)),
                pl.BlockSpec((H, W * Cout), lambda n: (0, 0)),
            ],
            out_specs=pl.BlockSpec((B, H, W * Cout), lambda n: (n, 0, 0)),
            scratch_shapes=[
                pltpu.VMEM((B * H, W * Hid), jnp.bfloat16),        # h1 stack
                pltpu.VMEM((B * (H + 2), W * Hid), jnp.bfloat16),  # zero-padded h2
            ],
        ),
        compiler_params=pltpu.CompilerParams(dimension_semantics=sem),
    )(xp, T1, b1w, BD2, b2w, T3, b3_slab)

    out = out_flat.reshape(N, H, W, Cout)                  # lane-dense -> NHWC
    return jnp.transpose(out, (0, 3, 1, 2))                # NHWC -> NCHW


def ref_forward(x_nchw, params):
    """Pure-JAX f32 reference (lax.conv) for validation."""
    w1, b1, w2, b2, w3, b3, scale = params
    dn = ('NHWC', 'HWIO', 'NHWC')
    x = jnp.transpose(x_nchw, (0, 2, 3, 1))
    y = lax.conv_general_dilated(x, w1, (1, 1), 'SAME', dimension_numbers=dn)
    y = jnp.maximum(y + b1.reshape(1, 1, 1, -1), 0.0)
    y = jnp.einsum('nhwc,cd->nhwd', y, w2) + b2.reshape(1, 1, 1, -1)
    y = jnp.maximum(y, 0.0)
    yp = jnp.pad(y, ((0, 0), (1, 1), (1, 1), (0, 0)), constant_values=1.0)
    z = lax.conv_general_dilated(yp, w3, (1, 1), 'VALID', dimension_numbers=dn)
    z = (z + b3.reshape(1, 1, 1, -1)) * jnp.exp(3.0 * scale.reshape(1, 1, 1, -1))
    return jnp.transpose(z, (0, 3, 1, 2))


def init_params(key, input_size, hidden_size):
    cin = input_size // 2
    cout = input_size
    k1, k2, k3, k4 = jax.random.split(key, 4)
    # conv1 / conv2: deterministic pseudo-random init (HWIO layout).
    w1 = 0.1 * jax.random.normal(k1, (3, 3, cin, hidden_size), jnp.float32)
    b1 = 0.1 * jax.random.normal(k2, (hidden_size,), jnp.float32)
    w2 = 0.1 * jax.random.normal(k3, (hidden_size, hidden_size), jnp.float32)
    b2 = 0.1 * jax.random.normal(k4, (hidden_size,), jnp.float32)
    # ZeroConv2d: weight, bias and scale are zero-initialized per the module.
    w3 = jnp.zeros((3, 3, hidden_size, cout), jnp.float32)
    b3 = jnp.zeros((cout,), jnp.float32)
    scale = jnp.zeros((cout,), jnp.float32)
    return (w1, b1, w2, b2, w3, b3, scale)


if __name__ == "__main__":
    input_size = 8          # -> conv1 in_channels = 4, final out_channels = 8
    hidden_size = 32
    N, H, W = 2, 16, 16

    key = jax.random.PRNGKey(0)
    kx, kp = jax.random.split(key)
    x = jax.random.normal(kx, (N, input_size // 2, H, W), jnp.float32)

    fwd = jax.jit(nn_forward)

    # (1) Faithful module init (ZeroConv2d params are zero -> output is zero).
    params0 = init_params(kp, input_size, hidden_size)
    out0 = jax.block_until_ready(fwd(x, params0))
    ref0 = ref_forward(x, params0)
    assert out0.shape == (N, input_size, H, W), out0.shape
    assert jnp.allclose(out0, ref0, atol=3e-2, rtol=3e-2), "mismatch (zero init)"

    # (2) Non-zero ZeroConv2d params so conv3 / border / scale folding is tested.
    k5, k6, k7 = jax.random.split(jax.random.PRNGKey(1), 3)
    w1, b1, w2, b2, _, _, _ = params0
    w3 = 0.1 * jax.random.normal(k5, (3, 3, hidden_size, input_size), jnp.float32)
    b3 = 0.1 * jax.random.normal(k6, (input_size,), jnp.float32)
    scale = 0.1 * jax.random.normal(k7, (input_size,), jnp.float32)
    params1 = (w1, b1, w2, b2, w3, b3, scale)
    out1 = jax.block_until_ready(fwd(x, params1))
    ref1 = ref_forward(x, params1)
    max_err = float(jnp.max(jnp.abs(out1 - ref1)))
    assert jnp.allclose(out1, ref1, atol=3e-2, rtol=3e-2), f"max err {max_err}"

    print("KERNEL_OK")
</pallas_src>

<mosaic_0001>
module attributes {stable_mosaic.version = 11 : i64} {
  func.func @_nn_kernel(%arg0: i32, %arg1: memref<2x18x72xbf16, #tpu.memory_space<vmem>>, %arg2: memref<3x72x512xbf16, #tpu.memory_space<vmem>>, %arg3: memref<1x512xf32, #tpu.memory_space<vmem>>, %arg4: memref<512x512xbf16, #tpu.memory_space<vmem>>, %arg5: memref<1x512xf32, #tpu.memory_space<vmem>>, %arg6: memref<3x512x128xbf16, #tpu.memory_space<vmem>>, %arg7: memref<16x128xf32, #tpu.memory_space<vmem>>, %arg8: memref<2x16x128xf32, #tpu.memory_space<vmem>>, %arg9: memref<32x512xbf16, #tpu.memory_space<vmem>>, %arg10: memref<36x512xbf16, #tpu.memory_space<vmem>>) attributes {dimension_semantics = [#tpu.dimension_semantics<arbitrary>], iteration_bounds = array<i64: 1>, scalar_prefetch = 0 : i64, scratch_operands = 2 : i64, tpu.core_type = #tpu.core_type<tc>, window_params = [{transform_indices = @transform_0, window_bounds = array<i64: 2, 18, 72>}, {pipeline_mode = #tpu.pipeline_mode<synchronous>, transform_indices = @transform_1, window_bounds = array<i64: 3, 72, 512>}, {pipeline_mode = #tpu.pipeline_mode<synchronous>, transform_indices = @transform_2, window_bounds = array<i64: 1, 512>}, {pipeline_mode = #tpu.pipeline_mode<synchronous>, transform_indices = @transform_3, window_bounds = array<i64: 512, 512>}, {pipeline_mode = #tpu.pipeline_mode<synchronous>, transform_indices = @transform_4, window_bounds = array<i64: 1, 512>}, {pipeline_mode = #tpu.pipeline_mode<synchronous>, transform_indices = @transform_5, window_bounds = array<i64: 3, 512, 128>}, {pipeline_mode = #tpu.pipeline_mode<synchronous>, transform_indices = @transform_6, window_bounds = array<i64: 16, 128>}, {transform_indices = @transform_7, window_bounds = array<i64: 2, 16, 128>}]} {
    %c0 = arith.constant 0 : index
    %c0_0 = arith.constant 0 : index
    %0 = vector.load %arg3[%c0, %c0_0] : memref<1x512xf32, #tpu.memory_space<vmem>>, vector<1x512xf32>
    %1 = vector.shape_cast %0 : vector<1x512xf32> to vector<1x512xf32>
    %2 = vector.broadcast %1 : vector<1x512xf32> to vector<16x512xf32>
    %c0_1 = arith.constant 0 : index
    %c0_2 = arith.constant 0 : index
    %3 = vector.load %arg5[%c0_1, %c0_2] : memref<1x512xf32, #tpu.memory_space<vmem>>, vector<1x512xf32>
    %4 = vector.shape_cast %3 : vector<1x512xf32> to vector<1x512xf32>
    %5 = vector.broadcast %4 : vector<1x512xf32> to vector<32x512xf32>
    %c0_3 = arith.constant 0 : index
    %c0_4 = arith.constant 0 : index
    %c0_5 = arith.constant 0 : index
    %6 = vector.load %arg1[%c0_3, %c0_4, %c0_5] : memref<2x18x72xbf16, #tpu.memory_space<vmem>>, vector<1x18x72xbf16>
    %7 = vector.shape_cast %6 : vector<1x18x72xbf16> to vector<18x72xbf16>
    %8 = vector.extract_strided_slice %7 {offsets = [0, 0], sizes = [16, 72], strides = [1, 1]} : vector<18x72xbf16> to vector<16x72xbf16>
    %c0_6 = arith.constant 0 : index
    %c0_7 = arith.constant 0 : index
    %c0_8 = arith.constant 0 : index
    %9 = vector.load %arg2[%c0_6, %c0_7, %c0_8] : memref<3x72x512xbf16, #tpu.memory_space<vmem>>, vector<1x72x512xbf16>
    %10 = vector.shape_cast %9 : vector<1x72x512xbf16> to vector<72x512xbf16>
    %cst = arith.constant dense<0.000000e+00> : vector<16x512xf32>
    %11 = tpu.matmul %8, %10, %cst {dimension_numbers = #tpu.dot_dimension_numbers<[1], [0], [0], [1], [0, 0, 1, 1], [], []>} : vector<16x72xbf16>, vector<72x512xbf16>, vector<16x512xf32> -> vector<16x512xf32>
    %12 = vector.extract_strided_slice %7 {offsets = [1, 0], sizes = [16, 72], strides = [1, 1]} : vector<18x72xbf16> to vector<16x72xbf16>
    %c1 = arith.constant 1 : index
    %c0_9 = arith.constant 0 : index
    %c0_10 = arith.constant 0 : index
    %13 = vector.load %arg2[%c1, %c0_9, %c0_10] : memref<3x72x512xbf16, #tpu.memory_space<vmem>>, vector<1x72x512xbf16>
    %14 = vector.shape_cast %13 : vector<1x72x512xbf16> to vector<72x512xbf16>
    %cst_11 = arith.constant dense<0.000000e+00> : vector<16x512xf32>
    %15 = tpu.matmul %12, %14, %cst_11 {dimension_numbers = #tpu.dot_dimension_numbers<[1], [0], [0], [1], [0, 0, 1, 1], [], []>} : vector<16x72xbf16>, vector<72x512xbf16>, vector<16x512xf32> -> vector<16x512xf32>
    %16 = arith.addf %11, %15 : vector<16x512xf32>
    %17 = vector.extract_strided_slice %7 {offsets = [2, 0], sizes = [16, 72], strides = [1, 1]} : vector<18x72xbf16> to vector<16x72xbf16>
    %c2 = arith.constant 2 : index
    %c0_12 = arith.constant 0 : index
    %c0_13 = arith.constant 0 : index
    %18 = vector.load %arg2[%c2, %c0_12, %c0_13] : memref<3x72x512xbf16, #tpu.memory_space<vmem>>, vector<1x72x512xbf16>
    %19 = vector.shape_cast %18 : vector<1x72x512xbf16> to vector<72x512xbf16>
    %cst_14 = arith.constant dense<0.000000e+00> : vector<16x512xf32>
    %20 = tpu.matmul %17, %19, %cst_14 {dimension_numbers = #tpu.dot_dimension_numbers<[1], [0], [0], [1], [0, 0, 1, 1], [], []>} : vector<16x72xbf16>, vector<72x512xbf16>, vector<16x512xf32> -> vector<16x512xf32>
    %21 = arith.addf %16, %20 : vector<16x512xf32>
    %22 = arith.addf %21, %2 : vector<16x512xf32>
    %cst_15 = arith.constant 0.000000e+00 : f32
    %23 = vector.broadcast %cst_15 : f32 to vector<16x512xf32>
    %24 = arith.maximumf %22, %23 : vector<16x512xf32>
    %25 = arith.truncf %24 : vector<16x512xf32> to vector<16x512xbf16>
    %c0_16 = arith.constant 0 : index
    %c0_17 = arith.constant 0 : index
    %26 = vector.load %arg9[%c0_16, %c0_17] : memref<32x512xbf16, #tpu.memory_space<vmem>>, vector<16x512xbf16>
    tpu.vector_store %arg9[%c0_16, %c0_17], %25 {strides = array<i32>} : memref<32x512xbf16, #tpu.memory_space<vmem>>, vector<16x512xbf16>,
    %c1_18 = arith.constant 1 : index
    %c0_19 = arith.constant 0 : index
    %c0_20 = arith.constant 0 : index
    %27 = vector.load %arg1[%c1_18, %c0_19, %c0_20] : memref<2x18x72xbf16, #tpu.memory_space<vmem>>, vector<1x18x72xbf16>
    %28 = vector.shape_cast %27 : vector<1x18x72xbf16> to vector<18x72xbf16>
    %29 = vector.extract_strided_slice %28 {offsets = [0, 0], sizes = [16, 72], strides = [1, 1]} : vector<18x72xbf16> to vector<16x72xbf16>
    %c0_21 = arith.constant 0 : index
    %c0_22 = arith.constant 0 : index
    %c0_23 = arith.constant 0 : index
    %30 = vector.load %arg2[%c0_21, %c0_22, %c0_23] : memref<3x72x512xbf16, #tpu.memory_space<vmem>>, vector<1x72x512xbf16>
    %31 = vector.shape_cast %30 : vector<1x72x512xbf16> to vector<72x512xbf16>
    %cst_24 = arith.constant dense<0.000000e+00> : vector<16x512xf32>
    %32 = tpu.matmul %29, %31, %cst_24 {dimension_numbers = #tpu.dot_dimension_numbers<[1], [0], [0], [1], [0, 0, 1, 1], [], []>} : vector<16x72xbf16>, vector<72x512xbf16>, vector<16x512xf32> -> vector<16x512xf32>
    %33 = vector.extract_strided_slice %28 {offsets = [1, 0], sizes = [16, 72], strides = [1, 1]} : vector<18x72xbf16> to vector<16x72xbf16>
    %c1_25 = arith.constant 1 : index
    %c0_26 = arith.constant 0 : index
    %c0_27 = arith.constant 0 : index
    %34 = vector.load %arg2[%c1_25, %c0_26, %c0_27] : memref<3x72x512xbf16, #tpu.memory_space<vmem>>, vector<1x72x512xbf16>
    %35 = vector.shape_cast %34 : vector<1x72x512xbf16> to vector<72x512xbf16>
    %cst_28 = arith.constant dense<0.000000e+00> : vector<16x512xf32>
    %36 = tpu.matmul %33, %35, %cst_28 {dimension_numbers = #tpu.dot_dimension_numbers<[1], [0], [0], [1], [0, 0, 1, 1], [], []>} : vector<16x72xbf16>, vector<72x512xbf16>, vector<16x512xf32> -> vector<16x512xf32>
    %37 = arith.addf %32, %36 : vector<16x512xf32>
    %38 = vector.extract_strided_slice %28 {offsets = [2, 0], sizes = [16, 72], strides = [1, 1]} : vector<18x72xbf16> to vector<16x72xbf16>
    %c2_29 = arith.constant 2 : index
    %c0_30 = arith.constant 0 : index
    %c0_31 = arith.constant 0 : index
    %39 = vector.load %arg2[%c2_29, %c0_30, %c0_31] : memref<3x72x512xbf16, #tpu.memory_space<vmem>>, vector<1x72x512xbf16>
    %40 = vector.shape_cast %39 : vector<1x72x512xbf16> to vector<72x512xbf16>
    %cst_32 = arith.constant dense<0.000000e+00> : vector<16x512xf32>
    %41 = tpu.matmul %38, %40, %cst_32 {dimension_numbers = #tpu.dot_dimension_numbers<[1], [0], [0], [1], [0, 0, 1, 1], [], []>} : vector<16x72xbf16>, vector<72x512xbf16>, vector<16x512xf32> -> vector<16x512xf32>
    %42 = arith.addf %37, %41 : vector<16x512xf32>
    %43 = arith.addf %42, %2 : vector<16x512xf32>
    %cst_33 = arith.constant 0.000000e+00 : f32
    %44 = vector.broadcast %cst_33 : f32 to vector<16x512xf32>
    %45 = arith.maximumf %43, %44 : vector<16x512xf32>
    %46 = arith.truncf %45 : vector<16x512xf32> to vector<16x512xbf16>
    %c16 = arith.constant 16 : index
    %c0_34 = arith.constant 0 : index
    %47 = vector.load %arg9[%c16, %c0_34] : memref<32x512xbf16, #tpu.memory_space<vmem>>, vector<16x512xbf16>
    tpu.vector_store %arg9[%c16, %c0_34], %46 {strides = array<i32>} : memref<32x512xbf16, #tpu.memory_space<vmem>>, vector<16x512xbf16>,
    %c0_35 = arith.constant 0 : index
    %c0_36 = arith.constant 0 : index
    %48 = vector.load %arg9[%c0_35, %c0_36] : memref<32x512xbf16, #tpu.memory_space<vmem>>, vector<32x512xbf16>
    %c0_37 = arith.constant 0 : index
    %c0_38 = arith.constant 0 : index
    %49 = vector.load %arg4[%c0_37, %c0_38] : memref<512x512xbf16, #tpu.memory_space<vmem>>, vector<512x512xbf16>
    %cst_39 = arith.constant dense<0.000000e+00> : vector<32x512xf32>
    %50 = tpu.matmul %48, %49, %cst_39 {dimension_numbers = #tpu.dot_dimension_numbers<[1], [0], [0], [1], [0, 0, 1, 1], [], []>} : vector<32x512xbf16>, vector<512x512xbf16>, vector<32x512xf32> -> vector<32x512xf32>
    %51 = arith.addf %50, %5 : vector<32x512xf32>
    %cst_40 = arith.constant 0.000000e+00 : f32
    %52 = vector.broadcast %cst_40 : f32 to vector<32x512xf32>
    %53 = arith.maximumf %51, %52 : vector<32x512xf32>
    %54 = arith.truncf %53 : vector<32x512xf32> to vector<32x512xbf16>
    %cst_41 = arith.constant 0.000000e+00 : bf16
    %55 = vector.broadcast %cst_41 : bf16 to vector<1x512xbf16>
    %c0_42 = arith.constant 0 : index
    %c0_43 = arith.constant 0 : index
    %56 = vector.load %arg10[%c0_42, %c0_43] : memref<36x512xbf16, #tpu.memory_space<vmem>>, vector<1x512xbf16>
    tpu.vector_store %arg10[%c0_42, %c0_43], %55 {strides = array<i32>} : memref<36x512xbf16, #tpu.memory_space<vmem>>, vector<1x512xbf16>,
    %c17 = arith.constant 17 : index
    %c0_44 = arith.constant 0 : index
    %57 = vector.load %arg10[%c17, %c0_44] : memref<36x512xbf16, #tpu.memory_space<vmem>>, vector<1x512xbf16>
    tpu.vector_store %arg10[%c17, %c0_44], %55 {strides = array<i32>} : memref<36x512xbf16, #tpu.memory_space<vmem>>, vector<1x512xbf16>,
    %58 = vector.extract_strided_slice %54 {offsets = [0, 0], sizes = [16, 512], strides = [1, 1]} : vector<32x512xbf16> to vector<16x512xbf16>
    %c1_45 = arith.constant 1 : index
    %c0_46 = arith.constant 0 : index
    %59 = vector.load %arg10[%c1_45, %c0_46] : memref<36x512xbf16, #tpu.memory_space<vmem>>, vector<16x512xbf16>
    tpu.vector_store %arg10[%c1_45, %c0_46], %58 {strides = array<i32>} : memref<36x512xbf16, #tpu.memory_space<vmem>>, vector<16x512xbf16>,
    %c18 = arith.constant 18 : index
    %c0_47 = arith.constant 0 : index
    %60 = vector.load %arg10[%c18, %c0_47] : memref<36x512xbf16, #tpu.memory_space<vmem>>, vector<1x512xbf16>
    tpu.vector_store %arg10[%c18, %c0_47], %55 {strides = array<i32>} : memref<36x512xbf16, #tpu.memory_space<vmem>>, vector<1x512xbf16>,
    %c35 = arith.constant 35 : index
    %c0_48 = arith.constant 0 : index
    %61 = vector.load %arg10[%c35, %c0_48] : memref<36x512xbf16, #tpu.memory_space<vmem>>, vector<1x512xbf16>
    tpu.vector_store %arg10[%c35, %c0_48], %55 {strides = array<i32>} : memref<36x512xbf16, #tpu.memory_space<vmem>>, vector<1x512xbf16>,
    %62 = vector.extract_strided_slice %54 {offsets = [16, 0], sizes = [16, 512], strides = [1, 1]} : vector<32x512xbf16> to vector<16x512xbf16>
    %c19 = arith.constant 19 : index
    %c0_49 = arith.constant 0 : index
    %63 = vector.load %arg10[%c19, %c0_49] : memref<36x512xbf16, #tpu.memory_space<vmem>>, vector<16x512xbf16>
    tpu.vector_store %arg10[%c19, %c0_49], %62 {strides = array<i32>} : memref<36x512xbf16, #tpu.memory_space<vmem>>, vector<16x512xbf16>,
    %c0_50 = arith.constant 0 : index
    %c0_51 = arith.constant 0 : index
    %64 = vector.load %arg10[%c0_50, %c0_51] : memref<36x512xbf16, #tpu.memory_space<vmem>>, vector<16x512xbf16>
    %c0_52 = arith.constant 0 : index
    %c0_53 = arith.constant 0 : index
    %c0_54 = arith.constant 0 : index
    %65 = vector.load %arg6[%c0_52, %c0_53, %c0_54] : memref<3x512x128xbf16, #tpu.memory_space<vmem>>, vector<1x512x128xbf16>
    %66 = vector.shape_cast %65 : vector<1x512x128xbf16> to vector<512x128xbf16>
    %cst_55 = arith.constant dense<0.000000e+00> : vector<16x128xf32>
    %67 = tpu.matmul %64, %66, %cst_55 {dimension_numbers = #tpu.dot_dimension_numbers<[1], [0], [0], [1], [0, 0, 1, 1], [], []>} : vector<16x512xbf16>, vector<512x128xbf16>, vector<16x128xf32> -> vector<16x128xf32>
    %c1_56 = arith.constant 1 : index
    %c0_57 = arith.constant 0 : index
    %68 = vector.load %arg10[%c1_56, %c0_57] : memref<36x512xbf16, #tpu.memory_space<vmem>>, vector<16x512xbf16>
    %c1_58 = arith.constant 1 : index
    %c0_59 = arith.constant 0 : index
    %c0_60 = arith.constant 0 : index
    %69 = vector.load %arg6[%c1_58, %c0_59, %c0_60] : memref<3x512x128xbf16, #tpu.memory_space<vmem>>, vector<1x512x128xbf16>
    %70 = vector.shape_cast %69 : vector<1x512x128xbf16> to vector<512x128xbf16>
    %cst_61 = arith.constant dense<0.000000e+00> : vector<16x128xf32>
    %71 = tpu.matmul %68, %70, %cst_61 {dimension_numbers = #tpu.dot_dimension_numbers<[1], [0], [0], [1], [0, 0, 1, 1], [], []>} : vector<16x512xbf16>, vector<512x128xbf16>, vector<16x128xf32> -> vector<16x128xf32>
    %72 = arith.addf %67, %71 : vector<16x128xf32>
    %c2_62 = arith.constant 2 : index
    %c0_63 = arith.constant 0 : index
    %73 = vector.load %arg10[%c2_62, %c0_63] : memref<36x512xbf16, #tpu.memory_space<vmem>>, vector<16x512xbf16>
    %c2_64 = arith.constant 2 : index
    %c0_65 = arith.constant 0 : index
    %c0_66 = arith.constant 0 : index
    %74 = vector.load %arg6[%c2_64, %c0_65, %c0_66] : memref<3x512x128xbf16, #tpu.memory_space<vmem>>, vector<1x512x128xbf16>
    %75 = vector.shape_cast %74 : vector<1x512x128xbf16> to vector<512x128xbf16>
    %cst_67 = arith.constant dense<0.000000e+00> : vector<16x128xf32>
    %76 = tpu.matmul %73, %75, %cst_67 {dimension_numbers = #tpu.dot_dimension_numbers<[1], [0], [0], [1], [0, 0, 1, 1], [], []>} : vector<16x512xbf16>, vector<512x128xbf16>, vector<16x128xf32> -> vector<16x128xf32>
    %77 = arith.addf %72, %76 : vector<16x128xf32>
    %c0_68 = arith.constant 0 : index
    %c0_69 = arith.constant 0 : index
    %78 = vector.load %arg7[%c0_68, %c0_69] : memref<16x128xf32, #tpu.memory_space<vmem>>, vector<16x128xf32>
    %79 = arith.addf %77, %78 : vector<16x128xf32>
    %c0_70 = arith.constant 0 : index
    %c0_71 = arith.constant 0 : index
    %c0_72 = arith.constant 0 : index
    %80 = vector.load %arg8[%c0_70, %c0_71, %c0_72] : memref<2x16x128xf32, #tpu.memory_space<vmem>>, vector<1x16x128xf32>
    %81 = vector.shape_cast %80 : vector<1x16x128xf32> to vector<16x128xf32>
    %82 = vector.shape_cast %79 : vector<16x128xf32> to vector<1x16x128xf32>
    tpu.vector_store %arg8[%c0_70, %c0_71, %c0_72], %82 {strides = array<i32>} : memref<2x16x128xf32, #tpu.memory_space<vmem>>, vector<1x16x128xf32>,
    %c18_73 = arith.constant 18 : index
    %c0_74 = arith.constant 0 : index
    %83 = vector.load %arg10[%c18_73, %c0_74] : memref<36x512xbf16, #tpu.memory_space<vmem>>, vector<16x512xbf16>
    %c0_75 = arith.constant 0 : index
    %c0_76 = arith.constant 0 : index
    %c0_77 = arith.constant 0 : index
    %84 = vector.load %arg6[%c0_75, %c0_76, %c0_77] : memref<3x512x128xbf16, #tpu.memory_space<vmem>>, vector<1x512x128xbf16>
    %85 = vector.shape_cast %84 : vector<1x512x128xbf16> to vector<512x128xbf16>
    %cst_78 = arith.constant dense<0.000000e+00> : vector<16x128xf32>
    %86 = tpu.matmul %83, %85, %cst_78 {dimension_numbers = #tpu.dot_dimension_numbers<[1], [0], [0], [1], [0, 0, 1, 1], [], []>} : vector<16x512xbf16>, vector<512x128xbf16>, vector<16x128xf32> -> vector<16x128xf32>
    %c19_79 = arith.constant 19 : index
    %c0_80 = arith.constant 0 : index
    %87 = vector.load %arg10[%c19_79, %c0_80] : memref<36x512xbf16, #tpu.memory_space<vmem>>, vector<16x512xbf16>
    %c1_81 = arith.constant 1 : index
    %c0_82 = arith.constant 0 : index
    %c0_83 = arith.constant 0 : index
    %88 = vector.load %arg6[%c1_81, %c0_82, %c0_83] : memref<3x512x128xbf16, #tpu.memory_space<vmem>>, vector<1x512x128xbf16>
    %89 = vector.shape_cast %88 : vector<1x512x128xbf16> to vector<512x128xbf16>
    %cst_84 = arith.constant dense<0.000000e+00> : vector<16x128xf32>
    %90 = tpu.matmul %87, %89, %cst_84 {dimension_numbers = #tpu.dot_dimension_numbers<[1], [0], [0], [1], [0, 0, 1, 1], [], []>} : vector<16x512xbf16>, vector<512x128xbf16>, vector<16x128xf32> -> vector<16x128xf32>
    %91 = arith.addf %86, %90 : vector<16x128xf32>
    %c20 = arith.constant 20 : index
    %c0_85 = arith.constant 0 : index
    %92 = vector.load %arg10[%c20, %c0_85] : memref<36x512xbf16, #tpu.memory_space<vmem>>, vector<16x512xbf16>
    %c2_86 = arith.constant 2 : index
    %c0_87 = arith.constant 0 : index
    %c0_88 = arith.constant 0 : index
    %93 = vector.load %arg6[%c2_86, %c0_87, %c0_88] : memref<3x512x128xbf16, #tpu.memory_space<vmem>>, vector<1x512x128xbf16>
    %94 = vector.shape_cast %93 : vector<1x512x128xbf16> to vector<512x128xbf16>
    %cst_89 = arith.constant dense<0.000000e+00> : vector<16x128xf32>
    %95 = tpu.matmul %92, %94, %cst_89 {dimension_numbers = #tpu.dot_dimension_numbers<[1], [0], [0], [1], [0, 0, 1, 1], [], []>} : vector<16x512xbf16>, vector<512x128xbf16>, vector<16x128xf32> -> vector<16x128xf32>
    %96 = arith.addf %91, %95 : vector<16x128xf32>
    %c0_90 = arith.constant 0 : index
    %c0_91 = arith.constant 0 : index
    %97 = vector.load %arg7[%c0_90, %c0_91] : memref<16x128xf32, #tpu.memory_space<vmem>>, vector<16x128xf32>
    %98 = arith.addf %96, %97 : vector<16x128xf32>
    %c1_92 = arith.constant 1 : index
    %c0_93 = arith.constant 0 : index
    %c0_94 = arith.constant 0 : index
    %99 = vector.load %arg8[%c1_92, %c0_93, %c0_94] : memref<2x16x128xf32, #tpu.memory_space<vmem>>, vector<1x16x128xf32>
    %100 = vector.shape_cast %99 : vector<1x16x128xf32> to vector<16x128xf32>
    %101 = vector.shape_cast %98 : vector<16x128xf32> to vector<1x16x128xf32>
    tpu.vector_store %arg8[%c1_92, %c0_93, %c0_94], %101 {strides = array<i32>} : memref<2x16x128xf32, #tpu.memory_space<vmem>>, vector<1x16x128xf32>,
    return
  }
  func.func @transform_0(%arg0: i32) -> (i32, i32, i32) {
    %c0_i32 = arith.constant 0 : i32
    %c0_i32_0 = arith.constant 0 : i32
    %c0_i32_1 = arith.constant 0 : i32
    return %arg0, %c0_i32, %c0_i32_0 : i32, i32, i32
  }
  func.func @transform_1(%arg0: i32) -> (i32, i32, i32) {
    %c0_i32 = arith.constant 0 : i32
    %c0_i32_0 = arith.constant 0 : i32
    %c0_i32_1 = arith.constant 0 : i32
    %c0_i32_2 = arith.constant 0 : i32
    return %c0_i32, %c0_i32_0, %c0_i32_1 : i32, i32, i32
  }
  func.func @transform_2(%arg0: i32) -> (i32, i32) {
    %c0_i32 = arith.constant 0 : i32
    %c0_i32_0 = arith.constant 0 : i32
    %c0_i32_1 = arith.constant 0 : i32
    return %c0_i32, %c0_i32_0 : i32, i32
  }
  func.func @transform_3(%arg0: i32) -> (i32, i32) {
    %c0_i32 = arith.constant 0 : i32
    %c0_i32_0 = arith.constant 0 : i32
    %c0_i32_1 = arith.constant 0 : i32
    return %c0_i32, %c0_i32_0 : i32, i32
  }
  func.func @transform_4(%arg0: i32) -> (i32, i32) {
    %c0_i32 = arith.constant 0 : i32
    %c0_i32_0 = arith.constant 0 : i32
    %c0_i32_1 = arith.constant 0 : i32
    return %c0_i32, %c0_i32_0 : i32, i32
  }
  func.func @transform_5(%arg0: i32) -> (i32, i32, i32) {
    %c0_i32 = arith.constant 0 : i32
    %c0_i32_0 = arith.constant 0 : i32
    %c0_i32_1 = arith.constant 0 : i32
    %c0_i32_2 = arith.constant 0 : i32
    return %c0_i32, %c0_i32_0, %c0_i32_1 : i32, i32, i32
  }
  func.func @transform_6(%arg0: i32) -> (i32, i32) {
    %c0_i32 = arith.constant 0 : i32
    %c0_i32_0 = arith.constant 0 : i32
    %c0_i32_1 = arith.constant 0 : i32
    return %c0_i32, %c0_i32_0 : i32, i32
  }
  func.func @transform_7(%arg0: i32) -> (i32, i32, i32) {
    %c0_i32 = arith.constant 0 : i32
    %c0_i32_0 = arith.constant 0 : i32
    %c0_i32_1 = arith.constant 0 : i32
    return %arg0, %c0_i32, %c0_i32_0 : i32, i32, i32
  }
}

</mosaic_0001>

<llo_original>
// kernel: tile.13
$region0: #{tile.13}
  #allocation0 [shape = 's32[1]{0}', space=sflag, size = 0x4, scoped, tag = 'scoped memory for tile.13']
  %s0 = inlined_call_operand.vmem [shape: f32[32], index: 0, kind: input, shape index: {}]
  %s1 = inlined_call_operand.vmem [shape: f32[16,32], index: 1, kind: output, shape index: {}]
  // Predicated region
  $region2: #{tile.13} parent=0 // pred_check
    _
  $region3: #{tile.13} parent=0 // pred_check_branch
    %3 = sbr.rel (0) target = $region5
  $region4: #{tile.13} parent=0 // pred_region
    _
  $region5: #{tile.13} parent=0 // pred_fallthru
    _
  %v4 = vld [vmem:[%s0] ss:$0 sm:$0xff]
  %5 = vst [vmem:[%s1] sm:$0xff] %v4
  %s6 = scalar_lea.vmem %s1, 8
  %7 = vst [vmem:[%s6] sm:$0xff] %v4

// kernel: tile.14
$region0: #{tile.14}
  %s0 = inlined_call_operand.vmem [shape: f32[16,32], index: 0, kind: input, shape index: {}]
  %s1 = inlined_call_operand.vmem [shape: f32[1,512], index: 1, kind: output, shape index: {}]
  $region1: #{tile.14} parent=0
    #allocation0 [shape = 'u8[16384]{0}', space=vmem, size = 0x4000, scoped, tag = 'scoped mem for output reshape']
    %v2 = vld [vmem:[%s0] ss:$4 sm:$0xf]
    %vm3 = vcmask 261120
    %4 = vst.msk [vmem:[#allocation0] ss:$8 sm:$0xf] %vm3, %v2
    %s5 = scalar_lea.vmem %s0, 3
    %v6 = vld [vmem:[%s5] ss:$4 sm:$0xf]
    %7 = vrot.lane.b32.xlu0 %v6, 96
    %v8 = vpop.permute.xlu0 %7
    %vm9 = vcmask 1048320
    %10 = vst.msk [vmem:[#allocation0] ss:$8 sm:$0xf] %vm9, %v8
    %s11 = scalar_lea.vmem %s0, 2
    %v12 = vld [vmem:[%s11] ss:$4 sm:$0xf]
    %13 = vrot.lane.b32.xlu0 %v12, 64
    %v14 = vpop.permute.xlu0 %13
    %vm15 = vcmask 785920
    %16 = vst.msk [vmem:[#allocation0] ss:$8 sm:$0xf] %vm15, %v14
    %s17 = scalar_lea.vmem %s0, 1
    %v18 = vld [vmem:[%s17] ss:$4 sm:$0xf]
    %19 = vrot.lane.b32.xlu0 %v18, 32
    %v20 = vpop.permute.xlu0 %19
    %vm21 = vcmask 523520
    %22 = vst.msk [vmem:[#allocation0] ss:$8 sm:$0xf] %vm21, %v20
    %s24 = sshllo.u32 0, 1
    %v26 = vld [vmem:[#allocation0] sm:%s24]
    %s27 = sshllo.u32 0, 1
    %28 = vst [vmem:[%s1] sm:%s27] %v26
    %s29 = scalar_lea.vmem [#allocation0], 8
    %v30 = vld [vmem:[%s29] sm:%s24]
    %s31 = sshllo.u32 0, 1
    %s32 = scalar_lea.vmem %s1, 1
    %33 = vst [vmem:[%s32] sm:%s31] %v30
    %s34 = scalar_lea.vmem [#allocation0], 16
    %v35 = vld [vmem:[%s34] sm:%s24]
    %s36 = sshllo.u32 0, 1
    %s37 = smul.addr 1, 2
    %s38 = scalar_lea.vmem %s1, %s37
    %39 = vst [vmem:[%s38] sm:%s36] %v35
    %s40 = scalar_lea.vmem [#allocation0], 24
    %v41 = vld [vmem:[%s40] sm:%s24]
    %s42 = sshllo.u32 0, 1
    %s43 = smul.addr 1, 3
    %s44 = scalar_lea.vmem %s1, %s43
    %45 = vst [vmem:[%s44] sm:%s42] %v41

// kernel: nn_forward.1
$region0: #{nn_forward.1}
  #allocation0 [shape = 'u32[]', space=smem, size = 0x4, offset = 0x4, fixed_abs, tag = 'smem constant byte address 0x4 - core index']
  #allocation1 [shape = 'u32[144,128]{1,0:T(1,128)}', space=vmem, size = 0x12000, scoped, tag = 'internal scratch']
  #allocation2 [shape = 'bf16[32,512]{1,0:T(16,128)(2,1)}', space=vmem, size = 0x8000, scoped, tag = 'scratch operand']
  #allocation3 [shape = 'bf16[36,512]{1,0:T(8,128)(2,1)}', space=vmem, size = 0xa000, scoped, tag = 'scratch operand']
  %s0 = inlined_call_operand.vmem [shape: bf16[2,18,72], index: 0, kind: input, shape index: {}]
  %s1 = inlined_call_operand.vmem [shape: bf16[3,72,512], index: 1, kind: input, shape index: {}]
  %s2 = inlined_call_operand.vmem [shape: f32[1,512], index: 2, kind: input, shape index: {}]
  %s3 = inlined_call_operand.vmem [shape: bf16[512,512], index: 3, kind: input, shape index: {}]
  %s4 = inlined_call_operand.vmem [shape: f32[1,512], index: 4, kind: input, shape index: {}]
  %s5 = inlined_call_operand.vmem [shape: bf16[3,512,128], index: 5, kind: input, shape index: {}]
  %s6 = inlined_call_operand.vmem [shape: f32[16,128], index: 6, kind: input, shape index: {}]
  %s7 = inlined_call_operand.vmem [shape: f32[2,16,128], index: 7, kind: output, shape index: {}]
  %s8 = sld [smem:[#allocation0]]
  $region38: #{nn_forward.1} parent=0
    _
  %s10 = ssub.s32 1, %s8
  %s11 = scalar_select 0, %s10, %s8
  // Predicated region
  $region2: #{nn_forward.1} parent=0 // pred_check
    _
  $region3: #{nn_forward.1} parent=0 // pred_check_branch
    %13 = sbr.rel (0) target = $region5
  $region4: #{nn_forward.1} parent=0 // pred_region
    _
  $region5: #{nn_forward.1} parent=0 // pred_fallthru
    _
  // Predicated region
  $region6: #{nn_forward.1} parent=0 // pred_check
    _
  $region7: #{nn_forward.1} parent=0 // pred_check_branch
    %15 = sbr.rel (0) target = $region9
  $region8: #{nn_forward.1} parent=0 // pred_region
    _
  $region9: #{nn_forward.1} parent=0 // pred_fallthru
    _
  // Predicated region
  $region10: #{nn_forward.1} parent=0 // pred_check
    _
  $region11: #{nn_forward.1} parent=0 // pred_check_branch
    %17 = sbr.rel (0) target = $region13
  $region12: #{nn_forward.1} parent=0 // pred_region
    _
  $region13: #{nn_forward.1} parent=0 // pred_fallthru
    _
  // Predicated region
  $region14: #{nn_forward.1} parent=0 // pred_check
    _
  $region15: #{nn_forward.1} parent=0 // pred_check_branch
    %19 = sbr.rel (0) target = $region17
  $region16: #{nn_forward.1} parent=0 // pred_region
    _
  $region17: #{nn_forward.1} parent=0 // pred_fallthru
    _
  // Predicated region
  $region18: #{nn_forward.1} parent=0 // pred_check
    _
  $region19: #{nn_forward.1} parent=0 // pred_check_branch
    %21 = sbr.rel (0) target = $region21
  $region20: #{nn_forward.1} parent=0 // pred_region
    _
  $region21: #{nn_forward.1} parent=0 // pred_fallthru
    _
  // Predicated region
  $region22: #{nn_forward.1} parent=0 // pred_check
    _
  $region23: #{nn_forward.1} parent=0 // pred_check_branch
    %23 = sbr.rel (0) target = $region25
  $region24: #{nn_forward.1} parent=0 // pred_region
    _
  $region25: #{nn_forward.1} parent=0 // pred_fallthru
    _
  // Predicated region
  $region26: #{nn_forward.1} parent=0 // pred_check
    _
  $region27: #{nn_forward.1} parent=0 // pred_check_branch
    %25 = sbr.rel (0) target = $region29
  $region28: #{nn_forward.1} parent=0 // pred_region
    _
  $region29: #{nn_forward.1} parent=0 // pred_fallthru
    _
  %v27 = vld [vmem:[%s2] sm:$0xf]
  %v29 = vlaneseq
  %v30 = vshrl.u32 %v29, 7
  %v31 = vsub.s32 0, %v30
  %v32 = vrot.slane %v27, %v31
  %v33 = vlaneseq
  %v34 = vshrl.u32 %v33, 7
  %v35 = vsub.s32 1, %v34
  %v36 = vrot.slane %v27, %v35
  %v37 = vlaneseq
  %v38 = vshrl.u32 %v37, 7
  %v39 = vsub.s32 2, %v38
  %v40 = vrot.slane %v27, %v39
  %v41 = vlaneseq
  %v42 = vshrl.u32 %v41, 7
  %v43 = vsub.s32 3, %v42
  %v44 = vrot.slane %v27, %v43
  %v49 = vld [vmem:[%s4] sm:$0xf]
  %v51 = vlaneseq
  %v52 = vshrl.u32 %v51, 7
  %v53 = vsub.s32 0, %v52
  %v54 = vrot.slane %v49, %v53
  %v55 = vlaneseq
  %v56 = vshrl.u32 %v55, 7
  %v57 = vsub.s32 1, %v56
  %v58 = vrot.slane %v49, %v57
  %v59 = vlaneseq
  %v60 = vshrl.u32 %v59, 7
  %v61 = vsub.s32 2, %v60
  %v62 = vrot.slane %v49, %v61
  %v63 = vlaneseq
  %v64 = vshrl.u32 %v63, 7
  %v65 = vsub.s32 3, %v64
  %v66 = vrot.slane %v49, %v65
  %v71 = vld [vmem:[%s0] sm:$0xf]
  %v72 = vld [vmem:[%s0 + $0x4] sm:$0xf]
  %v73 = vld [vmem:[%s0 + $0x8] sm:$0x1]
  %v74 = vld [vmem:[%s1] sm:$0xff]
  %v75 = vld [vmem:[%s1 + $0x8] sm:$0xff]
  %v76 = vld [vmem:[%s1 + $0x10] sm:$0xff]
  %v77 = vld [vmem:[%s1 + $0x18] sm:$0xff]
  %v78 = vld [vmem:[%s1 + $0x20] sm:$0xff]
  %v79 = vld [vmem:[%s1 + $0x28] sm:$0xff]
  %v80 = vld [vmem:[%s1 + $0x30] sm:$0xff]
  %v81 = vld [vmem:[%s1 + $0x38] sm:$0xff]
  %v82 = vld [vmem:[%s1 + $0x40] sm:$0xff]
  %v83 = vld [vmem:[%s1 + $0x48] sm:$0xff]
  %v84 = vld [vmem:[%s1 + $0x50] sm:$0xff]
  %v85 = vld [vmem:[%s1 + $0x58] sm:$0xff]
  %v86 = vld [vmem:[%s1 + $0x60] sm:$0xff]
  %v87 = vld [vmem:[%s1 + $0x68] sm:$0xff]
  %v88 = vld [vmem:[%s1 + $0x70] sm:$0xff]
  %v89 = vld [vmem:[%s1 + $0x78] sm:$0xff]
  %v90 = vld [vmem:[%s1 + $0x80] sm:$0xff]
  %v91 = vld [vmem:[%s1 + $0x88] sm:$0xff]
  %s92 = scalar_lea.vmem %s1, 144
  %v93 = vld [vmem:[%s92] sm:$0xff]
  %v94 = vld [vmem:[%s92 + $0x8] sm:$0xff]
  %v95 = vld [vmem:[%s92 + $0x10] sm:$0xff]
  %v96 = vld [vmem:[%s92 + $0x18] sm:$0xff]
  %v97 = vld [vmem:[%s92 + $0x20] sm:$0xff]
  %v98 = vld [vmem:[%s92 + $0x28] sm:$0xff]
  %v99 = vld [vmem:[%s92 + $0x30] sm:$0xff]
  %v100 = vld [vmem:[%s92 + $0x38] sm:$0xff]
  %v101 = vld [vmem:[%s92 + $0x40] sm:$0xff]
  %v102 = vld [vmem:[%s92 + $0x48] sm:$0xff]
  %v103 = vld [vmem:[%s92 + $0x50] sm:$0xff]
  %v104 = vld [vmem:[%s92 + $0x58] sm:$0xff]
  %v105 = vld [vmem:[%s92 + $0x60] sm:$0xff]
  %v106 = vld [vmem:[%s92 + $0x68] sm:$0xff]
  %v107 = vld [vmem:[%s92 + $0x70] sm:$0xff]
  %v108 = vld [vmem:[%s92 + $0x78] sm:$0xff]
  %v109 = vld [vmem:[%s92 + $0x80] sm:$0xff]
  %v110 = vld [vmem:[%s92 + $0x88] sm:$0xff]
  %v114 = vunpack.c.l.b16 %v71
  %v115 = vunpack.c.l.b16 %v72
  %v116 = vunpack.c.l.b16 %v73
  %v117 = vpack.c.b16 %v115, %v114
  %v118 = vpack.c.b16 %v116, %v116
  %vm119 = vsmask.f32 7424
  %v121 = vshrl.u32 %v117, 16
  %v123 = vshll.u32 %v117, 16
  %v125 = vrot.slane %v123, 1
  %v126 = vor.u32 %v121, %v125
  %v128 = vshll.u32 %v118, 16
  %v130 = vrot.slane %v128, 1
  %v131 = vsel %vm119, %v126, %v130
  %v150 = vunpack.c.l.b16 %v93
  %v151 = vunpack.c.h.b16 %v93
  %v152 = vunpack.c.l.b16 %v94
  %v153 = vunpack.c.h.b16 %v94
  %v154 = vunpack.c.l.b16 %v95
  %v155 = vunpack.c.h.b16 %v95
  %v156 = vunpack.c.l.b16 %v96
  %v157 = vunpack.c.h.b16 %v96
  %v158 = vunpack.c.l.b16 %v97
  %v159 = vunpack.c.h.b16 %v97
  %v160 = vunpack.c.l.b16 %v98
  %v161 = vunpack.c.h.b16 %v98
  %v162 = vunpack.c.l.b16 %v99
  %v163 = vunpack.c.h.b16 %v99
  %v164 = vunpack.c.l.b16 %v100
  %v165 = vunpack.c.h.b16 %v100
  %v166 = vunpack.c.l.b16 %v101
  %v167 = vunpack.c.h.b16 %v101
  %v168 = vunpack.c.l.b16 %v102
  %v169 = vunpack.c.h.b16 %v102
  %v170 = vunpack.c.l.b16 %v103
  %v171 = vunpack.c.h.b16 %v103
  %v172 = vunpack.c.l.b16 %v104
  %v173 = vunpack.c.h.b16 %v104
  %v174 = vunpack.c.l.b16 %v105
  %v175 = vunpack.c.h.b16 %v105
  %v176 = vunpack.c.l.b16 %v106
  %v177 = vunpack.c.h.b16 %v106
  %v178 = vunpack.c.l.b16 %v107
  %v179 = vunpack.c.h.b16 %v107
  %v180 = vunpack.c.l.b16 %v108
  %v181 = vunpack.c.h.b16 %v108
  %v182 = vunpack.c.l.b16 %v109
  %v183 = vunpack.c.h.b16 %v109
  %v184 = vunpack.c.l.b16 %v110
  %v185 = vunpack.c.h.b16 %v110
  %v186 = vpack.c.b16 %v154, %v150
  %v187 = vpack.c.b16 %v155, %v151
  %v188 = vpack.c.b16 %v156, %v152
  %v189 = vpack.c.b16 %v157, %v153
  %v190 = vpack.c.b16 %v162, %v158
  %v191 = vpack.c.b16 %v163, %v159
  %v192 = vpack.c.b16 %v164, %v160
  %v193 = vpack.c.b16 %v165, %v161
  %v194 = vpack.c.b16 %v170, %v166
  %v195 = vpack.c.b16 %v171, %v167
  %v196 = vpack.c.b16 %v172, %v168
  %v197 = vpack.c.b16 %v173, %v169
  %v198 = vpack.c.b16 %v178, %v174
  %v199 = vpack.c.b16 %v179, %v175
  %v200 = vpack.c.b16 %v180, %v176
  %v201 = vpack.c.b16 %v181, %v177
  %v202 = vpack.c.b16 %v182, %v182
  %v203 = vpack.c.b16 %v183, %v183
  %v204 = vpack.c.b16 %v184, %v184
  %v205 = vpack.c.b16 %v185, %v185
  %vm222 = vcmask 588800
  %v224 = vsel %vm222, %v131, 0
  %vm226 = vcmask 1043456
  %v228 = vsel %vm226, %v202, 0
  %v231 = vsel %vm226, %v203, 0
  %v234 = vsel %vm226, %v204, 0
  %v237 = vsel %vm226, %v205, 0
  %239 = vmatprep.subr.bf16.mxu0 %v187
  %240 = vmatpush1.bf16.msra.mxu0 %v186
  %241 = vmatprep.subr.bf16.mxu0 %v191
  %242 = vmatpush1.bf16.msra.mxu0 %v190
  %243 = vmatprep.subr.bf16.mxu0 %v195
  %244 = vmatpush1.bf16.msra.mxu0 %v194
  %245 = vmatprep.subr.bf16.mxu0 %v199
  %246 = vmatpush1.bf16.msra.mxu0 %v198
  %247 = vmatprep.subr.bf16.mxu0 %v231
  %248 = vmatpush1.bf16.msra.mxu0 %v228
  %249 = vmatprep.subr.bf16.mxu0 0
  %250 = vmatpush1.bf16.msra.mxu0 0
  %251 = vmatprep.subr.bf16.mxu0 0
  %252 = vmatpush1.bf16.msra.mxu0 0
  %253 = vmatprep.subr.bf16.mxu0 0
  %254 = vmatpush1.bf16.msra.mxu0 0
  %255 = vmatprep.subr.bf16.mxu0 0
  %256 = vmatpush1.bf16.msra.mxu0 0
  %257 = vmatprep.subr.bf16.mxu0 0
  %258 = vmatpush1.bf16.msra.mxu0 0
  %259 = vmatprep.subr.bf16.mxu0 0
  %260 = vmatpush1.bf16.msra.mxu0 0
  %261 = vmatprep.subr.bf16.mxu0 0
  %262 = vmatpush1.bf16.msra.mxu0 0
  %263 = vmatprep.subr.bf16.mxu0 0
  %264 = vmatpush1.bf16.msra.mxu0 0
  %265 = vmatprep.subr.bf16.mxu0 0
  %266 = vmatpush1.bf16.msra.mxu0 0
  %267 = vmatprep.subr.bf16.mxu0 0
  %268 = vmatpush1.bf16.msra.mxu0 0
  %269 = vmatprep.subr.bf16.mxu0 0
  %270 = vmatpush1.bf16.msra.mxu0 0
  %271 = vmatprep.mubr.bf16.mxu0 0
  %272 = vmatmul.mubr.bf16.gmra.mrb[0].mxu0 %v224
  %v273 = vpop.f32.mrb[0].mxu0
  %v274 = vadd.f32 0.0, %v273
  %v275 = vpop.f32.mrb[0].mxu0
  %v276 = vadd.f32 0.0, %v275
  %v277 = vpop.f32.mrb[0].mxu0
  %v278 = vadd.f32 0.0, %v277
  %v279 = vpop.f32.mrb[0].mxu0
  %v280 = vadd.f32 0.0, %v279
  %281 = vdwg.mxu0
  %282 = vmatprep.subr.bf16.mxu0 %v189
  %283 = vmatpush1.bf16.msra.mxu0 %v188
  %284 = vmatprep.subr.bf16.mxu0 %v193
  %285 = vmatpush1.bf16.msra.mxu0 %v192
  %286 = vmatprep.subr.bf16.mxu0 %v197
  %287 = vmatpush1.bf16.msra.mxu0 %v196
  %288 = vmatprep.subr.bf16.mxu0 %v201
  %289 = vmatpush1.bf16.msra.mxu0 %v200
  %290 = vmatprep.subr.bf16.mxu0 %v237
  %291 = vmatpush1.bf16.msra.mxu0 %v234
  %292 = vmatprep.subr.bf16.mxu0 0
  %293 = vmatpush1.bf16.msra.mxu0 0
  %294 = vmatprep.subr.bf16.mxu0 0
  %295 = vmatpush1.bf16.msra.mxu0 0
  %296 = vmatprep.subr.bf16.mxu0 0
  %297 = vmatpush1.bf16.msra.mxu0 0
  %298 = vmatprep.subr.bf16.mxu0 0
  %299 = vmatpush1.bf16.msra.mxu0 0
  %300 = vmatprep.subr.bf16.mxu0 0
  %301 = vmatpush1.bf16.msra.mxu0 0
  %302 = vmatprep.subr.bf16.mxu0 0
  %303 = vmatpush1.bf16.msra.mxu0 0
  %304 = vmatprep.subr.bf16.mxu0 0
  %305 = vmatpush1.bf16.msra.mxu0 0
  %306 = vmatprep.subr.bf16.mxu0 0
  %307 = vmatpush1.bf16.msra.mxu0 0
  %308 = vmatprep.subr.bf16.mxu0 0
  %309 = vmatpush1.bf16.msra.mxu0 0
  %310 = vmatprep.subr.bf16.mxu0 0
  %311 = vmatpush1.bf16.msra.mxu0 0
  %312 = vmatprep.subr.bf16.mxu0 0
  %313 = vmatpush1.bf16.msra.mxu0 0
  %314 = vmatprep.mubr.bf16.mxu0 0
  %315 = vmatmul.mubr.bf16.gmra.mrb[0].mxu0 %v224
  %v316 = vpop.f32.mrb[0].mxu0
  %v317 = vadd.f32 0.0, %v316
  %v318 = vpop.f32.mrb[0].mxu0
  %v319 = vadd.f32 0.0, %v318
  %v320 = vpop.f32.mrb[0].mxu0
  %v321 = vadd.f32 0.0, %v320
  %v322 = vpop.f32.mrb[0].mxu0
  %v323 = vadd.f32 0.0, %v322
  %324 = vdwg.mxu0
  %v343 = vunpack.c.l.b16 %v74
  %v344 = vunpack.c.h.b16 %v74
  %v345 = vunpack.c.l.b16 %v75
  %v346 = vunpack.c.h.b16 %v75
  %v347 = vunpack.c.l.b16 %v76
  %v348 = vunpack.c.h.b16 %v76
  %v349 = vunpack.c.l.b16 %v77
  %v350 = vunpack.c.h.b16 %v77
  %v351 = vunpack.c.l.b16 %v78
  %v352 = vunpack.c.h.b16 %v78
  %v353 = vunpack.c.l.b16 %v79
  %v354 = vunpack.c.h.b16 %v79
  %v355 = vunpack.c.l.b16 %v80
  %v356 = vunpack.c.h.b16 %v80
  %v357 = vunpack.c.l.b16 %v81
  %v358 = vunpack.c.h.b16 %v81
  %v359 = vunpack.c.l.b16 %v82
  %v360 = vunpack.c.h.b16 %v82
  %v361 = vunpack.c.l.b16 %v83
  %v362 = vunpack.c.h.b16 %v83
  %v363 = vunpack.c.l.b16 %v84
  %v364 = vunpack.c.h.b16 %v84
  %v365 = vunpack.c.l.b16 %v85
  %v366 = vunpack.c.h.b16 %v85
  %v367 = vunpack.c.l.b16 %v86
  %v368 = vunpack.c.h.b16 %v86
  %v369 = vunpack.c.l.b16 %v87
  %v370 = vunpack.c.h.b16 %v87
  %v371 = vunpack.c.l.b16 %v88
  %v372 = vunpack.c.h.b16 %v88
  %v373 = vunpack.c.l.b16 %v89
  %v374 = vunpack.c.h.b16 %v89
  %v375 = vunpack.c.l.b16 %v90
  %v376 = vunpack.c.h.b16 %v90
  %v377 = vunpack.c.l.b16 %v91
  %v378 = vunpack.c.h.b16 %v91
  %v379 = vpack.c.b16 %v347, %v343
  %v380 = vpack.c.b16 %v348, %v344
  %v381 = vpack.c.b16 %v349, %v345
  %v382 = vpack.c.b16 %v350, %v346
  %v383 = vpack.c.b16 %v355, %v351
  %v384 = vpack.c.b16 %v356, %v352
  %v385 = vpack.c.b16 %v357, %v353
  %v386 = vpack.c.b16 %v358, %v354
  %v387 = vpack.c.b16 %v363, %v359
  %v388 = vpack.c.b16 %v364, %v360
  %v389 = vpack.c.b16 %v365, %v361
  %v390 = vpack.c.b16 %v366, %v362
  %v391 = vpack.c.b16 %v371, %v367
  %v392 = vpack.c.b16 %v372, %v368
  %v393 = vpack.c.b16 %v373, %v369
  %v394 = vpack.c.b16 %v374, %v370
  %v395 = vpack.c.b16 %v375, %v375
  %v396 = vpack.c.b16 %v376, %v376
  %v397 = vpack.c.b16 %v377, %v377
  %v398 = vpack.c.b16 %v378, %v378
  %v415 = vsel %vm222, %v117, 0
  %v418 = vsel %vm226, %v395, 0
  %v421 = vsel %vm226, %v396, 0
  %v424 = vsel %vm226, %v397, 0
  %v427 = vsel %vm226, %v398, 0
  %429 = vmatprep.subr.bf16.mxu0 %v380
  %430 = vmatpush1.bf16.msra.mxu0 %v379
  %431 = vmatprep.subr.bf16.mxu0 %v384
  %432 = vmatpush1.bf16.msra.mxu0 %v383
  %433 = vmatprep.subr.bf16.mxu0 %v388
  %434 = vmatpush1.bf16.msra.mxu0 %v387
  %435 = vmatprep.subr.bf16.mxu0 %v392
  %436 = vmatpush1.bf16.msra.mxu0 %v391
  %437 = vmatprep.subr.bf16.mxu0 %v421
  %438 = vmatpush1.bf16.msra.mxu0 %v418
  %439 = vmatprep.subr.bf16.mxu0 0
  %440 = vmatpush1.bf16.msra.mxu0 0
  %441 = vmatprep.subr.bf16.mxu0 0
  %442 = vmatpush1.bf16.msra.mxu0 0
  %443 = vmatprep.subr.bf16.mxu0 0
  %444 = vmatpush1.bf16.msra.mxu0 0
  %445 = vmatprep.subr.bf16.mxu0 0
  %446 = vmatpush1.bf16.msra.mxu0 0
  %447 = vmatprep.subr.bf16.mxu0 0
  %448 = vmatpush1.bf16.msra.mxu0 0
  %449 = vmatprep.subr.bf16.mxu0 0
  %450 = vmatpush1.bf16.msra.mxu0 0
  %451 = vmatprep.subr.bf16.mxu0 0
  %452 = vmatpush1.bf16.msra.mxu0 0
  %453 = vmatprep.subr.bf16.mxu0 0
  %454 = vmatpush1.bf16.msra.mxu0 0
  %455 = vmatprep.subr.bf16.mxu0 0
  %456 = vmatpush1.bf16.msra.mxu0 0
  %457 = vmatprep.subr.bf16.mxu0 0
  %458 = vmatpush1.bf16.msra.mxu0 0
  %459 = vmatprep.subr.bf16.mxu0 0
  %460 = vmatpush1.bf16.msra.mxu0 0
  %461 = vmatprep.mubr.bf16.mxu0 0
  %462 = vmatmul.mubr.bf16.gmra.mrb[0].mxu0 %v415
  %v463 = vpop.f32.mrb[0].mxu0
  %v464 = vadd.f32 %v274, %v463
  %v465 = vpop.f32.mrb[0].mxu0
  %v466 = vadd.f32 %v276, %v465
  %v467 = vpop.f32.mrb[0].mxu0
  %v468 = vadd.f32 %v278, %v467
  %v469 = vpop.f32.mrb[0].mxu0
  %v470 = vadd.f32 %v280, %v469
  %471 = vdwg.mxu0
  %472 = vmatprep.subr.bf16.mxu0 %v382
  %473 = vmatpush1.bf16.msra.mxu0 %v381
  %474 = vmatprep.subr.bf16.mxu0 %v386
  %475 = vmatpush1.bf16.msra.mxu0 %v385
  %476 = vmatprep.subr.bf16.mxu0 %v390
  %477 = vmatpush1.bf16.msra.mxu0 %v389
  %478 = vmatprep.subr.bf16.mxu0 %v394
  %479 = vmatpush1.bf16.msra.mxu0 %v393
  %480 = vmatprep.subr.bf16.mxu0 %v427
  %481 = vmatpush1.bf16.msra.mxu0 %v424
  %482 = vmatprep.subr.bf16.mxu0 0
  %483 = vmatpush1.bf16.msra.mxu0 0
  %484 = vmatprep.subr.bf16.mxu0 0
  %485 = vmatpush1.bf16.msra.mxu0 0
  %486 = vmatprep.subr.bf16.mxu0 0
  %487 = vmatpush1.bf16.msra.mxu0 0
  %488 = vmatprep.subr.bf16.mxu0 0
  %489 = vmatpush1.bf16.msra.mxu0 0
  %490 = vmatprep.subr.bf16.mxu0 0
  %491 = vmatpush1.bf16.msra.mxu0 0
  %492 = vmatprep.subr.bf16.mxu0 0
  %493 = vmatpush1.bf16.msra.mxu0 0
  %494 = vmatprep.subr.bf16.mxu0 0
  %495 = vmatpush1.bf16.msra.mxu0 0
  %496 = vmatprep.subr.bf16.mxu0 0
  %497 = vmatpush1.bf16.msra.mxu0 0
  %498 = vmatprep.subr.bf16.mxu0 0
  %499 = vmatpush1.bf16.msra.mxu0 0
  %500 = vmatprep.subr.bf16.mxu0 0
  %501 = vmatpush1.bf16.msra.mxu0 0
  %502 = vmatprep.subr.bf16.mxu0 0
  %503 = vmatpush1.bf16.msra.mxu0 0
  %504 = vmatprep.mubr.bf16.mxu0 0
  %505 = vmatmul.mubr.bf16.gmra.mrb[0].mxu0 %v415
  %v506 = vpop.f32.mrb[0].mxu0
  %v507 = vadd.f32 %v317, %v506
  %v508 = vpop.f32.mrb[0].mxu0
  %v509 = vadd.f32 %v319, %v508
  %v510 = vpop.f32.mrb[0].mxu0
  %v511 = vadd.f32 %v321, %v510
  %v512 = vpop.f32.mrb[0].mxu0
  %v513 = vadd.f32 %v323, %v512
  %514 = vdwg.mxu0
  %s515 = scalar_lea.vmem %s1, 288
  %v516 = vld [vmem:[%s515] sm:$0xff]
  %v517 = vld [vmem:[%s515 + $0x8] sm:$0xff]
  %v518 = vld [vmem:[%s515 + $0x10] sm:$0xff]
  %v519 = vld [vmem:[%s515 + $0x18] sm:$0xff]
  %v520 = vld [vmem:[%s515 + $0x20] sm:$0xff]
  %v521 = vld [vmem:[%s515 + $0x28] sm:$0xff]
  %v522 = vld [vmem:[%s515 + $0x30] sm:$0xff]
  %v523 = vld [vmem:[%s515 + $0x38] sm:$0xff]
  %v524 = vld [vmem:[%s515 + $0x40] sm:$0xff]
  %v525 = vld [vmem:[%s515 + $0x48] sm:$0xff]
  %v526 = vld [vmem:[%s515 + $0x50] sm:$0xff]
  %v527 = vld [vmem:[%s515 + $0x58] sm:$0xff]
  %v528 = vld [vmem:[%s515 + $0x60] sm:$0xff]
  %v529 = vld [vmem:[%s515 + $0x68] sm:$0xff]
  %v530 = vld [vmem:[%s515 + $0x70] sm:$0xff]
  %v531 = vld [vmem:[%s515 + $0x78] sm:$0xff]
  %v532 = vld [vmem:[%s515 + $0x80] sm:$0xff]
  %v533 = vld [vmem:[%s515 + $0x88] sm:$0xff]
  %vm534 = vcmask 1046528
  %v535 = vrot.slane %v117, 1
  %v536 = vrot.slane %v118, 1
  %v537 = vsel %vm534, %v535, %v536
  %v556 = vunpack.c.l.b16 %v516
  %v557 = vunpack.c.h.b16 %v516
  %v558 = vunpack.c.l.b16 %v517
  %v559 = vunpack.c.h.b16 %v517
  %v560 = vunpack.c.l.b16 %v518
  %v561 = vunpack.c.h.b16 %v518
  %v562 = vunpack.c.l.b16 %v519
  %v563 = vunpack.c.h.b16 %v519
  %v564 = vunpack.c.l.b16 %v520
  %v565 = vunpack.c.h.b16 %v520
  %v566 = vunpack.c.l.b16 %v521
  %v567 = vunpack.c.h.b16 %v521
  %v568 = vunpack.c.l.b16 %v522
  %v569 = vunpack.c.h.b16 %v522
  %v570 = vunpack.c.l.b16 %v523
  %v571 = vunpack.c.h.b16 %v523
  %v572 = vunpack.c.l.b16 %v524
  %v573 = vunpack.c.h.b16 %v524
  %v574 = vunpack.c.l.b16 %v525
  %v575 = vunpack.c.h.b16 %v525
  %v576 = vunpack.c.l.b16 %v526
  %v577 = vunpack.c.h.b16 %v526
  %v578 = vunpack.c.l.b16 %v527
  %v579 = vunpack.c.h.b16 %v527
  %v580 = vunpack.c.l.b16 %v528
  %v581 = vunpack.c.h.b16 %v528
  %v582 = vunpack.c.l.b16 %v529
  %v583 = vunpack.c.h.b16 %v529
  %v584 = vunpack.c.l.b16 %v530
  %v585 = vunpack.c.h.b16 %v530
  %v586 = vunpack.c.l.b16 %v531
  %v587 = vunpack.c.h.b16 %v531
  %v588 = vunpack.c.l.b16 %v532
  %v589 = vunpack.c.h.b16 %v532
  %v590 = vunpack.c.l.b16 %v533
  %v591 = vunpack.c.h.b16 %v533
  %v592 = vpack.c.b16 %v560, %v556
  %v593 = vpack.c.b16 %v561, %v557
  %v594 = vpack.c.b16 %v562, %v558
  %v595 = vpack.c.b16 %v563, %v559
  %v596 = vpack.c.b16 %v568, %v564
  %v597 = vpack.c.b16 %v569, %v565
  %v598 = vpack.c.b16 %v570, %v566
  %v599 = vpack.c.b16 %v571, %v567
  %v600 = vpack.c.b16 %v576, %v572
  %v601 = vpack.c.b16 %v577, %v573
  %v602 = vpack.c.b16 %v578, %v574
  %v603 = vpack.c.b16 %v579, %v575
  %v604 = vpack.c.b16 %v584, %v580
  %v605 = vpack.c.b16 %v585, %v581
  %v606 = vpack.c.b16 %v586, %v582
  %v607 = vpack.c.b16 %v587, %v583
  %v608 = vpack.c.b16 %v588, %v588
  %v609 = vpack.c.b16 %v589, %v589
  %v610 = vpack.c.b16 %v590, %v590
  %v611 = vpack.c.b16 %v591, %v591
  %v629 = vsel %vm222, %v537, 0
  %v632 = vsel %vm226, %v608, 0
  %v635 = vsel %vm226, %v609, 0
  %v638 = vsel %vm226, %v610, 0
  %v641 = vsel %vm226, %v611, 0
  %643 = vmatprep.subr.bf16.mxu0 %v593
  %644 = vmatpush1.bf16.msra.mxu0 %v592
  %645 = vmatprep.subr.bf16.mxu0 %v597
  %646 = vmatpush1.bf16.msra.mxu0 %v596
  %647 = vmatprep.subr.bf16.mxu0 %v601
  %648 = vmatpush1.bf16.msra.mxu0 %v600
  %649 = vmatprep.subr.bf16.mxu0 %v605
  %650 = vmatpush1.bf16.msra.mxu0 %v604
  %651 = vmatprep.subr.bf16.mxu0 %v635
  %652 = vmatpush1.bf16.msra.mxu0 %v632
  %653 = vmatprep.subr.bf16.mxu0 0
  %654 = vmatpush1.bf16.msra.mxu0 0
  %655 = vmatprep.subr.bf16.mxu0 0
  %656 = vmatpush1.bf16.msra.mxu0 0
  %657 = vmatprep.subr.bf16.mxu0 0
  %658 = vmatpush1.bf16.msra.mxu0 0
  %659 = vmatprep.subr.bf16.mxu0 0
  %660 = vmatpush1.bf16.msra.mxu0 0
  %661 = vmatprep.subr.bf16.mxu0 0
  %662 = vmatpush1.bf16.msra.mxu0 0
  %663 = vmatprep.subr.bf16.mxu0 0
  %664 = vmatpush1.bf16.msra.mxu0 0
  %665 = vmatprep.subr.bf16.mxu0 0
  %666 = vmatpush1.bf16.msra.mxu0 0
  %667 = vmatprep.subr.bf16.mxu0 0
  %668 = vmatpush1.bf16.msra.mxu0 0
  %669 = vmatprep.subr.bf16.mxu0 0
  %670 = vmatpush1.bf16.msra.mxu0 0
  %671 = vmatprep.subr.bf16.mxu0 0
  %672 = vmatpush1.bf16.msra.mxu0 0
  %673 = vmatprep.subr.bf16.mxu0 0
  %674 = vmatpush1.bf16.msra.mxu0 0
  %675 = vmatprep.mubr.bf16.mxu0 0
  %676 = vmatmul.mubr.bf16.gmra.mrb[0].mxu0 %v629
  %v677 = vpop.f32.mrb[0].mxu0
  %v678 = vadd.f32 0.0, %v677
  %v679 = vpop.f32.mrb[0].mxu0
  %v680 = vadd.f32 0.0, %v679
  %v681 = vpop.f32.mrb[0].mxu0
  %v682 = vadd.f32 0.0, %v681
  %v683 = vpop.f32.mrb[0].mxu0
  %v684 = vadd.f32 0.0, %v683
  %685 = vdwg.mxu0
  %686 = vmatprep.subr.bf16.mxu0 %v595
  %687 = vmatpush1.bf16.msra.mxu0 %v594
  %688 = vmatprep.subr.bf16.mxu0 %v599
  %689 = vmatpush1.bf16.msra.mxu0 %v598
  %690 = vmatprep.subr.bf16.mxu0 %v603
  %691 = vmatpush1.bf16.msra.mxu0 %v602
  %692 = vmatprep.subr.bf16.mxu0 %v607
  %693 = vmatpush1.bf16.msra.mxu0 %v606
  %694 = vmatprep.subr.bf16.mxu0 %v641
  %695 = vmatpush1.bf16.msra.mxu0 %v638
  %696 = vmatprep.subr.bf16.mxu0 0
  %697 = vmatpush1.bf16.msra.mxu0 0
  %698 = vmatprep.subr.bf16.mxu0 0
  %699 = vmatpush1.bf16.msra.mxu0 0
  %700 = vmatprep.subr.bf16.mxu0 0
  %701 = vmatpush1.bf16.msra.mxu0 0
  %702 = vmatprep.subr.bf16.mxu0 0
  %703 = vmatpush1.bf16.msra.mxu0 0
  %704 = vmatprep.subr.bf16.mxu0 0
  %705 = vmatpush1.bf16.msra.mxu0 0
  %706 = vmatprep.subr.bf16.mxu0 0
  %707 = vmatpush1.bf16.msra.mxu0 0
  %708 = vmatprep.subr.bf16.mxu0 0
  %709 = vmatpush1.bf16.msra.mxu0 0
  %710 = vmatprep.subr.bf16.mxu0 0
  %711 = vmatpush1.bf16.msra.mxu0 0
  %712 = vmatprep.subr.bf16.mxu0 0
  %713 = vmatpush1.bf16.msra.mxu0 0
  %714 = vmatprep.subr.bf16.mxu0 0
  %715 = vmatpush1.bf16.msra.mxu0 0
  %716 = vmatprep.subr.bf16.mxu0 0
  %717 = vmatpush1.bf16.msra.mxu0 0
  %718 = vmatprep.mubr.bf16.mxu0 0
  %719 = vmatmul.mubr.bf16.gmra.mrb[0].mxu0 %v629
  %v720 = vpop.f32.mrb[0].mxu0
  %v721 = vadd.f32 0.0, %v720
  %v722 = vpop.f32.mrb[0].mxu0
  %v723 = vadd.f32 0.0, %v722
  %v724 = vpop.f32.mrb[0].mxu0
  %v725 = vadd.f32 0.0, %v724
  %v726 = vpop.f32.mrb[0].mxu0
  %v727 = vadd.f32 0.0, %v726
  %728 = vdwg.mxu0
  %v729 = vadd.f32 %v464, %v678
  %v730 = vadd.f32 %v466, %v680
  %v731 = vadd.f32 %v507, %v721
  %v732 = vadd.f32 %v509, %v723
  %v733 = vadd.f32 %v468, %v682
  %v734 = vadd.f32 %v470, %v684
  %v735 = vadd.f32 %v511, %v725
  %v736 = vadd.f32 %v513, %v727
  %v737 = vadd.f32 %v729, %v32
  %v738 = vadd.f32 %v730, %v36
  %v739 = vadd.f32 %v731, %v40
  %v740 = vadd.f32 %v732, %v44
  %v741 = vadd.f32 %v733, %v32
  %v742 = vadd.f32 %v734, %v36
  %v743 = vadd.f32 %v735, %v40
  %v744 = vadd.f32 %v736, %v44
  %v745 = vmax.f32 %v737, 0.0
  %v746 = vmax.f32 %v738, 0.0
  %v747 = vmax.f32 %v739, 0.0
  %v748 = vmax.f32 %v740, 0.0
  %v749 = vmax.f32 %v741, 0.0
  %v750 = vmax.f32 %v742, 0.0
  %v751 = vmax.f32 %v743, 0.0
  %v752 = vmax.f32 %v744, 0.0
  %v753 = vpack.c.bf16 %v749, %v745
  %v754 = vpack.c.bf16 %v750, %v746
  %v755 = vpack.c.bf16 %v751, %v747
  %v756 = vpack.c.bf16 %v752, %v748
  %757 = vst [vmem:[#allocation2] sm:$0xff] %v753
  %758 = vst [vmem:[#allocation2 + $0x8] sm:$0xff] %v754
  %759 = vst [vmem:[#allocation2 + $0x10] sm:$0xff] %v755
  %760 = vst [vmem:[#allocation2 + $0x18] sm:$0xff] %v756
  %s761 = scalar_lea.vmem %s0, 12
  %v762 = vld [vmem:[%s761] sm:$0xf]
  %v763 = vld [vmem:[%s761 + $0x4] sm:$0xf]
  %v764 = vld [vmem:[%s761 + $0x8] sm:$0x1]
  %v765 = vld [vmem:[%s1] sm:$0xff]
  %v766 = vld [vmem:[%s1 + $0x8] sm:$0xff]
  %v767 = vld [vmem:[%s1 + $0x10] sm:$0xff]
  %v768 = vld [vmem:[%s1 + $0x18] sm:$0xff]
  %v769 = vld [vmem:[%s1 + $0x20] sm:$0xff]
  %v770 = vld [vmem:[%s1 + $0x28] sm:$0xff]
  %v771 = vld [vmem:[%s1 + $0x30] sm:$0xff]
  %v772 = vld [vmem:[%s1 + $0x38] sm:$0xff]
  %v773 = vld [vmem:[%s1 + $0x40] sm:$0xff]
  %v774 = vld [vmem:[%s1 + $0x48] sm:$0xff]
  %v775 = vld [vmem:[%s1 + $0x50] sm:$0xff]
  %v776 = vld [vmem:[%s1 + $0x58] sm:$0xff]
  %v777 = vld [vmem:[%s1 + $0x60] sm:$0xff]
  %v778 = vld [vmem:[%s1 + $0x68] sm:$0xff]
  %v779 = vld [vmem:[%s1 + $0x70] sm:$0xff]
  %v780 = vld [vmem:[%s1 + $0x78] sm:$0xff]
  %v781 = vld [vmem:[%s1 + $0x80] sm:$0xff]
  %v782 = vld [vmem:[%s1 + $0x88] sm:$0xff]
  %v783 = vld [vmem:[%s92] sm:$0xff]
  %v784 = vld [vmem:[%s92 + $0x8] sm:$0xff]
  %v785 = vld [vmem:[%s92 + $0x10] sm:$0xff]
  %v786 = vld [vmem:[%s92 + $0x18] sm:$0xff]
  %v787 = vld [vmem:[%s92 + $0x20] sm:$0xff]
  %v788 = vld [vmem:[%s92 + $0x28] sm:$0xff]
  %v789 = vld [vmem:[%s92 + $0x30] sm:$0xff]
  %v790 = vld [vmem:[%s92 + $0x38] sm:$0xff]
  %v791 = vld [vmem:[%s92 + $0x40] sm:$0xff]
  %v792 = vld [vmem:[%s92 + $0x48] sm:$0xff]
  %v793 = vld [vmem:[%s92 + $0x50] sm:$0xff]
  %v794 = vld [vmem:[%s92 + $0x58] sm:$0xff]
  %v795 = vld [vmem:[%s92 + $0x60] sm:$0xff]
  %v796 = vld [vmem:[%s92 + $0x68] sm:$0xff]
  %v797 = vld [vmem:[%s92 + $0x70] sm:$0xff]
  %v798 = vld [vmem:[%s92 + $0x78] sm:$0xff]
  %v799 = vld [vmem:[%s92 + $0x80] sm:$0xff]
  %v800 = vld [vmem:[%s92 + $0x88] sm:$0xff]
  %v804 = vunpack.c.l.b16 %v762
  %v805 = vunpack.c.l.b16 %v763
  %v806 = vunpack.c.l.b16 %v764
  %v807 = vpack.c.b16 %v805, %v804
  %v808 = vpack.c.b16 %v806, %v806
  %v810 = vshrl.u32 %v807, 16
  %v812 = vshll.u32 %v807, 16
  %v814 = vrot.slane %v812, 1
  %v815 = vor.u32 %v810, %v814
  %v817 = vshll.u32 %v808, 16
  %v819 = vrot.slane %v817, 1
  %v820 = vsel %vm119, %v815, %v819
  %v839 = vunpack.c.l.b16 %v783
  %v840 = vunpack.c.h.b16 %v783
  %v841 = vunpack.c.l.b16 %v784
  %v842 = vunpack.c.h.b16 %v784
  %v843 = vunpack.c.l.b16 %v785
  %v844 = vunpack.c.h.b16 %v785
  %v845 = vunpack.c.l.b16 %v786
  %v846 = vunpack.c.h.b16 %v786
  %v847 = vunpack.c.l.b16 %v787
  %v848 = vunpack.c.h.b16 %v787
  %v849 = vunpack.c.l.b16 %v788
  %v850 = vunpack.c.h.b16 %v788
  %v851 = vunpack.c.l.b16 %v789
  %v852 = vunpack.c.h.b16 %v789
  %v853 = vunpack.c.l.b16 %v790
  %v854 = vunpack.c.h.b16 %v790
  %v855 = vunpack.c.l.b16 %v791
  %v856 = vunpack.c.h.b16 %v791
  %v857 = vunpack.c.l.b16 %v792
  %v858 = vunpack.c.h.b16 %v792
  %v859 = vunpack.c.l.b16 %v793
  %v860 = vunpack.c.h.b16 %v793
  %v861 = vunpack.c.l.b16 %v794
  %v862 = vunpack.c.h.b16 %v794
  %v863 = vunpack.c.l.b16 %v795
  %v864 = vunpack.c.h.b16 %v795
  %v865 = vunpack.c.l.b16 %v796
  %v866 = vunpack.c.h.b16 %v796
  %v867 = vunpack.c.l.b16 %v797
  %v868 = vunpack.c.h.b16 %v797
  %v869 = vunpack.c.l.b16 %v798
  %v870 = vunpack.c.h.b16 %v798
  %v871 = vunpack.c.l.b16 %v799
  %v872 = vunpack.c.h.b16 %v799
  %v873 = vunpack.c.l.b16 %v800
  %v874 = vunpack.c.h.b16 %v800
  %v875 = vpack.c.b16 %v843, %v839
  %v876 = vpack.c.b16 %v844, %v840
  %v877 = vpack.c.b16 %v845, %v841
  %v878 = vpack.c.b16 %v846, %v842
  %v879 = vpack.c.b16 %v851, %v847
  %v880 = vpack.c.b16 %v852, %v848
  %v881 = vpack.c.b16 %v853, %v849
  %v882 = vpack.c.b16 %v854, %v850
  %v883 = vpack.c.b16 %v859, %v855
  %v884 = vpack.c.b16 %v860, %v856
  %v885 = vpack.c.b16 %v861, %v857
  %v886 = vpack.c.b16 %v862, %v858
  %v887 = vpack.c.b16 %v867, %v863
  %v888 = vpack.c.b16 %v868, %v864
  %v889 = vpack.c.b16 %v869, %v865
  %v890 = vpack.c.b16 %v870, %v866
  %v891 = vpack.c.b16 %v871, %v871
  %v892 = vpack.c.b16 %v872, %v872
  %v893 = vpack.c.b16 %v873, %v873
  %v894 = vpack.c.b16 %v874, %v874
  %v912 = vsel %vm222, %v820, 0
  %v915 = vsel %vm226, %v891, 0
  %v918 = vsel %vm226, %v892, 0
  %v921 = vsel %vm226, %v893, 0
  %v924 = vsel %vm226, %v894, 0
  %926 = vmatprep.subr.bf16.mxu0 %v876
  %927 = vmatpush1.bf16.msra.mxu0 %v875
  %928 = vmatprep.subr.bf16.mxu0 %v880
  %929 = vmatpush1.bf16.msra.mxu0 %v879
  %930 = vmatprep.subr.bf16.mxu0 %v884
  %931 = vmatpush1.bf16.msra.mxu0 %v883
  %932 = vmatprep.subr.bf16.mxu0 %v888
  %933 = vmatpush1.bf16.msra.mxu0 %v887
  %934 = vmatprep.subr.bf16.mxu0 %v918
  %935 = vmatpush1.bf16.msra.mxu0 %v915
  %936 = vmatprep.subr.bf16.mxu0 0
  %937 = vmatpush1.bf16.msra.mxu0 0
  %938 = vmatprep.subr.bf16.mxu0 0
  %939 = vmatpush1.bf16.msra.mxu0 0
  %940 = vmatprep.subr.bf16.mxu0 0
  %941 = vmatpush1.bf16.msra.mxu0 0
  %942 = vmatprep.subr.bf16.mxu0 0
  %943 = vmatpush1.bf16.msra.mxu0 0
  %944 = vmatprep.subr.bf16.mxu0 0
  %945 = vmatpush1.bf16.msra.mxu0 0
  %946 = vmatprep.subr.bf16.mxu0 0
  %947 = vmatpush1.bf16.msra.mxu0 0
  %948 = vmatprep.subr.bf16.mxu0 0
  %949 = vmatpush1.bf16.msra.mxu0 0
  %950 = vmatprep.subr.bf16.mxu0 0
  %951 = vmatpush1.bf16.msra.mxu0 0
  %952 = vmatprep.subr.bf16.mxu0 0
  %953 = vmatpush1.bf16.msra.mxu0 0
  %954 = vmatprep.subr.bf16.mxu0 0
  %955 = vmatpush1.bf16.msra.mxu0 0
  %956 = vmatprep.subr.bf16.mxu0 0
  %957 = vmatpush1.bf16.msra.mxu0 0
  %958 = vmatprep.mubr.bf16.mxu0 0
  %959 = vmatmul.mubr.bf16.gmra.mrb[0].mxu0 %v912
  %v960 = vpop.f32.mrb[0].mxu0
  %v961 = vadd.f32 0.0, %v960
  %v962 = vpop.f32.mrb[0].mxu0
  %v963 = vadd.f32 0.0, %v962
  %v964 = vpop.f32.mrb[0].mxu0
  %v965 = vadd.f32 0.0, %v964
  %v966 = vpop.f32.mrb[0].mxu0
  %v967 = vadd.f32 0.0, %v966
  %968 = vdwg.mxu0
  %969 = vmatprep.subr.bf16.mxu0 %v878
  %970 = vmatpush1.bf16.msra.mxu0 %v877
  %971 = vmatprep.subr.bf16.mxu0 %v882
  %972 = vmatpush1.bf16.msra.mxu0 %v881
  %973 = vmatprep.subr.bf16.mxu0 %v886
  %974 = vmatpush1.bf16.msra.mxu0 %v885
  %975 = vmatprep.subr.bf16.mxu0 %v890
  %976 = vmatpush1.bf16.msra.mxu0 %v889
  %977 = vmatprep.subr.bf16.mxu0 %v924
  %978 = vmatpush1.bf16.msra.mxu0 %v921
  %979 = vmatprep.subr.bf16.mxu0 0
  %980 = vmatpush1.bf16.msra.mxu0 0
  %981 = vmatprep.subr.bf16.mxu0 0
  %982 = vmatpush1.bf16.msra.mxu0 0
  %983 = vmatprep.subr.bf16.mxu0 0
  %984 = vmatpush1.bf16.msra.mxu0 0
  %985 = vmatprep.subr.bf16.mxu0 0
  %986 = vmatpush1.bf16.msra.mxu0 0
  %987 = vmatprep.subr.bf16.mxu0 0
  %988 = vmatpush1.bf16.msra.mxu0 0
  %989 = vmatprep.subr.bf16.mxu0 0
  %990 = vmatpush1.bf16.msra.mxu0 0
  %991 = vmatprep.subr.bf16.mxu0 0
  %992 = vmatpush1.bf16.msra.mxu0 0
  %993 = vmatprep.subr.bf16.mxu0 0
  %994 = vmatpush1.bf16.msra.mxu0 0
  %995 = vmatprep.subr.bf16.mxu0 0
  %996 = vmatpush1.bf16.msra.mxu0 0
  %997 = vmatprep.subr.bf16.mxu0 0
  %998 = vmatpush1.bf16.msra.mxu0 0
  %999 = vmatprep.subr.bf16.mxu0 0
  %1000 = vmatpush1.bf16.msra.mxu0 0
  %1001 = vmatprep.mubr.bf16.mxu0 0
  %1002 = vmatmul.mubr.bf16.gmra.mrb[0].mxu0 %v912
  %v1003 = vpop.f32.mrb[0].mxu0
  %v1004 = vadd.f32 0.0, %v1003
  %v1005 = vpop.f32.mrb[0].mxu0
  %v1006 = vadd.f32 0.0, %v1005
  %v1007 = vpop.f32.mrb[0].mxu0
  %v1008 = vadd.f32 0.0, %v1007
  %v1009 = vpop.f32.mrb[0].mxu0
  %v1010 = vadd.f32 0.0, %v1009
  %1011 = vdwg.mxu0
  %v1030 = vunpack.c.l.b16 %v765
  %v1031 = vunpack.c.h.b16 %v765
  %v1032 = vunpack.c.l.b16 %v766
  %v1033 = vunpack.c.h.b16 %v766
  %v1034 = vunpack.c.l.b16 %v767
  %v1035 = vunpack.c.h.b16 %v767
  %v1036 = vunpack.c.l.b16 %v768
  %v1037 = vunpack.c.h.b16 %v768
  %v1038 = vunpack.c.l.b16 %v769
  %v1039 = vunpack.c.h.b16 %v769
  %v1040 = vunpack.c.l.b16 %v770
  %v1041 = vunpack.c.h.b16 %v770
  %v1042 = vunpack.c.l.b16 %v771
  %v1043 = vunpack.c.h.b16 %v771
  %v1044 = vunpack.c.l.b16 %v772
  %v1045 = vunpack.c.h.b16 %v772
  %v1046 = vunpack.c.l.b16 %v773
  %v1047 = vunpack.c.h.b16 %v773
  %v1048 = vunpack.c.l.b16 %v774
  %v1049 = vunpack.c.h.b16 %v774
  %v1050 = vunpack.c.l.b16 %v775
  %v1051 = vunpack.c.h.b16 %v775
  %v1052 = vunpack.c.l.b16 %v776
  %v1053 = vunpack.c.h.b16 %v776
  %v1054 = vunpack.c.l.b16 %v777
  %v1055 = vunpack.c.h.b16 %v777
  %v1056 = vunpack.c.l.b16 %v778
  %v1057 = vunpack.c.h.b16 %v778
  %v1058 = vunpack.c.l.b16 %v779
  %v1059 = vunpack.c.h.b16 %v779
  %v1060 = vunpack.c.l.b16 %v780
  %v1061 = vunpack.c.h.b16 %v780
  %v1062 = vunpack.c.l.b16 %v781
  %v1063 = vunpack.c.h.b16 %v781
  %v1064 = vunpack.c.l.b16 %v782
  %v1065 = vunpack.c.h.b16 %v782
  %v1066 = vpack.c.b16 %v1034, %v1030
  %v1067 = vpack.c.b16 %v1035, %v1031
  %v1068 = vpack.c.b16 %v1036, %v1032
  %v1069 = vpack.c.b16 %v1037, %v1033
  %v1070 = vpack.c.b16 %v1042, %v1038
  %v1071 = vpack.c.b16 %v1043, %v1039
  %v1072 = vpack.c.b16 %v1044, %v1040
  %v1073 = vpack.c.b16 %v1045, %v1041
  %v1074 = vpack.c.b16 %v1050, %v1046
  %v1075 = vpack.c.b16 %v1051, %v1047
  %v1076 = vpack.c.b16 %v1052, %v1048
  %v1077 = vpack.c.b16 %v1053, %v1049
  %v1078 = vpack.c.b16 %v1058, %v1054
  %v1079 = vpack.c.b16 %v1059, %v1055
  %v1080 = vpack.c.b16 %v1060, %v1056
  %v1081 = vpack.c.b16 %v1061, %v1057
  %v1082 = vpack.c.b16 %v1062, %v1062
  %v1083 = vpack.c.b16 %v1063, %v1063
  %v1084 = vpack.c.b16 %v1064, %v1064
  %v1085 = vpack.c.b16 %v1065, %v1065
  %v1102 = vsel %vm222, %v807, 0
  %v1105 = vsel %vm226, %v1082, 0
  %v1108 = vsel %vm226, %v1083, 0
  %v1111 = vsel %vm226, %v1084, 0
  %v1114 = vsel %vm226, %v1085, 0
  %1116 = vmatprep.subr.bf16.mxu0 %v1067
  %1117 = vmatpush1.bf16.msra.mxu0 %v1066
  %1118 = vmatprep.subr.bf16.mxu0 %v1071
  %1119 = vmatpush1.bf16.msra.mxu0 %v1070
  %1120 = vmatprep.subr.bf16.mxu0 %v1075
  %1121 = vmatpush1.bf16.msra.mxu0 %v1074
  %1122 = vmatprep.subr.bf16.mxu0 %v1079
  %1123 = vmatpush1.bf16.msra.mxu0 %v1078
  %1124 = vmatprep.subr.bf16.mxu0 %v1108
  %1125 = vmatpush1.bf16.msra.mxu0 %v1105
  %1126 = vmatprep.subr.bf16.mxu0 0
  %1127 = vmatpush1.bf16.msra.mxu0 0
  %1128 = vmatprep.subr.bf16.mxu0 0
  %1129 = vmatpush1.bf16.msra.mxu0 0
  %1130 = vmatprep.subr.bf16.mxu0 0
  %1131 = vmatpush1.bf16.msra.mxu0 0
  %1132 = vmatprep.subr.bf16.mxu0 0
  %1133 = vmatpush1.bf16.msra.mxu0 0
  %1134 = vmatprep.subr.bf16.mxu0 0
  %1135 = vmatpush1.bf16.msra.mxu0 0
  %1136 = vmatprep.subr.bf16.mxu0 0
  %1137 = vmatpush1.bf16.msra.mxu0 0
  %1138 = vmatprep.subr.bf16.mxu0 0
  %1139 = vmatpush1.bf16.msra.mxu0 0
  %1140 = vmatprep.subr.bf16.mxu0 0
  %1141 = vmatpush1.bf16.msra.mxu0 0
  %1142 = vmatprep.subr.bf16.mxu0 0
  %1143 = vmatpush1.bf16.msra.mxu0 0
  %1144 = vmatprep.subr.bf16.mxu0 0
  %1145 = vmatpush1.bf16.msra.mxu0 0
  %1146 = vmatprep.subr.bf16.mxu0 0
  %1147 = vmatpush1.bf16.msra.mxu0 0
  %1148 = vmatprep.mubr.bf16.mxu0 0
  %1149 = vmatmul.mubr.bf16.gmra.mrb[0].mxu0 %v1102
  %v1150 = vpop.f32.mrb[0].mxu0
  %v1151 = vadd.f32 %v961, %v1150
  %v1152 = vpop.f32.mrb[0].mxu0
  %v1153 = vadd.f32 %v963, %v1152
  %v1154 = vpop.f32.mrb[0].mxu0
  %v1155 = vadd.f32 %v965, %v1154
  %v1156 = vpop.f32.mrb[0].mxu0
  %v1157 = vadd.f32 %v967, %v1156
  %1158 = vdwg.mxu0
  %1159 = vmatprep.subr.bf16.mxu0 %v1069
  %1160 = vmatpush1.bf16.msra.mxu0 %v1068
  %1161 = vmatprep.subr.bf16.mxu0 %v1073
  %1162 = vmatpush1.bf16.msra.mxu0 %v1072
  %1163 = vmatprep.subr.bf16.mxu0 %v1077
  %1164 = vmatpush1.bf16.msra.mxu0 %v1076
  %1165 = vmatprep.subr.bf16.mxu0 %v1081
  %1166 = vmatpush1.bf16.msra.mxu0 %v1080
  %1167 = vmatprep.subr.bf16.mxu0 %v1114
  %1168 = vmatpush1.bf16.msra.mxu0 %v1111
  %1169 = vmatprep.subr.bf16.mxu0 0
  %1170 = vmatpush1.bf16.msra.mxu0 0
  %1171 = vmatprep.subr.bf16.mxu0 0
  %1172 = vmatpush1.bf16.msra.mxu0 0
  %1173 = vmatprep.subr.bf16.mxu0 0
  %1174 = vmatpush1.bf16.msra.mxu0 0
  %1175 = vmatprep.subr.bf16.mxu0 0
  %1176 = vmatpush1.bf16.msra.mxu0 0
  %1177 = vmatprep.subr.bf16.mxu0 0
  %1178 = vmatpush1.bf16.msra.mxu0 0
  %1179 = vmatprep.subr.bf16.mxu0 0
  %1180 = vmatpush1.bf16.msra.mxu0 0
  %1181 = vmatprep.subr.bf16.mxu0 0
  %1182 = vmatpush1.bf16.msra.mxu0 0
  %1183 = vmatprep.subr.bf16.mxu0 0
  %1184 = vmatpush1.bf16.msra.mxu0 0
  %1185 = vmatprep.subr.bf16.mxu0 0
  %1186 = vmatpush1.bf16.msra.mxu0 0
  %1187 = vmatprep.subr.bf16.mxu0 0
  %1188 = vmatpush1.bf16.msra.mxu0 0
  %1189 = vmatprep.subr.bf16.mxu0 0
  %1190 = vmatpush1.bf16.msra.mxu0 0
  %1191 = vmatprep.mubr.bf16.mxu0 0
  %1192 = vmatmul.mubr.bf16.gmra.mrb[0].mxu0 %v1102
  %v1193 = vpop.f32.mrb[0].mxu0
  %v1194 = vadd.f32 %v1004, %v1193
  %v1195 = vpop.f32.mrb[0].mxu0
  %v1196 = vadd.f32 %v1006, %v1195
  %v1197 = vpop.f32.mrb[0].mxu0
  %v1198 = vadd.f32 %v1008, %v1197
  %v1199 = vpop.f32.mrb[0].mxu0
  %v1200 = vadd.f32 %v1010, %v1199
  %1201 = vdwg.mxu0
  %v1202 = vld [vmem:[%s515] sm:$0xff]
  %v1203 = vld [vmem:[%s515 + $0x8] sm:$0xff]
  %v1204 = vld [vmem:[%s515 + $0x10] sm:$0xff]
  %v1205 = vld [vmem:[%s515 + $0x18] sm:$0xff]
  %v1206 = vld [vmem:[%s515 + $0x20] sm:$0xff]
  %v1207 = vld [vmem:[%s515 + $0x28] sm:$0xff]
  %v1208 = vld [vmem:[%s515 + $0x30] sm:$0xff]
  %v1209 = vld [vmem:[%s515 + $0x38] sm:$0xff]
  %v1210 = vld [vmem:[%s515 + $0x40] sm:$0xff]
  %v1211 = vld [vmem:[%s515 + $0x48] sm:$0xff]
  %v1212 = vld [vmem:[%s515 + $0x50] sm:$0xff]
  %v1213 = vld [vmem:[%s515 + $0x58] sm:$0xff]
  %v1214 = vld [vmem:[%s515 + $0x60] sm:$0xff]
  %v1215 = vld [vmem:[%s515 + $0x68] sm:$0xff]
  %v1216 = vld [vmem:[%s515 + $0x70] sm:$0xff]
  %v1217 = vld [vmem:[%s515 + $0x78] sm:$0xff]
  %v1218 = vld [vmem:[%s515 + $0x80] sm:$0xff]
  %v1219 = vld [vmem:[%s515 + $0x88] sm:$0xff]
  %v1220 = vrot.slane %v807, 1
  %v1221 = vrot.slane %v808, 1
  %v1222 = vsel %vm534, %v1220, %v1221
  %v1241 = vunpack.c.l.b16 %v1202
  %v1242 = vunpack.c.h.b16 %v1202
  %v1243 = vunpack.c.l.b16 %v1203
  %v1244 = vunpack.c.h.b16 %v1203
  %v1245 = vunpack.c.l.b16 %v1204
  %v1246 = vunpack.c.h.b16 %v1204
  %v1247 = vunpack.c.l.b16 %v1205
  %v1248 = vunpack.c.h.b16 %v1205
  %v1249 = vunpack.c.l.b16 %v1206
  %v1250 = vunpack.c.h.b16 %v1206
  %v1251 = vunpack.c.l.b16 %v1207
  %v1252 = vunpack.c.h.b16 %v1207
  %v1253 = vunpack.c.l.b16 %v1208
  %v1254 = vunpack.c.h.b16 %v1208
  %v1255 = vunpack.c.l.b16 %v1209
  %v1256 = vunpack.c.h.b16 %v1209
  %v1257 = vunpack.c.l.b16 %v1210
  %v1258 = vunpack.c.h.b16 %v1210
  %v1259 = vunpack.c.l.b16 %v1211
  %v1260 = vunpack.c.h.b16 %v1211
  %v1261 = vunpack.c.l.b16 %v1212
  %v1262 = vunpack.c.h.b16 %v1212
  %v1263 = vunpack.c.l.b16 %v1213
  %v1264 = vunpack.c.h.b16 %v1213
  %v1265 = vunpack.c.l.b16 %v1214
  %v1266 = vunpack.c.h.b16 %v1214
  %v1267 = vunpack.c.l.b16 %v1215
  %v1268 = vunpack.c.h.b16 %v1215
  %v1269 = vunpack.c.l.b16 %v1216
  %v1270 = vunpack.c.h.b16 %v1216
  %v1271 = vunpack.c.l.b16 %v1217
  %v1272 = vunpack.c.h.b16 %v1217
  %v1273 = vunpack.c.l.b16 %v1218
  %v1274 = vunpack.c.h.b16 %v1218
  %v1275 = vunpack.c.l.b16 %v1219
  %v1276 = vunpack.c.h.b16 %v1219
  %v1277 = vpack.c.b16 %v1245, %v1241
  %v1278 = vpack.c.b16 %v1246, %v1242
  %v1279 = vpack.c.b16 %v1247, %v1243
  %v1280 = vpack.c.b16 %v1248, %v1244
  %v1281 = vpack.c.b16 %v1253, %v1249
  %v1282 = vpack.c.b16 %v1254, %v1250
  %v1283 = vpack.c.b16 %v1255, %v1251
  %v1284 = vpack.c.b16 %v1256, %v1252
  %v1285 = vpack.c.b16 %v1261, %v1257
  %v1286 = vpack.c.b16 %v1262, %v1258
  %v1287 = vpack.c.b16 %v1263, %v1259
  %v1288 = vpack.c.b16 %v1264, %v1260
  %v1289 = vpack.c.b16 %v1269, %v1265
  %v1290 = vpack.c.b16 %v1270, %v1266
  %v1291 = vpack.c.b16 %v1271, %v1267
  %v1292 = vpack.c.b16 %v1272, %v1268
  %v1293 = vpack.c.b16 %v1273, %v1273
  %v1294 = vpack.c.b16 %v1274, %v1274
  %v1295 = vpack.c.b16 %v1275, %v1275
  %v1296 = vpack.c.b16 %v1276, %v1276
  %v1314 = vsel %vm222, %v1222, 0
  %v1317 = vsel %vm226, %v1293, 0
  %v1320 = vsel %vm226, %v1294, 0
  %v1323 = vsel %vm226, %v1295, 0
  %v1326 = vsel %vm226, %v1296, 0
  %1328 = vmatprep.subr.bf16.mxu0 %v1278
  %1329 = vmatpush1.bf16.msra.mxu0 %v1277
  %1330 = vmatprep.subr.bf16.mxu0 %v1282
  %1331 = vmatpush1.bf16.msra.mxu0 %v1281
  %1332 = vmatprep.subr.bf16.mxu0 %v1286
  %1333 = vmatpush1.bf16.msra.mxu0 %v1285
  %1334 = vmatprep.subr.bf16.mxu0 %v1290
  %1335 = vmatpush1.bf16.msra.mxu0 %v1289
  %1336 = vmatprep.subr.bf16.mxu0 %v1320
  %1337 = vmatpush1.bf16.msra.mxu0 %v1317
  %1338 = vmatprep.subr.bf16.mxu0 0
  %1339 = vmatpush1.bf16.msra.mxu0 0
  %1340 = vmatprep.subr.bf16.mxu0 0
  %1341 = vmatpush1.bf16.msra.mxu0 0
  %1342 = vmatprep.subr.bf16.mxu0 0
  %1343 = vmatpush1.bf16.msra.mxu0 0
  %1344 = vmatprep.subr.bf16.mxu0 0
  %1345 = vmatpush1.bf16.msra.mxu0 0
  %1346 = vmatprep.subr.bf16.mxu0 0
  %1347 = vmatpush1.bf16.msra.mxu0 0
  %1348 = vmatprep.subr.bf16.mxu0 0
  %1349 = vmatpush1.bf16.msra.mxu0 0
  %1350 = vmatprep.subr.bf16.mxu0 0
  %1351 = vmatpush1.bf16.msra.mxu0 0
  %1352 = vmatprep.subr.bf16.mxu0 0
  %1353 = vmatpush1.bf16.msra.mxu0 0
  %1354 = vmatprep.subr.bf16.mxu0 0
  %1355 = vmatpush1.bf16.msra.mxu0 0
  %1356 = vmatprep.subr.bf16.mxu0 0
  %1357 = vmatpush1.bf16.msra.mxu0 0
  %1358 = vmatprep.subr.bf16.mxu0 0
  %1359 = vmatpush1.bf16.msra.mxu0 0
  %1360 = vmatprep.mubr.bf16.mxu0 0
  %1361 = vmatmul.mubr.bf16.gmra.mrb[0].mxu0 %v1314
  %v1362 = vpop.f32.mrb[0].mxu0
  %v1363 = vadd.f32 0.0, %v1362
  %v1364 = vpop.f32.mrb[0].mxu0
  %v1365 = vadd.f32 0.0, %v1364
  %v1366 = vpop.f32.mrb[0].mxu0
  %v1367 = vadd.f32 0.0, %v1366
  %v1368 = vpop.f32.mrb[0].mxu0
  %v1369 = vadd.f32 0.0, %v1368
  %1370 = vdwg.mxu0
  %1371 = vmatprep.subr.bf16.mxu0 %v1280
  %1372 = vmatpush1.bf16.msra.mxu0 %v1279
  %1373 = vmatprep.subr.bf16.mxu0 %v1284
  %1374 = vmatpush1.bf16.msra.mxu0 %v1283
  %1375 = vmatprep.subr.bf16.mxu0 %v1288
  %1376 = vmatpush1.bf16.msra.mxu0 %v1287
  %1377 = vmatprep.subr.bf16.mxu0 %v1292
  %1378 = vmatpush1.bf16.msra.mxu0 %v1291
  %1379 = vmatprep.subr.bf16.mxu0 %v1326
  %1380 = vmatpush1.bf16.msra.mxu0 %v1323
  %1381 = vmatprep.subr.bf16.mxu0 0
  %1382 = vmatpush1.bf16.msra.mxu0 0
  %1383 = vmatprep.subr.bf16.mxu0 0
  %1384 = vmatpush1.bf16.msra.mxu0 0
  %1385 = vmatprep.subr.bf16.mxu0 0
  %1386 = vmatpush1.bf16.msra.mxu0 0
  %1387 = vmatprep.subr.bf16.mxu0 0
  %1388 = vmatpush1.bf16.msra.mxu0 0
  %1389 = vmatprep.subr.bf16.mxu0 0
  %1390 = vmatpush1.bf16.msra.mxu0 0
  %1391 = vmatprep.subr.bf16.mxu0 0
  %1392 = vmatpush1.bf16.msra.mxu0 0
  %1393 = vmatprep.subr.bf16.mxu0 0
  %1394 = vmatpush1.bf16.msra.mxu0 0
  %1395 = vmatprep.subr.bf16.mxu0 0
  %1396 = vmatpush1.bf16.msra.mxu0 0
  %1397 = vmatprep.subr.bf16.mxu0 0
  %1398 = vmatpush1.bf16.msra.mxu0 0
  %1399 = vmatprep.subr.bf16.mxu0 0
  %1400 = vmatpush1.bf16.msra.mxu0 0
  %1401 = vmatprep.subr.bf16.mxu0 0
  %1402 = vmatpush1.bf16.msra.mxu0 0
  %1403 = vmatprep.mubr.bf16.mxu0 0
  %1404 = vmatmul.mubr.bf16.gmra.mrb[0].mxu0 %v1314
  %v1405 = vpop.f32.mrb[0].mxu0
  %v1406 = vadd.f32 0.0, %v1405
  %v1407 = vpop.f32.mrb[0].mxu0
  %v1408 = vadd.f32 0.0, %v1407
  %v1409 = vpop.f32.mrb[0].mxu0
  %v1410 = vadd.f32 0.0, %v1409
  %v1411 = vpop.f32.mrb[0].mxu0
  %v1412 = vadd.f32 0.0, %v1411
  %1413 = vdwg.mxu0
  %v1414 = vadd.f32 %v1151, %v1363
  %v1415 = vadd.f32 %v1153, %v1365
  %v1416 = vadd.f32 %v1194, %v1406
  %v1417 = vadd.f32 %v1196, %v1408
  %v1418 = vadd.f32 %v1155, %v1367
  %v1419 = vadd.f32 %v1157, %v1369
  %v1420 = vadd.f32 %v1198, %v1410
  %v1421 = vadd.f32 %v1200, %v1412
  %v1422 = vadd.f32 %v1414, %v32
  %v1423 = vadd.f32 %v1415, %v36
  %v1424 = vadd.f32 %v1416, %v40
  %v1425 = vadd.f32 %v1417, %v44
  %v1426 = vadd.f32 %v1418, %v32
  %v1427 = vadd.f32 %v1419, %v36
  %v1428 = vadd.f32 %v1420, %v40
  %v1429 = vadd.f32 %v1421, %v44
  %v1430 = vmax.f32 %v1422, 0.0
  %v1431 = vmax.f32 %v1423, 0.0
  %v1432 = vmax.f32 %v1424, 0.0
  %v1433 = vmax.f32 %v1425, 0.0
  %v1434 = vmax.f32 %v1426, 0.0
  %v1435 = vmax.f32 %v1427, 0.0
  %v1436 = vmax.f32 %v1428, 0.0
  %v1437 = vmax.f32 %v1429, 0.0
  %v1438 = vpack.c.bf16 %v1434, %v1430
  %v1439 = vpack.c.bf16 %v1435, %v1431
  %v1440 = vpack.c.bf16 %v1436, %v1432
  %v1441 = vpack.c.bf16 %v1437, %v1433
  %1442 = vst [vmem:[#allocation2 + $0x20] sm:$0xff] %v1438
  %1443 = vst [vmem:[#allocation2 + $0x28] sm:$0xff] %v1439
  %1444 = vst [vmem:[#allocation2 + $0x30] sm:$0xff] %v1440
  %1445 = vst [vmem:[#allocation2 + $0x38] sm:$0xff] %v1441
  %v1446 = vld [vmem:[#allocation2] sm:$0xff]
  %v1447 = vld [vmem:[#allocation2 + $0x8] sm:$0xff]
  %v1448 = vld [vmem:[#allocation2 + $0x10] sm:$0xff]
  %v1449 = vld [vmem:[#allocation2 + $0x18] sm:$0xff]
  %v1450 = vld [vmem:[#allocation2 + $0x20] sm:$0xff]
  %v1451 = vld [vmem:[#allocation2 + $0x28] sm:$0xff]
  %v1452 = vld [vmem:[#allocation2 + $0x30] sm:$0xff]
  %v1453 = vld [vmem:[#allocation2 + $0x38] sm:$0xff]
  %v1454 = vld [vmem:[%s3] sm:$0xff]
  %v1455 = vld [vmem:[%s3 + $0x8] sm:$0xff]
  %v1456 = vld [vmem:[%s3 + $0x10] sm:$0xff]
  %v1457 = vld [vmem:[%s3 + $0x18] sm:$0xff]
  %v1458 = vld [vmem:[%s3 + $0x20] sm:$0xff]
  %v1459 = vld [vmem:[%s3 + $0x28] sm:$0xff]
  %v1460 = vld [vmem:[%s3 + $0x30] sm:$0xff]
  %v1461 = vld [vmem:[%s3 + $0x38] sm:$0xff]
  %v1462 = vld [vmem:[%s3 + $0x40] sm:$0xff]
  %v1463 = vld [vmem:[%s3 + $0x48] sm:$0xff]
  %v1464 = vld [vmem:[%s3 + $0x50] sm:$0xff]
  %v1465 = vld [vmem:[%s3 + $0x58] sm:$0xff]
  %v1466 = vld [vmem:[%s3 + $0x60] sm:$0xff]
  %v1467 = vld [vmem:[%s3 + $0x68] sm:$0xff]
  %v1468 = vld [vmem:[%s3 + $0x70] sm:$0xff]
  %v1469 = vld [vmem:[%s3 + $0x78] sm:$0xff]
  %v1470 = vld [vmem:[%s3 + $0x80] sm:$0xff]
  %v1471 = vld [vmem:[%s3 + $0x88] sm:$0xff]
  %v1472 = vld [vmem:[%s3 + $0x90] sm:$0xff]
  %v1473 = vld [vmem:[%s3 + $0x98] sm:$0xff]
  %v1474 = vld [vmem:[%s3 + $0xa0] sm:$0xff]
  %v1475 = vld [vmem:[%s3 + $0xa8] sm:$0xff]
  %v1476 = vld [vmem:[%s3 + $0xb0] sm:$0xff]
  %v1477 = vld [vmem:[%s3 + $0xb8] sm:$0xff]
  %v1478 = vld [vmem:[%s3 + $0xc0] sm:$0xff]
  %v1479 = vld [vmem:[%s3 + $0xc8] sm:$0xff]
  %v1480 = vld [vmem:[%s3 + $0xd0] sm:$0xff]
  %v1481 = vld [vmem:[%s3 + $0xd8] sm:$0xff]
  %v1482 = vld [vmem:[%s3 + $0xe0] sm:$0xff]
  %v1483 = vld [vmem:[%s3 + $0xe8] sm:$0xff]
  %v1484 = vld [vmem:[%s3 + $0xf0] sm:$0xff]
  %v1485 = vld [vmem:[%s3 + $0xf8] sm:$0xff]
  %v1486 = vld [vmem:[%s3 + $0x100] sm:$0xff]
  %v1487 = vld [vmem:[%s3 + $0x108] sm:$0xff]
  %v1488 = vld [vmem:[%s3 + $0x110] sm:$0xff]
  %v1489 = vld [vmem:[%s3 + $0x118] sm:$0xff]
  %v1490 = vld [vmem:[%s3 + $0x120] sm:$0xff]
  %v1491 = vld [vmem:[%s3 + $0x128] sm:$0xff]
  %v1492 = vld [vmem:[%s3 + $0x130] sm:$0xff]
  %v1493 = vld [vmem:[%s3 + $0x138] sm:$0xff]
  %v1494 = vld [vmem:[%s3 + $0x140] sm:$0xff]
  %v1495 = vld [vmem:[%s3 + $0x148] sm:$0xff]
  %v1496 = vld [vmem:[%s3 + $0x150] sm:$0xff]
  %v1497 = vld [vmem:[%s3 + $0x158] sm:$0xff]
  %v1498 = vld [vmem:[%s3 + $0x160] sm:$0xff]
  %v1499 = vld [vmem:[%s3 + $0x168] sm:$0xff]
  %v1500 = vld [vmem:[%s3 + $0x170] sm:$0xff]
  %v1501 = vld [vmem:[%s3 + $0x178] sm:$0xff]
  %v1502 = vld [vmem:[%s3 + $0x180] sm:$0xff]
  %v1503 = vld [vmem:[%s3 + $0x188] sm:$0xff]
  %v1504 = vld [vmem:[%s3 + $0x190] sm:$0xff]
  %v1505 = vld [vmem:[%s3 + $0x198] sm:$0xff]
  %v1506 = vld [vmem:[%s3 + $0x1a0] sm:$0xff]
  %v1507 = vld [vmem:[%s3 + $0x1a8] sm:$0xff]
  %v1508 = vld [vmem:[%s3 + $0x1b0] sm:$0xff]
  %v1509 = vld [vmem:[%s3 + $0x1b8] sm:$0xff]
  %v1510 = vld [vmem:[%s3 + $0x1c0] sm:$0xff]
  %v1511 = vld [vmem:[%s3 + $0x1c8] sm:$0xff]
  %v1512 = vld [vmem:[%s3 + $0x1d0] sm:$0xff]
  %v1513 = vld [vmem:[%s3 + $0x1d8] sm:$0xff]
  %v1514 = vld [vmem:[%s3 + $0x1e0] sm:$0xff]
  %v1515 = vld [vmem:[%s3 + $0x1e8] sm:$0xff]
  %v1516 = vld [vmem:[%s3 + $0x1f0] sm:$0xff]
  %v1517 = vld [vmem:[%s3 + $0x1f8] sm:$0xff]
  %v1518 = vld [vmem:[%s3 + $0x200] sm:$0xff]
  %v1519 = vld [vmem:[%s3 + $0x208] sm:$0xff]
  %v1520 = vld [vmem:[%s3 + $0x210] sm:$0xff]
  %v1521 = vld [vmem:[%s3 + $0x218] sm:$0xff]
  %v1522 = vld [vmem:[%s3 + $0x220] sm:$0xff]
  %v1523 = vld [vmem:[%s3 + $0x228] sm:$0xff]
  %v1524 = vld [vmem:[%s3 + $0x230] sm:$0xff]
  %v1525 = vld [vmem:[%s3 + $0x238] sm:$0xff]
  %v1526 = vld [vmem:[%s3 + $0x240] sm:$0xff]
  %v1527 = vld [vmem:[%s3 + $0x248] sm:$0xff]
  %v1528 = vld [vmem:[%s3 + $0x250] sm:$0xff]
  %v1529 = vld [vmem:[%s3 + $0x258] sm:$0xff]
  %v1530 = vld [vmem:[%s3 + $0x260] sm:$0xff]
  %v1531 = vld [vmem:[%s3 + $0x268] sm:$0xff]
  %v1532 = vld [vmem:[%s3 + $0x270] sm:$0xff]
  %v1533 = vld [vmem:[%s3 + $0x278] sm:$0xff]
  %v1534 = vld [vmem:[%s3 + $0x280] sm:$0xff]
  %v1535 = vld [vmem:[%s3 + $0x288] sm:$0xff]
  %v1536 = vld [vmem:[%s3 + $0x290] sm:$0xff]
  %v1537 = vld [vmem:[%s3 + $0x298] sm:$0xff]
  %v1538 = vld [vmem:[%s3 + $0x2a0] sm:$0xff]
  %v1539 = vld [vmem:[%s3 + $0x2a8] sm:$0xff]
  %v1540 = vld [vmem:[%s3 + $0x2b0] sm:$0xff]
  %v1541 = vld [vmem:[%s3 + $0x2b8] sm:$0xff]
  %v1542 = vld [vmem:[%s3 + $0x2c0] sm:$0xff]
  %v1543 = vld [vmem:[%s3 + $0x2c8] sm:$0xff]
  %v1544 = vld [vmem:[%s3 + $0x2d0] sm:$0xff]
  %v1545 = vld [vmem:[%s3 + $0x2d8] sm:$0xff]
  %v1546 = vld [vmem:[%s3 + $0x2e0] sm:$0xff]
  %v1547 = vld [vmem:[%s3 + $0x2e8] sm:$0xff]
  %v1548 = vld [vmem:[%s3 + $0x2f0] sm:$0xff]
  %v1549 = vld [vmem:[%s3 + $0x2f8] sm:$0xff]
  %v1550 = vld [vmem:[%s3 + $0x300] sm:$0xff]
  %v1551 = vld [vmem:[%s3 + $0x308] sm:$0xff]
  %v1552 = vld [vmem:[%s3 + $0x310] sm:$0xff]
  %v1553 = vld [vmem:[%s3 + $0x318] sm:$0xff]
  %v1554 = vld [vmem:[%s3 + $0x320] sm:$0xff]
  %v1555 = vld [vmem:[%s3 + $0x328] sm:$0xff]
  %v1556 = vld [vmem:[%s3 + $0x330] sm:$0xff]
  %v1557 = vld [vmem:[%s3 + $0x338] sm:$0xff]
  %v1558 = vld [vmem:[%s3 + $0x340] sm:$0xff]
  %v1559 = vld [vmem:[%s3 + $0x348] sm:$0xff]
  %v1560 = vld [vmem:[%s3 + $0x350] sm:$0xff]
  %v1561 = vld [vmem:[%s3 + $0x358] sm:$0xff]
  %v1562 = vld [vmem:[%s3 + $0x360] sm:$0xff]
  %v1563 = vld [vmem:[%s3 + $0x368] sm:$0xff]
  %v1564 = vld [vmem:[%s3 + $0x370] sm:$0xff]
  %v1565 = vld [vmem:[%s3 + $0x378] sm:$0xff]
  %v1566 = vld [vmem:[%s3 + $0x380] sm:$0xff]
  %v1567 = vld [vmem:[%s3 + $0x388] sm:$0xff]
  %v1568 = vld [vmem:[%s3 + $0x390] sm:$0xff]
  %v1569 = vld [vmem:[%s3 + $0x398] sm:$0xff]
  %v1570 = vld [vmem:[%s3 + $0x3a0] sm:$0xff]
  %v1571 = vld [vmem:[%s3 + $0x3a8] sm:$0xff]
  %v1572 = vld [vmem:[%s3 + $0x3b0] sm:$0xff]
  %v1573 = vld [vmem:[%s3 + $0x3b8] sm:$0xff]
  %v1574 = vld [vmem:[%s3 + $0x3c0] sm:$0xff]
  %v1575 = vld [vmem:[%s3 + $0x3c8] sm:$0xff]
  %v1576 = vld [vmem:[%s3 + $0x3d0] sm:$0xff]
  %v1577 = vld [vmem:[%s3 + $0x3d8] sm:$0xff]
  %v1578 = vld [vmem:[%s3 + $0x3e0] sm:$0xff]
  %v1579 = vld [vmem:[%s3 + $0x3e8] sm:$0xff]
  %v1580 = vld [vmem:[%s3 + $0x3f0] sm:$0xff]
  %v1581 = vld [vmem:[%s3 + $0x3f8] sm:$0xff]
  %v1710 = vunpack.c.l.b16 %v1454
  %v1711 = vunpack.c.h.b16 %v1454
  %v1712 = vunpack.c.l.b16 %v1455
  %v1713 = vunpack.c.h.b16 %v1455
  %v1714 = vunpack.c.l.b16 %v1456
  %v1715 = vunpack.c.h.b16 %v1456
  %v1716 = vunpack.c.l.b16 %v1457
  %v1717 = vunpack.c.h.b16 %v1457
  %v1718 = vunpack.c.l.b16 %v1458
  %v1719 = vunpack.c.h.b16 %v1458
  %v1720 = vunpack.c.l.b16 %v1459
  %v1721 = vunpack.c.h.b16 %v1459
  %v1722 = vunpack.c.l.b16 %v1460
  %v1723 = vunpack.c.h.b16 %v1460
  %v1724 = vunpack.c.l.b16 %v1461
  %v1725 = vunpack.c.h.b16 %v1461
  %v1726 = vunpack.c.l.b16 %v1462
  %v1727 = vunpack.c.h.b16 %v1462
  %v1728 = vunpack.c.l.b16 %v1463
  %v1729 = vunpack.c.h.b16 %v1463
  %v1730 = vunpack.c.l.b16 %v1464
  %v1731 = vunpack.c.h.b16 %v1464
  %v1732 = vunpack.c.l.b16 %v1465
  %v1733 = vunpack.c.h.b16 %v1465
  %v1734 = vunpack.c.l.b16 %v1466
  %v1735 = vunpack.c.h.b16 %v1466
  %v1736 = vunpack.c.l.b16 %v1467
  %v1737 = vunpack.c.h.b16 %v1467
  %v1738 = vunpack.c.l.b16 %v1468
  %v1739 = vunpack.c.h.b16 %v1468
  %v1740 = vunpack.c.l.b16 %v1469
  %v1741 = vunpack.c.h.b16 %v1469
  %v1742 = vunpack.c.l.b16 %v1470
  %v1743 = vunpack.c.h.b16 %v1470
  %v1744 = vunpack.c.l.b16 %v1471
  %v1745 = vunpack.c.h.b16 %v1471
  %v1746 = vunpack.c.l.b16 %v1472
  %v1747 = vunpack.c.h.b16 %v1472
  %v1748 = vunpack.c.l.b16 %v1473
  %v1749 = vunpack.c.h.b16 %v1473
  %v1750 = vunpack.c.l.b16 %v1474
  %v1751 = vunpack.c.h.b16 %v1474
  %v1752 = vunpack.c.l.b16 %v1475
  %v1753 = vunpack.c.h.b16 %v1475
  %v1754 = vunpack.c.l.b16 %v1476
  %v1755 = vunpack.c.h.b16 %v1476
  %v1756 = vunpack.c.l.b16 %v1477
  %v1757 = vunpack.c.h.b16 %v1477
  %v1758 = vunpack.c.l.b16 %v1478
  %v1759 = vunpack.c.h.b16 %v1478
  %v1760 = vunpack.c.l.b16 %v1479
  %v1761 = vunpack.c.h.b16 %v1479
  %v1762 = vunpack.c.l.b16 %v1480
  %v1763 = vunpack.c.h.b16 %v1480
  %v1764 = vunpack.c.l.b16 %v1481
  %v1765 = vunpack.c.h.b16 %v1481
  %v1766 = vunpack.c.l.b16 %v1482
  %v1767 = vunpack.c.h.b16 %v1482
  %v1768 = vunpack.c.l.b16 %v1483
  %v1769 = vunpack.c.h.b16 %v1483
  %v1770 = vunpack.c.l.b16 %v1484
  %v1771 = vunpack.c.h.b16 %v1484
  %v1772 = vunpack.c.l.b16 %v1485
  %v1773 = vunpack.c.h.b16 %v1485
  %v1774 = vunpack.c.l.b16 %v1486
  %v1775 = vunpack.c.h.b16 %v1486
  %v1776 = vunpack.c.l.b16 %v1487
  %v1777 = vunpack.c.h.b16 %v1487
  %v1778 = vunpack.c.l.b16 %v1488
  %v1779 = vunpack.c.h.b16 %v1488
  %v1780 = vunpack.c.l.b16 %v1489
  %v1781 = vunpack.c.h.b16 %v1489
  %v1782 = vunpack.c.l.b16 %v1490
  %v1783 = vunpack.c.h.b16 %v1490
  %v1784 = vunpack.c.l.b16 %v1491
  %v1785 = vunpack.c.h.b16 %v1491
  %v1786 = vunpack.c.l.b16 %v1492
  %v1787 = vunpack.c.h.b16 %v1492
  %v1788 = vunpack.c.l.b16 %v1493
  %v1789 = vunpack.c.h.b16 %v1493
  %v1790 = vunpack.c.l.b16 %v1494
  %v1791 = vunpack.c.h.b16 %v1494
  %v1792 = vunpack.c.l.b16 %v1495
  %v1793 = vunpack.c.h.b16 %v1495
  %v1794 = vunpack.c.l.b16 %v1496
  %v1795 = vunpack.c.h.b16 %v1496
  %v1796 = vunpack.c.l.b16 %v1497
  %v1797 = vunpack.c.h.b16 %v1497
  %v1798 = vunpack.c.l.b16 %v1498
  %v1799 = vunpack.c.h.b16 %v1498
  %v1800 = vunpack.c.l.b16 %v1499
  %v1801 = vunpack.c.h.b16 %v1499
  %v1802 = vunpack.c.l.b16 %v1500
  %v1803 = vunpack.c.h.b16 %v1500
  %v1804 = vunpack.c.l.b16 %v1501
  %v1805 = vunpack.c.h.b16 %v1501
  %v1806 = vunpack.c.l.b16 %v1502
  %v1807 = vunpack.c.h.b16 %v1502
  %v1808 = vunpack.c.l.b16 %v1503
  %v1809 = vunpack.c.h.b16 %v1503
  %v1810 = vunpack.c.l.b16 %v1504
  %v1811 = vunpack.c.h.b16 %v1504
  %v1812 = vunpack.c.l.b16 %v1505
  %v1813 = vunpack.c.h.b16 %v1505
  %v1814 = vunpack.c.l.b16 %v1506
  %v1815 = vunpack.c.h.b16 %v1506
  %v1816 = vunpack.c.l.b16 %v1507
  %v1817 = vunpack.c.h.b16 %v1507
  %v1818 = vunpack.c.l.b16 %v1508
  %v1819 = vunpack.c.h.b16 %v1508
  %v1820 = vunpack.c.l.b16 %v1509
  %v1821 = vunpack.c.h.b16 %v1509
  %v1822 = vunpack.c.l.b16 %v1510
  %v1823 = vunpack.c.h.b16 %v1510
  %v1824 = vunpack.c.l.b16 %v1511
  %v1825 = vunpack.c.h.b16 %v1511
  %v1826 = vunpack.c.l.b16 %v1512
  %v1827 = vunpack.c.h.b16 %v1512
  %v1828 = vunpack.c.l.b16 %v1513
  %v1829 = vunpack.c.h.b16 %v1513
  %v1830 = vunpack.c.l.b16 %v1514
  %v1831 = vunpack.c.h.b16 %v1514
  %v1832 = vunpack.c.l.b16 %v1515
  %v1833 = vunpack.c.h.b16 %v1515
  %v1834 = vunpack.c.l.b16 %v1516
  %v1835 = vunpack.c.h.b16 %v1516
  %v1836 = vunpack.c.l.b16 %v1517
  %v1837 = vunpack.c.h.b16 %v1517
  %v1838 = vunpack.c.l.b16 %v1518
  %v1839 = vunpack.c.h.b16 %v1518
  %v1840 = vunpack.c.l.b16 %v1519
  %v1841 = vunpack.c.h.b16 %v1519
  %v1842 = vunpack.c.l.b16 %v1520
  %v1843 = vunpack.c.h.b16 %v1520
  %v1844 = vunpack.c.l.b16 %v1521
  %v1845 = vunpack.c.h.b16 %v1521
  %v1846 = vunpack.c.l.b16 %v1522
  %v1847 = vunpack.c.h.b16 %v1522
  %v1848 = vunpack.c.l.b16 %v1523
  %v1849 = vunpack.c.h.b16 %v1523
  %v1850 = vunpack.c.l.b16 %v1524
  %v1851 = vunpack.c.h.b16 %v1524
  %v1852 = vunpack.c.l.b16 %v1525
  %v1853 = vunpack.c.h.b16 %v1525
  %v1854 = vunpack.c.l.b16 %v1526
  %v1855 = vunpack.c.h.b16 %v1526
  %v1856 = vunpack.c.l.b16 %v1527
  %v1857 = vunpack.c.h.b16 %v1527
  %v1858 = vunpack.c.l.b16 %v1528
  %v1859 = vunpack.c.h.b16 %v1528
  %v1860 = vunpack.c.l.b16 %v1529
  %v1861 = vunpack.c.h.b16 %v1529
  %v1862 = vunpack.c.l.b16 %v1530
  %v1863 = vunpack.c.h.b16 %v1530
  %v1864 = vunpack.c.l.b16 %v1531
  %v1865 = vunpack.c.h.b16 %v1531
  %v1866 = vunpack.c.l.b16 %v1532
  %v1867 = vunpack.c.h.b16 %v1532
  %v1868 = vunpack.c.l.b16 %v1533
  %v1869 = vunpack.c.h.b16 %v1533
  %v1870 = vunpack.c.l.b16 %v1534
  %v1871 = vunpack.c.h.b16 %v1534
  %v1872 = vunpack.c.l.b16 %v1535
  %v1873 = vunpack.c.h.b16 %v1535
  %v1874 = vunpack.c.l.b16 %v1536
  %v1875 = vunpack.c.h.b16 %v1536
  %v1876 = vunpack.c.l.b16 %v1537
  %v1877 = vunpack.c.h.b16 %v1537
  %v1878 = vunpack.c.l.b16 %v1538
  %v1879 = vunpack.c.h.b16 %v1538
  %v1880 = vunpack.c.l.b16 %v1539
  %v1881 = vunpack.c.h.b16 %v1539
  %v1882 = vunpack.c.l.b16 %v1540
  %v1883 = vunpack.c.h.b16 %v1540
  %v1884 = vunpack.c.l.b16 %v1541
  %v1885 = vunpack.c.h.b16 %v1541
  %v1886 = vunpack.c.l.b16 %v1542
  %v1887 = vunpack.c.h.b16 %v1542
  %v1888 = vunpack.c.l.b16 %v1543
  %v1889 = vunpack.c.h.b16 %v1543
  %v1890 = vunpack.c.l.b16 %v1544
  %v1891 = vunpack.c.h.b16 %v1544
  %v1892 = vunpack.c.l.b16 %v1545
  %v1893 = vunpack.c.h.b16 %v1545
  %v1894 = vunpack.c.l.b16 %v1546
  %v1895 = vunpack.c.h.b16 %v1546
  %v1896 = vunpack.c.l.b16 %v1547
  %v1897 = vunpack.c.h.b16 %v1547
  %v1898 = vunpack.c.l.b16 %v1548
  %v1899 = vunpack.c.h.b16 %v1548
  %v1900 = vunpack.c.l.b16 %v1549
  %v1901 = vunpack.c.h.b16 %v1549
  %v1902 = vunpack.c.l.b16 %v1550
  %v1903 = vunpack.c.h.b16 %v1550
  %v1904 = vunpack.c.l.b16 %v1551
  %v1905 = vunpack.c.h.b16 %v1551
  %v1906 = vunpack.c.l.b16 %v1552
  %v1907 = vunpack.c.h.b16 %v1552
  %v1908 = vunpack.c.l.b16 %v1553
  %v1909 = vunpack.c.h.b16 %v1553
  %v1910 = vunpack.c.l.b16 %v1554
  %v1911 = vunpack.c.h.b16 %v1554
  %v1912 = vunpack.c.l.b16 %v1555
  %v1913 = vunpack.c.h.b16 %v1555
  %v1914 = vunpack.c.l.b16 %v1556
  %v1915 = vunpack.c.h.b16 %v1556
  %v1916 = vunpack.c.l.b16 %v1557
  %v1917 = vunpack.c.h.b16 %v1557
  %v1918 = vunpack.c.l.b16 %v1558
  %v1919 = vunpack.c.h.b16 %v1558
  %v1920 = vunpack.c.l.b16 %v1559
  %v1921 = vunpack.c.h.b16 %v1559
  %v1922 = vunpack.c.l.b16 %v1560
  %v1923 = vunpack.c.h.b16 %v1560
  %v1924 = vunpack.c.l.b16 %v1561
  %v1925 = vunpack.c.h.b16 %v1561
  %v1926 = vunpack.c.l.b16 %v1562
  %v1927 = vunpack.c.h.b16 %v1562
  %v1928 = vunpack.c.l.b16 %v1563
  %v1929 = vunpack.c.h.b16 %v1563
  %v1930 = vunpack.c.l.b16 %v1564
  %v1931 = vunpack.c.h.b16 %v1564
  %v1932 = vunpack.c.l.b16 %v1565
  %v1933 = vunpack.c.h.b16 %v1565
  %v1934 = vunpack.c.l.b16 %v1566
  %v1935 = vunpack.c.h.b16 %v1566
  %v1936 = vunpack.c.l.b16 %v1567
  %v1937 = vunpack.c.h.b16 %v1567
  %v1938 = vunpack.c.l.b16 %v1568
  %v1939 = vunpack.c.h.b16 %v1568
  %v1940 = vunpack.c.l.b16 %v1569
  %v1941 = vunpack.c.h.b16 %v1569
  %v1942 = vunpack.c.l.b16 %v1570
  %v1943 = vunpack.c.h.b16 %v1570
  %v1944 = vunpack.c.l.b16 %v1571
  %v1945 = vunpack.c.h.b16 %v1571
  %v1946 = vunpack.c.l.b16 %v1572
  %v1947 = vunpack.c.h.b16 %v1572
  %v1948 = vunpack.c.l.b16 %v1573
  %v1949 = vunpack.c.h.b16 %v1573
  %v1950 = vunpack.c.l.b16 %v1574
  %v1951 = vunpack.c.h.b16 %v1574
  %v1952 = vunpack.c.l.b16 %v1575
  %v1953 = vunpack.c.h.b16 %v1575
  %v1954 = vunpack.c.l.b16 %v1576
  %v1955 = vunpack.c.h.b16 %v1576
  %v1956 = vunpack.c.l.b16 %v1577
  %v1957 = vunpack.c.h.b16 %v1577
  %v1958 = vunpack.c.l.b16 %v1578
  %v1959 = vunpack.c.h.b16 %v1578
  %v1960 = vunpack.c.l.b16 %v1579
  %v1961 = vunpack.c.h.b16 %v1579
  %v1962 = vunpack.c.l.b16 %v1580
  %v1963 = vunpack.c.h.b16 %v1580
  %v1964 = vunpack.c.l.b16 %v1581
  %v1965 = vunpack.c.h.b16 %v1581
  %v1966 = vpack.c.b16 %v1714, %v1710
  %v1967 = vpack.c.b16 %v1715, %v1711
  %v1968 = vpack.c.b16 %v1716, %v1712
  %v1969 = vpack.c.b16 %v1717, %v1713
  %v1970 = vpack.c.b16 %v1722, %v1718
  %v1971 = vpack.c.b16 %v1723, %v1719
  %v1972 = vpack.c.b16 %v1724, %v1720
  %v1973 = vpack.c.b16 %v1725, %v1721
  %v1974 = vpack.c.b16 %v1730, %v1726
  %v1975 = vpack.c.b16 %v1731, %v1727
  %v1976 = vpack.c.b16 %v1732, %v1728
  %v1977 = vpack.c.b16 %v1733, %v1729
  %v1978 = vpack.c.b16 %v1738, %v1734
  %v1979 = vpack.c.b16 %v1739, %v1735
  %v1980 = vpack.c.b16 %v1740, %v1736
  %v1981 = vpack.c.b16 %v1741, %v1737
  %v1982 = vpack.c.b16 %v1746, %v1742
  %v1983 = vpack.c.b16 %v1747, %v1743
  %v1984 = vpack.c.b16 %v1748, %v1744
  %v1985 = vpack.c.b16 %v1749, %v1745
  %v1986 = vpack.c.b16 %v1754, %v1750
  %v1987 = vpack.c.b16 %v1755, %v1751
  %v1988 = vpack.c.b16 %v1756, %v1752
  %v1989 = vpack.c.b16 %v1757, %v1753
  %v1990 = vpack.c.b16 %v1762, %v1758
  %v1991 = vpack.c.b16 %v1763, %v1759
  %v1992 = vpack.c.b16 %v1764, %v1760
  %v1993 = vpack.c.b16 %v1765, %v1761
  %v1994 = vpack.c.b16 %v1770, %v1766
  %v1995 = vpack.c.b16 %v1771, %v1767
  %v1996 = vpack.c.b16 %v1772, %v1768
  %v1997 = vpack.c.b16 %v1773, %v1769
  %v1998 = vpack.c.b16 %v1778, %v1774
  %v1999 = vpack.c.b16 %v1779, %v1775
  %v2000 = vpack.c.b16 %v1780, %v1776
  %v2001 = vpack.c.b16 %v1781, %v1777
  %v2002 = vpack.c.b16 %v1786, %v1782
  %v2003 = vpack.c.b16 %v1787, %v1783
  %v2004 = vpack.c.b16 %v1788, %v1784
  %v2005 = vpack.c.b16 %v1789, %v1785
  %v2006 = vpack.c.b16 %v1794, %v1790
  %v2007 = vpack.c.b16 %v1795, %v1791
  %v2008 = vpack.c.b16 %v1796, %v1792
  %v2009 = vpack.c.b16 %v1797, %v1793
  %v2010 = vpack.c.b16 %v1802, %v1798
  %v2011 = vpack.c.b16 %v1803, %v1799
  %v2012 = vpack.c.b16 %v1804, %v1800
  %v2013 = vpack.c.b16 %v1805, %v1801
  %v2014 = vpack.c.b16 %v1810, %v1806
  %v2015 = vpack.c.b16 %v1811, %v1807
  %v2016 = vpack.c.b16 %v1812, %v1808
  %v2017 = vpack.c.b16 %v1813, %v1809
  %v2018 = vpack.c.b16 %v1818, %v1814
  %v2019 = vpack.c.b16 %v1819, %v1815
  %v2020 = vpack.c.b16 %v1820, %v1816
  %v2021 = vpack.c.b16 %v1821, %v1817
  %v2022 = vpack.c.b16 %v1826, %v1822
  %v2023 = vpack.c.b16 %v1827, %v1823
  %v2024 = vpack.c.b16 %v1828, %v1824
  %v2025 = vpack.c.b16 %v1829, %v1825
  %v2026 = vpack.c.b16 %v1834, %v1830
  %v2027 = vpack.c.b16 %v1835, %v1831
  %v2028 = vpack.c.b16 %v1836, %v1832
  %v2029 = vpack.c.b16 %v1837, %v1833
  %v2030 = vpack.c.b16 %v1842, %v1838
  %v2031 = vpack.c.b16 %v1843, %v1839
  %v2032 = vpack.c.b16 %v1844, %v1840
  %v2033 = vpack.c.b16 %v1845, %v1841
  %v2034 = vpack.c.b16 %v1850, %v1846
  %v2035 = vpack.c.b16 %v1851, %v1847
  %v2036 = vpack.c.b16 %v1852, %v1848
  %v2037 = vpack.c.b16 %v1853, %v1849
  %v2038 = vpack.c.b16 %v1858, %v1854
  %v2039 = vpack.c.b16 %v1859, %v1855
  %v2040 = vpack.c.b16 %v1860, %v1856
  %v2041 = vpack.c.b16 %v1861, %v1857
  %v2042 = vpack.c.b16 %v1866, %v1862
  %v2043 = vpack.c.b16 %v1867, %v1863
  %v2044 = vpack.c.b16 %v1868, %v1864
  %v2045 = vpack.c.b16 %v1869, %v1865
  %v2046 = vpack.c.b16 %v1874, %v1870
  %v2047 = vpack.c.b16 %v1875, %v1871
  %v2048 = vpack.c.b16 %v1876, %v1872
  %v2049 = vpack.c.b16 %v1877, %v1873
  %v2050 = vpack.c.b16 %v1882, %v1878
  %v2051 = vpack.c.b16 %v1883, %v1879
  %v2052 = vpack.c.b16 %v1884, %v1880
  %v2053 = vpack.c.b16 %v1885, %v1881
  %v2054 = vpack.c.b16 %v1890, %v1886
  %v2055 = vpack.c.b16 %v1891, %v1887
  %v2056 = vpack.c.b16 %v1892, %v1888
  %v2057 = vpack.c.b16 %v1893, %v1889
  %v2058 = vpack.c.b16 %v1898, %v1894
  %v2059 = vpack.c.b16 %v1899, %v1895
  %v2060 = vpack.c.b16 %v1900, %v1896
  %v2061 = vpack.c.b16 %v1901, %v1897
  %v2062 = vpack.c.b16 %v1906, %v1902
  %v2063 = vpack.c.b16 %v1907, %v1903
  %v2064 = vpack.c.b16 %v1908, %v1904
  %v2065 = vpack.c.b16 %v1909, %v1905
  %v2066 = vpack.c.b16 %v1914, %v1910
  %v2067 = vpack.c.b16 %v1915, %v1911
  %v2068 = vpack.c.b16 %v1916, %v1912
  %v2069 = vpack.c.b16 %v1917, %v1913
  %v2070 = vpack.c.b16 %v1922, %v1918
  %v2071 = vpack.c.b16 %v1923, %v1919
  %v2072 = vpack.c.b16 %v1924, %v1920
  %v2073 = vpack.c.b16 %v1925, %v1921
  %v2074 = vpack.c.b16 %v1930, %v1926
  %v2075 = vpack.c.b16 %v1931, %v1927
  %v2076 = vpack.c.b16 %v1932, %v1928
  %v2077 = vpack.c.b16 %v1933, %v1929
  %v2078 = vpack.c.b16 %v1938, %v1934
  %v2079 = vpack.c.b16 %v1939, %v1935
  %v2080 = vpack.c.b16 %v1940, %v1936
  %v2081 = vpack.c.b16 %v1941, %v1937
  %v2082 = vpack.c.b16 %v1946, %v1942
  %v2083 = vpack.c.b16 %v1947, %v1943
  %v2084 = vpack.c.b16 %v1948, %v1944
  %v2085 = vpack.c.b16 %v1949, %v1945
  %v2086 = vpack.c.b16 %v1954, %v1950
  %v2087 = vpack.c.b16 %v1955, %v1951
  %v2088 = vpack.c.b16 %v1956, %v1952
  %v2089 = vpack.c.b16 %v1957, %v1953
  %v2090 = vpack.c.b16 %v1962, %v1958
  %v2091 = vpack.c.b16 %v1963, %v1959
  %v2092 = vpack.c.b16 %v1964, %v1960
  %v2093 = vpack.c.b16 %v1965, %v1961
  %2222 = vmatprep.subr.bf16.mxu0 %v1967
  %2223 = vmatpush1.bf16.msra.mxu0 %v1966
  %2224 = vmatprep.subr.bf16.mxu0 %v1971
  %2225 = vmatpush1.bf16.msra.mxu0 %v1970
  %2226 = vmatprep.subr.bf16.mxu0 %v1975
  %2227 = vmatpush1.bf16.msra.mxu0 %v1974
  %2228 = vmatprep.subr.bf16.mxu0 %v1979
  %2229 = vmatpush1.bf16.msra.mxu0 %v1978
  %2230 = vmatprep.subr.bf16.mxu0 %v1983
  %2231 = vmatpush1.bf16.msra.mxu0 %v1982
  %2232 = vmatprep.subr.bf16.mxu0 %v1987
  %2233 = vmatpush1.bf16.msra.mxu0 %v1986
  %2234 = vmatprep.subr.bf16.mxu0 %v1991
  %2235 = vmatpush1.bf16.msra.mxu0 %v1990
  %2236 = vmatprep.subr.bf16.mxu0 %v1995
  %2237 = vmatpush1.bf16.msra.mxu0 %v1994
  %2238 = vmatprep.subr.bf16.mxu0 %v1999
  %2239 = vmatpush1.bf16.msra.mxu0 %v1998
  %2240 = vmatprep.subr.bf16.mxu0 %v2003
  %2241 = vmatpush1.bf16.msra.mxu0 %v2002
  %2242 = vmatprep.subr.bf16.mxu0 %v2007
  %2243 = vmatpush1.bf16.msra.mxu0 %v2006
  %2244 = vmatprep.subr.bf16.mxu0 %v2011
  %2245 = vmatpush1.bf16.msra.mxu0 %v2010
  %2246 = vmatprep.subr.bf16.mxu0 %v2015
  %2247 = vmatpush1.bf16.msra.mxu0 %v2014
  %2248 = vmatprep.subr.bf16.mxu0 %v2019
  %2249 = vmatpush1.bf16.msra.mxu0 %v2018
  %2250 = vmatprep.subr.bf16.mxu0 %v2023
  %2251 = vmatpush1.bf16.msra.mxu0 %v2022
  %2252 = vmatprep.subr.bf16.mxu0 %v2027
  %2253 = vmatpush1.bf16.msra.mxu0 %v2026
  %2254 = vmatprep.mubr.bf16.mxu0 %v1447
  %2255 = vmatmul.mubr.bf16.gmra.mrb[0].mxu0 %v1446
  %v2256 = vpop.f32.mrb[0].mxu0
  %v2257 = vadd.f32 %v54, %v2256
  %v2258 = vpop.f32.mrb[0].mxu0
  %v2259 = vadd.f32 %v58, %v2258
  %v2260 = vpop.f32.mrb[0].mxu0
  %v2261 = vadd.f32 %v54, %v2260
  %v2262 = vpop.f32.mrb[0].mxu0
  %v2263 = vadd.f32 %v58, %v2262
  %2264 = vmatprep.mubr.bf16.mxu0 %v1451
  %2265 = vmatmul.mubr.bf16.gmra.mrb[0].mxu0 %v1450
  %v2266 = vpop.f32.mrb[0].mxu0
  %v2267 = vadd.f32 %v54, %v2266
  %v2268 = vpop.f32.mrb[0].mxu0
  %v2269 = vadd.f32 %v58, %v2268
  %v2270 = vpop.f32.mrb[0].mxu0
  %v2271 = vadd.f32 %v54, %v2270
  %v2272 = vpop.f32.mrb[0].mxu0
  %v2273 = vadd.f32 %v58, %v2272
  %2274 = vdwg.mxu0
  %2275 = vmatprep.subr.bf16.mxu0 %v2031
  %2276 = vmatpush1.bf16.msra.mxu0 %v2030
  %2277 = vmatprep.subr.bf16.mxu0 %v2035
  %2278 = vmatpush1.bf16.msra.mxu0 %v2034
  %2279 = vmatprep.subr.bf16.mxu0 %v2039
  %2280 = vmatpush1.bf16.msra.mxu0 %v2038
  %2281 = vmatprep.subr.bf16.mxu0 %v2043
  %2282 = vmatpush1.bf16.msra.mxu0 %v2042
  %2283 = vmatprep.subr.bf16.mxu0 %v2047
  %2284 = vmatpush1.bf16.msra.mxu0 %v2046
  %2285 = vmatprep.subr.bf16.mxu0 %v2051
  %2286 = vmatpush1.bf16.msra.mxu0 %v2050
  %2287 = vmatprep.subr.bf16.mxu0 %v2055
  %2288 = vmatpush1.bf16.msra.mxu0 %v2054
  %2289 = vmatprep.subr.bf16.mxu0 %v2059
  %2290 = vmatpush1.bf16.msra.mxu0 %v2058
  %2291 = vmatprep.subr.bf16.mxu0 %v2063
  %2292 = vmatpush1.bf16.msra.mxu0 %v2062
  %2293 = vmatprep.subr.bf16.mxu0 %v2067
  %2294 = vmatpush1.bf16.msra.mxu0 %v2066
  %2295 = vmatprep.subr.bf16.mxu0 %v2071
  %2296 = vmatpush1.bf16.msra.mxu0 %v2070
  %2297 = vmatprep.subr.bf16.mxu0 %v2075
  %2298 = vmatpush1.bf16.msra.mxu0 %v2074
  %2299 = vmatprep.subr.bf16.mxu0 %v2079
  %2300 = vmatpush1.bf16.msra.mxu0 %v2078
  %2301 = vmatprep.subr.bf16.mxu0 %v2083
  %2302 = vmatpush1.bf16.msra.mxu0 %v2082
  %2303 = vmatprep.subr.bf16.mxu0 %v2087
  %2304 = vmatpush1.bf16.msra.mxu0 %v2086
  %2305 = vmatprep.subr.bf16.mxu0 %v2091
  %2306 = vmatpush1.bf16.msra.mxu0 %v2090
  %2307 = vmatprep.mubr.bf16.mxu0 %v1449
  %2308 = vmatmul.mubr.bf16.gmra.mrb[0].mxu0 %v1448
  %v2309 = vpop.f32.mrb[0].mxu0
  %v2310 = vadd.f32 %v2257, %v2309
  %v2311 = vpop.f32.mrb[0].mxu0
  %v2312 = vadd.f32 %v2259, %v2311
  %v2313 = vpop.f32.mrb[0].mxu0
  %v2314 = vadd.f32 %v2261, %v2313
  %v2315 = vpop.f32.mrb[0].mxu0
  %v2316 = vadd.f32 %v2263, %v2315
  %2317 = vmatprep.mubr.bf16.mxu0 %v1453
  %2318 = vmatmul.mubr.bf16.gmra.mrb[0].mxu0 %v1452
  %v2319 = vpop.f32.mrb[0].mxu0
  %v2320 = vadd.f32 %v2267, %v2319
  %v2321 = vpop.f32.mrb[0].mxu0
  %v2322 = vadd.f32 %v2269, %v2321
  %v2323 = vpop.f32.mrb[0].mxu0
  %v2324 = vadd.f32 %v2271, %v2323
  %v2325 = vpop.f32.mrb[0].mxu0
  %v2326 = vadd.f32 %v2273, %v2325
  %2327 = vdwg.mxu0
  %2328 = vmatprep.subr.bf16.mxu0 %v1969
  %2329 = vmatpush1.bf16.msra.mxu0 %v1968
  %2330 = vmatprep.subr.bf16.mxu0 %v1973
  %2331 = vmatpush1.bf16.msra.mxu0 %v1972
  %2332 = vmatprep.subr.bf16.mxu0 %v1977
  %2333 = vmatpush1.bf16.msra.mxu0 %v1976
  %2334 = vmatprep.subr.bf16.mxu0 %v1981
  %2335 = vmatpush1.bf16.msra.mxu0 %v1980
  %2336 = vmatprep.subr.bf16.mxu0 %v1985
  %2337 = vmatpush1.bf16.msra.mxu0 %v1984
  %2338 = vmatprep.subr.bf16.mxu0 %v1989
  %2339 = vmatpush1.bf16.msra.mxu0 %v1988
  %2340 = vmatprep.subr.bf16.mxu0 %v1993
  %2341 = vmatpush1.bf16.msra.mxu0 %v1992
  %2342 = vmatprep.subr.bf16.mxu0 %v1997
  %2343 = vmatpush1.bf16.msra.mxu0 %v1996
  %2344 = vmatprep.subr.bf16.mxu0 %v2001
  %2345 = vmatpush1.bf16.msra.mxu0 %v2000
  %2346 = vmatprep.subr.bf16.mxu0 %v2005
  %2347 = vmatpush1.bf16.msra.mxu0 %v2004
  %2348 = vmatprep.subr.bf16.mxu0 %v2009
  %2349 = vmatpush1.bf16.msra.mxu0 %v2008
  %2350 = vmatprep.subr.bf16.mxu0 %v2013
  %2351 = vmatpush1.bf16.msra.mxu0 %v2012
  %2352 = vmatprep.subr.bf16.mxu0 %v2017
  %2353 = vmatpush1.bf16.msra.mxu0 %v2016
  %2354 = vmatprep.subr.bf16.mxu0 %v2021
  %2355 = vmatpush1.bf16.msra.mxu0 %v2020
  %2356 = vmatprep.subr.bf16.mxu0 %v2025
  %2357 = vmatpush1.bf16.msra.mxu0 %v2024
  %2358 = vmatprep.subr.bf16.mxu0 %v2029
  %2359 = vmatpush1.bf16.msra.mxu0 %v2028
  %2360 = vmatprep.mubr.bf16.mxu0 %v1447
  %2361 = vmatmul.mubr.bf16.gmra.mrb[0].mxu0 %v1446
  %v2362 = vpop.f32.mrb[0].mxu0
  %v2363 = vadd.f32 %v62, %v2362
  %v2364 = vpop.f32.mrb[0].mxu0
  %v2365 = vadd.f32 %v66, %v2364
  %v2366 = vpop.f32.mrb[0].mxu0
  %v2367 = vadd.f32 %v62, %v2366
  %v2368 = vpop.f32.mrb[0].mxu0
  %v2369 = vadd.f32 %v66, %v2368
  %2370 = vmatprep.mubr.bf16.mxu0 %v1451
  %2371 = vmatmul.mubr.bf16.gmra.mrb[0].mxu0 %v1450
  %v2372 = vpop.f32.mrb[0].mxu0
  %v2373 = vadd.f32 %v62, %v2372
  %v2374 = vpop.f32.mrb[0].mxu0
  %v2375 = vadd.f32 %v66, %v2374
  %v2376 = vpop.f32.mrb[0].mxu0
  %v2377 = vadd.f32 %v62, %v2376
  %v2378 = vpop.f32.mrb[0].mxu0
  %v2379 = vadd.f32 %v66, %v2378
  %2380 = vdwg.mxu0
  %2381 = vmatprep.subr.bf16.mxu0 %v2033
  %2382 = vmatpush1.bf16.msra.mxu0 %v2032
  %2383 = vmatprep.subr.bf16.mxu0 %v2037
  %2384 = vmatpush1.bf16.msra.mxu0 %v2036
  %2385 = vmatprep.subr.bf16.mxu0 %v2041
  %2386 = vmatpush1.bf16.msra.mxu0 %v2040
  %2387 = vmatprep.subr.bf16.mxu0 %v2045
  %2388 = vmatpush1.bf16.msra.mxu0 %v2044
  %2389 = vmatprep.subr.bf16.mxu0 %v2049
  %2390 = vmatpush1.bf16.msra.mxu0 %v2048
  %2391 = vmatprep.subr.bf16.mxu0 %v2053
  %2392 = vmatpush1.bf16.msra.mxu0 %v2052
  %2393 = vmatprep.subr.bf16.mxu0 %v2057
  %2394 = vmatpush1.bf16.msra.mxu0 %v2056
  %2395 = vmatprep.subr.bf16.mxu0 %v2061
  %2396 = vmatpush1.bf16.msra.mxu0 %v2060
  %2397 = vmatprep.subr.bf16.mxu0 %v2065
  %2398 = vmatpush1.bf16.msra.mxu0 %v2064
  %2399 = vmatprep.subr.bf16.mxu0 %v2069
  %2400 = vmatpush1.bf16.msra.mxu0 %v2068
  %2401 = vmatprep.subr.bf16.mxu0 %v2073
  %2402 = vmatpush1.bf16.msra.mxu0 %v2072
  %2403 = vmatprep.subr.bf16.mxu0 %v2077
  %2404 = vmatpush1.bf16.msra.mxu0 %v2076
  %2405 = vmatprep.subr.bf16.mxu0 %v2081
  %2406 = vmatpush1.bf16.msra.mxu0 %v2080
  %2407 = vmatprep.subr.bf16.mxu0 %v2085
  %2408 = vmatpush1.bf16.msra.mxu0 %v2084
  %2409 = vmatprep.subr.bf16.mxu0 %v2089
  %2410 = vmatpush1.bf16.msra.mxu0 %v2088
  %2411 = vmatprep.subr.bf16.mxu0 %v2093
  %2412 = vmatpush1.bf16.msra.mxu0 %v2092
  %2413 = vmatprep.mubr.bf16.mxu0 %v1449
  %2414 = vmatmul.mubr.bf16.gmra.mrb[0].mxu0 %v1448
  %v2415 = vpop.f32.mrb[0].mxu0
  %v2416 = vadd.f32 %v2363, %v2415
  %v2417 = vpop.f32.mrb[0].mxu0
  %v2418 = vadd.f32 %v2365, %v2417
  %v2419 = vpop.f32.mrb[0].mxu0
  %v2420 = vadd.f32 %v2367, %v2419
  %v2421 = vpop.f32.mrb[0].mxu0
  %v2422 = vadd.f32 %v2369, %v2421
  %2423 = vmatprep.mubr.bf16.mxu0 %v1453
  %2424 = vmatmul.mubr.bf16.gmra.mrb[0].mxu0 %v1452
  %v2425 = vpop.f32.mrb[0].mxu0
  %v2426 = vadd.f32 %v2373, %v2425
  %v2427 = vpop.f32.mrb[0].mxu0
  %v2428 = vadd.f32 %v2375, %v2427
  %v2429 = vpop.f32.mrb[0].mxu0
  %v2430 = vadd.f32 %v2377, %v2429
  %v2431 = vpop.f32.mrb[0].mxu0
  %v2432 = vadd.f32 %v2379, %v2431
  %2433 = vdwg.mxu0
  %v2434 = vmax.f32 %v2310, 0.0
  %v2435 = vmax.f32 %v2312, 0.0
  %v2436 = vmax.f32 %v2416, 0.0
  %v2437 = vmax.f32 %v2418, 0.0
  %v2438 = vmax.f32 %v2314, 0.0
  %v2439 = vmax.f32 %v2316, 0.0
  %v2440 = vmax.f32 %v2420, 0.0
  %v2441 = vmax.f32 %v2422, 0.0
  %v2442 = vmax.f32 %v2320, 0.0
  %v2443 = vmax.f32 %v2322, 0.0
  %v2444 = vmax.f32 %v2426, 0.0
  %v2445 = vmax.f32 %v2428, 0.0
  %v2446 = vmax.f32 %v2324, 0.0
  %v2447 = vmax.f32 %v2326, 0.0
  %v2448 = vmax.f32 %v2430, 0.0
  %v2449 = vmax.f32 %v2432, 0.0
  %v2450 = vpack.c.bf16 %v2438, %v2434
  %v2451 = vpack.c.bf16 %v2439, %v2435
  %v2452 = vpack.c.bf16 %v2440, %v2436
  %v2453 = vpack.c.bf16 %v2441, %v2437
  %v2454 = vpack.c.bf16 %v2446, %v2442
  %v2455 = vpack.c.bf16 %v2447, %v2443
  %v2456 = vpack.c.bf16 %v2448, %v2444
  %v2457 = vpack.c.bf16 %v2449, %v2445
  %vm2458 = vcmask 1040384
  %vm2459 = vsmask.f32 256
  %vm2460 = vmand %vm2458, %vm2459
  %vm2461 = vcmask 1044484
  %vm2462 = vsmask.f32 4352
  %vm2463 = vmand %vm2461, %vm2462
  %vm2464 = vmor %vm2463, %vm2460
  %v2465 = vld [vmem:[#allocation3] sm:$0x11]
  %v2466 = vsel %vm2464, 0, %v2465
  %2467 = vst [vmem:[#allocation3] sm:$0x11] %v2466
  %v2468 = vld [vmem:[#allocation3 + $0x8] sm:$0x11]
  %v2469 = vsel %vm2464, 0, %v2468
  %2470 = vst [vmem:[#allocation3 + $0x8] sm:$0x11] %v2469
  %vm2471 = vsmask.f32 7938
  %vm2472 = vmand %vm2458, %vm2471
  %vm2473 = vsmask.f32 7954
  %vm2474 = vmand %vm2461, %vm2473
  %vm2475 = vmor %vm2474, %vm2472
  %v2476 = vld [vmem:[#allocation3 + $0x20] sm:$0x11]
  %v2477 = vsel %vm2475, 0, %v2476
  %2478 = vst [vmem:[#allocation3 + $0x20] sm:$0x11] %v2477
  %v2479 = vld [vmem:[#allocation3 + $0x28] sm:$0x11]
  %v2480 = vsel %vm2475, 0, %v2479
  %2481 = vst [vmem:[#allocation3 + $0x28] sm:$0x11] %v2480
  %v2486 = vunpack.c.l.b16 %v2450
  %v2487 = vunpack.c.l.b16 %v2451
  %v2488 = vunpack.c.l.b16 %v2452
  %v2489 = vunpack.c.l.b16 %v2453
  %v2490 = vunpack.c.h.b16 %v2450
  %v2491 = vunpack.c.h.b16 %v2451
  %v2492 = vunpack.c.h.b16 %v2452
  %v2493 = vunpack.c.h.b16 %v2453
  %v2494 = vpack.c.b16 %v2487, %v2486
  %v2495 = vpack.c.b16 %v2489, %v2488
  %v2496 = vpack.c.b16 %v2491, %v2490
  %v2497 = vpack.c.b16 %v2493, %v2492
  %vm2498 = vsmask.f32 4368
  %vm2499 = vmor %vm2459, %vm2498
  %v2501 = vshrl.u32 %v2494, 16
  %v2503 = vrot.slane %v2501, 7
  %v2504 = vshll.u32 %v2494, 16
  %v2506 = vor.u32 %v2503, %v2504
  %v2508 = vshrl.u32 %v2495, 16
  %v2510 = vrot.slane %v2508, 7
  %v2511 = vshll.u32 %v2495, 16
  %v2513 = vor.u32 %v2510, %v2511
  %v2514 = vrot.slane %v2503, 4
  %v2516 = vshrl.u32 %v2496, 16
  %v2518 = vrot.slane %v2516, 7
  %v2519 = vshll.u32 %v2496, 16
  %v2521 = vor.u32 %v2518, %v2519
  %v2522 = vsel %vm2499, %v2514, %v2521
  %v2523 = vrot.slane %v2510, 4
  %v2525 = vshrl.u32 %v2497, 16
  %v2527 = vrot.slane %v2525, 7
  %v2528 = vshll.u32 %v2497, 16
  %v2530 = vor.u32 %v2527, %v2528
  %v2531 = vsel %vm2499, %v2523, %v2530
  %v2532 = vrot.slane %v2518, 4
  %v2533 = vrot.slane %v2527, 4
  %vm2540 = vcmask 1043456
  %vm2541 = vmand %vm2540, %vm2471
  %vm2542 = vcmask 1047556
  %vm2543 = vmand %vm2542, %vm2473
  %vm2544 = vmor %vm2543, %vm2541
  %v2545 = vld [vmem:[#allocation3] sm:$0xff]
  %v2546 = vsel %vm2544, %v2506, %v2545
  %2547 = vst [vmem:[#allocation3] sm:$0xff] %v2546
  %v2548 = vld [vmem:[#allocation3 + $0x8] sm:$0xff]
  %v2549 = vsel %vm2544, %v2513, %v2548
  %2550 = vst [vmem:[#allocation3 + $0x8] sm:$0xff] %v2549
  %2551 = vst [vmem:[#allocation3 + $0x10] sm:$0xff] %v2522
  %2552 = vst [vmem:[#allocation3 + $0x18] sm:$0xff] %v2531
  %v2553 = vld [vmem:[#allocation3 + $0x20] sm:$0x11]
  %v2554 = vsel %vm2464, %v2532, %v2553
  %2555 = vst [vmem:[#allocation3 + $0x20] sm:$0x11] %v2554
  %v2556 = vld [vmem:[#allocation3 + $0x28] sm:$0x11]
  %v2557 = vsel %vm2464, %v2533, %v2556
  %2558 = vst [vmem:[#allocation3 + $0x28] sm:$0x11] %v2557
  %vm2559 = vcmask 1041409
  %vm2560 = vsmask.f32 1280
  %vm2561 = vmand %vm2559, %vm2560
  %vm2562 = vcmask 1045509
  %vm2563 = vsmask.f32 5376
  %vm2564 = vmand %vm2562, %vm2563
  %vm2565 = vmor %vm2564, %vm2561
  %v2566 = vld [vmem:[#allocation3 + $0x20] sm:$0x22]
  %v2567 = vsel %vm2565, 0, %v2566
  %2568 = vst [vmem:[#allocation3 + $0x20] sm:$0x22] %v2567
  %v2569 = vld [vmem:[#allocation3 + $0x28] sm:$0x22]
  %v2570 = vsel %vm2565, 0, %v2569
  %2571 = vst [vmem:[#allocation3 + $0x28] sm:$0x22] %v2570
  %vm2572 = vsmask.f32 7942
  %vm2573 = vmand %vm2559, %vm2572
  %vm2574 = vsmask.f32 7958
  %vm2575 = vmand %vm2562, %vm2574
  %vm2576 = vmor %vm2575, %vm2573
  %v2577 = vld [vmem:[#allocation3 + $0x40] sm:$0x22]
  %v2578 = vsel %vm2576, 0, %v2577
  %2579 = vst [vmem:[#allocation3 + $0x40] sm:$0x22] %v2578
  %v2580 = vld [vmem:[#allocation3 + $0x48] sm:$0x22]
  %v2581 = vsel %vm2576, 0, %v2580
  %2582 = vst [vmem:[#allocation3 + $0x48] sm:$0x22] %v2581
  %v2587 = vunpack.c.l.b16 %v2454
  %v2588 = vunpack.c.l.b16 %v2455
  %v2589 = vunpack.c.l.b16 %v2456
  %v2590 = vunpack.c.l.b16 %v2457
  %v2591 = vunpack.c.h.b16 %v2454
  %v2592 = vunpack.c.h.b16 %v2455
  %v2593 = vunpack.c.h.b16 %v2456
  %v2594 = vunpack.c.h.b16 %v2457
  %v2595 = vpack.c.b16 %v2588, %v2587
  %v2596 = vpack.c.b16 %v2590, %v2589
  %v2597 = vpack.c.b16 %v2592, %v2591
  %v2598 = vpack.c.b16 %v2594, %v2593
  %vm2599 = vsmask.f32 5392
  %vm2600 = vmor %vm2560, %vm2599
  %v2602 = vshrl.u32 %v2595, 16
  %v2604 = vrot.slane %v2602, 6
  %v2605 = vshll.u32 %v2595, 16
  %v2607 = vrot.slane %v2605, 7
  %v2608 = vor.u32 %v2604, %v2607
  %v2610 = vshrl.u32 %v2596, 16
  %v2612 = vrot.slane %v2610, 6
  %v2613 = vshll.u32 %v2596, 16
  %v2615 = vrot.slane %v2613, 7
  %v2616 = vor.u32 %v2612, %v2615
  %v2617 = vrot.slane %v2608, 4
  %v2619 = vshrl.u32 %v2597, 16
  %v2621 = vrot.slane %v2619, 6
  %v2622 = vshll.u32 %v2597, 16
  %v2624 = vrot.slane %v2622, 7
  %v2625 = vor.u32 %v2621, %v2624
  %v2626 = vsel %vm2600, %v2617, %v2625
  %v2627 = vrot.slane %v2616, 4
  %v2629 = vshrl.u32 %v2598, 16
  %v2631 = vrot.slane %v2629, 6
  %v2632 = vshll.u32 %v2598, 16
  %v2634 = vrot.slane %v2632, 7
  %v2635 = vor.u32 %v2631, %v2634
  %v2636 = vsel %vm2600, %v2627, %v2635
  %v2637 = vrot.slane %v2625, 4
  %v2638 = vrot.slane %v2635, 4
  %vm2645 = vcmask 1043457
  %vm2646 = vmand %vm2645, %vm2572
  %vm2647 = vcmask 1047557
  %vm2648 = vmand %vm2647, %vm2574
  %vm2649 = vmor %vm2648, %vm2646
  %v2650 = vld [vmem:[#allocation3 + $0x20] sm:$0xee]
  %v2651 = vsel %vm2649, %v2608, %v2650
  %2652 = vst [vmem:[#allocation3 + $0x20] sm:$0xee] %v2651
  %v2653 = vld [vmem:[#allocation3 + $0x28] sm:$0xee]
  %v2654 = vsel %vm2649, %v2616, %v2653
  %2655 = vst [vmem:[#allocation3 + $0x28] sm:$0xee] %v2654
  %2656 = vst [vmem:[#allocation3 + $0x30] sm:$0xff] %v2626
  %2657 = vst [vmem:[#allocation3 + $0x38] sm:$0xff] %v2636
  %vm2658 = vcmask 1041408
  %vm2659 = vmand %vm2658, %vm2560
  %vm2660 = vcmask 1045508
  %vm2661 = vmand %vm2660, %vm2563
  %vm2662 = vmor %vm2661, %vm2659
  %v2663 = vld [vmem:[#allocation3 + $0x40] sm:$0x33]
  %v2664 = vsel %vm2662, %v2637, %v2663
  %2665 = vst [vmem:[#allocation3 + $0x40] sm:$0x33] %v2664
  %v2666 = vld [vmem:[#allocation3 + $0x48] sm:$0x33]
  %v2667 = vsel %vm2662, %v2638, %v2666
  %2668 = vst [vmem:[#allocation3 + $0x48] sm:$0x33] %v2667
  %v2669 = vld [vmem:[#allocation3] sm:$0xff]
  %v2670 = vld [vmem:[#allocation3 + $0x8] sm:$0xff]
  %v2671 = vld [vmem:[#allocation3 + $0x10] sm:$0xff]
  %v2672 = vld [vmem:[#allocation3 + $0x18] sm:$0xff]
  %v2673 = vld [vmem:[%s5] sm:$0xf]
  %v2674 = vld [vmem:[%s5 + $0x4] sm:$0xf]
  %v2675 = vld [vmem:[%s5 + $0x8] sm:$0xf]
  %v2676 = vld [vmem:[%s5 + $0xc] sm:$0xf]
  %v2677 = vld [vmem:[%s5 + $0x10] sm:$0xf]
  %v2678 = vld [vmem:[%s5 + $0x14] sm:$0xf]
  %v2679 = vld [vmem:[%s5 + $0x18] sm:$0xf]
  %v2680 = vld [vmem:[%s5 + $0x1c] sm:$0xf]
  %v2681 = vld [vmem:[%s5 + $0x20] sm:$0xf]
  %v2682 = vld [vmem:[%s5 + $0x24] sm:$0xf]
  %v2683 = vld [vmem:[%s5 + $0x28] sm:$0xf]
  %v2684 = vld [vmem:[%s5 + $0x2c] sm:$0xf]
  %v2685 = vld [vmem:[%s5 + $0x30] sm:$0xf]
  %v2686 = vld [vmem:[%s5 + $0x34] sm:$0xf]
  %v2687 = vld [vmem:[%s5 + $0x38] sm:$0xf]
  %v2688 = vld [vmem:[%s5 + $0x3c] sm:$0xf]
  %v2689 = vld [vmem:[%s5 + $0x40] sm:$0xf]
  %v2690 = vld [vmem:[%s5 + $0x44] sm:$0xf]
  %v2691 = vld [vmem:[%s5 + $0x48] sm:$0xf]
  %v2692 = vld [vmem:[%s5 + $0x4c] sm:$0xf]
  %v2693 = vld [vmem:[%s5 + $0x50] sm:$0xf]
  %v2694 = vld [vmem:[%s5 + $0x54] sm:$0xf]
  %v2695 = vld [vmem:[%s5 + $0x58] sm:$0xf]
  %v2696 = vld [vmem:[%s5 + $0x5c] sm:$0xf]
  %v2697 = vld [vmem:[%s5 + $0x60] sm:$0xf]
  %v2698 = vld [vmem:[%s5 + $0x64] sm:$0xf]
  %v2699 = vld [vmem:[%s5 + $0x68] sm:$0xf]
  %v2700 = vld [vmem:[%s5 + $0x6c] sm:$0xf]
  %v2701 = vld [vmem:[%s5 + $0x70] sm:$0xf]
  %v2702 = vld [vmem:[%s5 + $0x74] sm:$0xf]
  %v2703 = vld [vmem:[%s5 + $0x78] sm:$0xf]
  %v2704 = vld [vmem:[%s5 + $0x7c] sm:$0xf]
  %v2705 = vld [vmem:[%s5 + $0x80] sm:$0xf]
  %v2706 = vld [vmem:[%s5 + $0x84] sm:$0xf]
  %v2707 = vld [vmem:[%s5 + $0x88] sm:$0xf]
  %v2708 = vld [vmem:[%s5 + $0x8c] sm:$0xf]
  %v2709 = vld [vmem:[%s5 + $0x90] sm:$0xf]
  %v2710 = vld [vmem:[%s5 + $0x94] sm:$0xf]
  %v2711 = vld [vmem:[%s5 + $0x98] sm:$0xf]
  %v2712 = vld [vmem:[%s5 + $0x9c] sm:$0xf]
  %v2713 = vld [vmem:[%s5 + $0xa0] sm:$0xf]
  %v2714 = vld [vmem:[%s5 + $0xa4] sm:$0xf]
  %v2715 = vld [vmem:[%s5 + $0xa8] sm:$0xf]
  %v2716 = vld [vmem:[%s5 + $0xac] sm:$0xf]
  %v2717 = vld [vmem:[%s5 + $0xb0] sm:$0xf]
  %v2718 = vld [vmem:[%s5 + $0xb4] sm:$0xf]
  %v2719 = vld [vmem:[%s5 + $0xb8] sm:$0xf]
  %v2720 = vld [vmem:[%s5 + $0xbc] sm:$0xf]
  %v2721 = vld [vmem:[%s5 + $0xc0] sm:$0xf]
  %v2722 = vld [vmem:[%s5 + $0xc4] sm:$0xf]
  %v2723 = vld [vmem:[%s5 + $0xc8] sm:$0xf]
  %v2724 = vld [vmem:[%s5 + $0xcc] sm:$0xf]
  %v2725 = vld [vmem:[%s5 + $0xd0] sm:$0xf]
  %v2726 = vld [vmem:[%s5 + $0xd4] sm:$0xf]
  %v2727 = vld [vmem:[%s5 + $0xd8] sm:$0xf]
  %v2728 = vld [vmem:[%s5 + $0xdc] sm:$0xf]
  %v2729 = vld [vmem:[%s5 + $0xe0] sm:$0xf]
  %v2730 = vld [vmem:[%s5 + $0xe4] sm:$0xf]
  %v2731 = vld [vmem:[%s5 + $0xe8] sm:$0xf]
  %v2732 = vld [vmem:[%s5 + $0xec] sm:$0xf]
  %v2733 = vld [vmem:[%s5 + $0xf0] sm:$0xf]
  %v2734 = vld [vmem:[%s5 + $0xf4] sm:$0xf]
  %v2735 = vld [vmem:[%s5 + $0xf8] sm:$0xf]
  %v2736 = vld [vmem:[%s5 + $0xfc] sm:$0xf]
  %v2737 = vld [vmem:[#allocation3 + $0x20] sm:$0x11]
  %v2738 = vld [vmem:[#allocation3 + $0x28] sm:$0x11]
  %s2739 = scalar_lea.vmem %s5, 256
  %v2740 = vld [vmem:[%s2739] sm:$0xf]
  %v2741 = vld [vmem:[%s2739 + $0x4] sm:$0xf]
  %v2742 = vld [vmem:[%s2739 + $0x8] sm:$0xf]
  %v2743 = vld [vmem:[%s2739 + $0xc] sm:$0xf]
  %v2744 = vld [vmem:[%s2739 + $0x10] sm:$0xf]
  %v2745 = vld [vmem:[%s2739 + $0x14] sm:$0xf]
  %v2746 = vld [vmem:[%s2739 + $0x18] sm:$0xf]
  %v2747 = vld [vmem:[%s2739 + $0x1c] sm:$0xf]
  %v2748 = vld [vmem:[%s2739 + $0x20] sm:$0xf]
  %v2749 = vld [vmem:[%s2739 + $0x24] sm:$0xf]
  %v2750 = vld [vmem:[%s2739 + $0x28] sm:$0xf]
  %v2751 = vld [vmem:[%s2739 + $0x2c] sm:$0xf]
  %v2752 = vld [vmem:[%s2739 + $0x30] sm:$0xf]
  %v2753 = vld [vmem:[%s2739 + $0x34] sm:$0xf]
  %v2754 = vld [vmem:[%s2739 + $0x38] sm:$0xf]
  %v2755 = vld [vmem:[%s2739 + $0x3c] sm:$0xf]
  %v2756 = vld [vmem:[%s2739 + $0x40] sm:$0xf]
  %v2757 = vld [vmem:[%s2739 + $0x44] sm:$0xf]
  %v2758 = vld [vmem:[%s2739 + $0x48] sm:$0xf]
  %v2759 = vld [vmem:[%s2739 + $0x4c] sm:$0xf]
  %v2760 = vld [vmem:[%s2739 + $0x50] sm:$0xf]
  %v2761 = vld [vmem:[%s2739 + $0x54] sm:$0xf]
  %v2762 = vld [vmem:[%s2739 + $0x58] sm:$0xf]
  %v2763 = vld [vmem:[%s2739 + $0x5c] sm:$0xf]
  %v2764 = vld [vmem:[%s2739 + $0x60] sm:$0xf]
  %v2765 = vld [vmem:[%s2739 + $0x64] sm:$0xf]
  %v2766 = vld [vmem:[%s2739 + $0x68] sm:$0xf]
  %v2767 = vld [vmem:[%s2739 + $0x6c] sm:$0xf]
  %v2768 = vld [vmem:[%s2739 + $0x70] sm:$0xf]
  %v2769 = vld [vmem:[%s2739 + $0x74] sm:$0xf]
  %v2770 = vld [vmem:[%s2739 + $0x78] sm:$0xf]
  %v2771 = vld [vmem:[%s2739 + $0x7c] sm:$0xf]
  %v2772 = vld [vmem:[%s2739 + $0x80] sm:$0xf]
  %v2773 = vld [vmem:[%s2739 + $0x84] sm:$0xf]
  %v2774 = vld [vmem:[%s2739 + $0x88] sm:$0xf]
  %v2775 = vld [vmem:[%s2739 + $0x8c] sm:$0xf]
  %v2776 = vld [vmem:[%s2739 + $0x90] sm:$0xf]
  %v2777 = vld [vmem:[%s2739 + $0x94] sm:$0xf]
  %v2778 = vld [vmem:[%s2739 + $0x98] sm:$0xf]
  %v2779 = vld [vmem:[%s2739 + $0x9c] sm:$0xf]
  %v2780 = vld [vmem:[%s2739 + $0xa0] sm:$0xf]
  %v2781 = vld [vmem:[%s2739 + $0xa4] sm:$0xf]
  %v2782 = vld [vmem:[%s2739 + $0xa8] sm:$0xf]
  %v2783 = vld [vmem:[%s2739 + $0xac] sm:$0xf]
  %v2784 = vld [vmem:[%s2739 + $0xb0] sm:$0xf]
  %v2785 = vld [vmem:[%s2739 + $0xb4] sm:$0xf]
  %v2786 = vld [vmem:[%s2739 + $0xb8] sm:$0xf]
  %v2787 = vld [vmem:[%s2739 + $0xbc] sm:$0xf]
  %v2788 = vld [vmem:[%s2739 + $0xc0] sm:$0xf]
  %v2789 = vld [vmem:[%s2739 + $0xc4] sm:$0xf]
  %v2790 = vld [vmem:[%s2739 + $0xc8] sm:$0xf]
  %v2791 = vld [vmem:[%s2739 + $0xcc] sm:$0xf]
  %v2792 = vld [vmem:[%s2739 + $0xd0] sm:$0xf]
  %v2793 = vld [vmem:[%s2739 + $0xd4] sm:$0xf]
  %v2794 = vld [vmem:[%s2739 + $0xd8] sm:$0xf]
  %v2795 = vld [vmem:[%s2739 + $0xdc] sm:$0xf]
  %v2796 = vld [vmem:[%s2739 + $0xe0] sm:$0xf]
  %v2797 = vld [vmem:[%s2739 + $0xe4] sm:$0xf]
  %v2798 = vld [vmem:[%s2739 + $0xe8] sm:$0xf]
  %v2799 = vld [vmem:[%s2739 + $0xec] sm:$0xf]
  %v2800 = vld [vmem:[%s2739 + $0xf0] sm:$0xf]
  %v2801 = vld [vmem:[%s2739 + $0xf4] sm:$0xf]
  %v2802 = vld [vmem:[%s2739 + $0xf8] sm:$0xf]
  %v2803 = vld [vmem:[%s2739 + $0xfc] sm:$0xf]
  %v2810 = vunpack.c.l.b16 %v2669
  %v2811 = vunpack.c.h.b16 %v2669
  %v2812 = vunpack.c.l.b16 %v2670
  %v2813 = vunpack.c.h.b16 %v2670
  %v2814 = vunpack.c.l.b16 %v2671
  %v2815 = vunpack.c.h.b16 %v2671
  %v2816 = vunpack.c.l.b16 %v2672
  %v2817 = vunpack.c.h.b16 %v2672
  %v2818 = vunpack.c.l.b16 %v2737
  %v2819 = vunpack.c.h.b16 %v2737
  %v2820 = vunpack.c.l.b16 %v2738
  %v2821 = vunpack.c.h.b16 %v2738
  %v2822 = vpack.c.b16 %v2814, %v2810
  %v2823 = vpack.c.b16 %v2815, %v2811
  %v2824 = vpack.c.b16 %v2816, %v2812
  %v2825 = vpack.c.b16 %v2817, %v2813
  %v2826 = vpack.c.b16 %v2818, %v2818
  %v2827 = vpack.c.b16 %v2819, %v2819
  %v2828 = vpack.c.b16 %v2820, %v2820
  %v2829 = vpack.c.b16 %v2821, %v2821
  %v2831 = vshrl.u32 %v2822, 16
  %v2833 = vshll.u32 %v2822, 16
  %v2835 = vrot.slane %v2833, 1
  %v2836 = vor.u32 %v2831, %v2835
  %v2838 = vshll.u32 %v2826, 16
  %v2840 = vrot.slane %v2838, 1
  %v2841 = vsel %vm119, %v2836, %v2840
  %v2843 = vshrl.u32 %v2823, 16
  %v2845 = vshll.u32 %v2823, 16
  %v2847 = vrot.slane %v2845, 1
  %v2848 = vor.u32 %v2843, %v2847
  %v2850 = vshll.u32 %v2827, 16
  %v2852 = vrot.slane %v2850, 1
  %v2853 = vsel %vm119, %v2848, %v2852
  %v2855 = vshrl.u32 %v2824, 16
  %v2857 = vshll.u32 %v2824, 16
  %v2859 = vrot.slane %v2857, 1
  %v2860 = vor.u32 %v2855, %v2859
  %v2862 = vshll.u32 %v2828, 16
  %v2864 = vrot.slane %v2862, 1
  %v2865 = vsel %vm119, %v2860, %v2864
  %v2867 = vshrl.u32 %v2825, 16
  %v2869 = vshll.u32 %v2825, 16
  %v2871 = vrot.slane %v2869, 1
  %v2872 = vor.u32 %v2867, %v2871
  %v2874 = vshll.u32 %v2829, 16
  %v2876 = vrot.slane %v2874, 1
  %v2877 = vsel %vm119, %v2872, %v2876
  %v2946 = vunpack.c.l.b16 %v2740
  %v2947 = vunpack.c.l.b16 %v2741
  %v2948 = vunpack.c.l.b16 %v2742
  %v2949 = vunpack.c.l.b16 %v2743
  %v2950 = vunpack.c.l.b16 %v2744
  %v2951 = vunpack.c.l.b16 %v2745
  %v2952 = vunpack.c.l.b16 %v2746
  %v2953 = vunpack.c.l.b16 %v2747
  %v2954 = vunpack.c.l.b16 %v2748
  %v2955 = vunpack.c.l.b16 %v2749
  %v2956 = vunpack.c.l.b16 %v2750
  %v2957 = vunpack.c.l.b16 %v2751
  %v2958 = vunpack.c.l.b16 %v2752
  %v2959 = vunpack.c.l.b16 %v2753
  %v2960 = vunpack.c.l.b16 %v2754
  %v2961 = vunpack.c.l.b16 %v2755
  %v2962 = vunpack.c.l.b16 %v2756
  %v2963 = vunpack.c.l.b16 %v2757
  %v2964 = vunpack.c.l.b16 %v2758
  %v2965 = vunpack.c.l.b16 %v2759
  %v2966 = vunpack.c.l.b16 %v2760
  %v2967 = vunpack.c.l.b16 %v2761
  %v2968 = vunpack.c.l.b16 %v2762
  %v2969 = vunpack.c.l.b16 %v2763
  %v2970 = vunpack.c.l.b16 %v2764
  %v2971 = vunpack.c.l.b16 %v2765
  %v2972 = vunpack.c.l.b16 %v2766
  %v2973 = vunpack.c.l.b16 %v2767
  %v2974 = vunpack.c.l.b16 %v2768
  %v2975 = vunpack.c.l.b16 %v2769
  %v2976 = vunpack.c.l.b16 %v2770
  %v2977 = vunpack.c.l.b16 %v2771
  %v2978 = vunpack.c.l.b16 %v2772
  %v2979 = vunpack.c.l.b16 %v2773
  %v2980 = vunpack.c.l.b16 %v2774
  %v2981 = vunpack.c.l.b16 %v2775
  %v2982 = vunpack.c.l.b16 %v2776
  %v2983 = vunpack.c.l.b16 %v2777
  %v2984 = vunpack.c.l.b16 %v2778
  %v2985 = vunpack.c.l.b16 %v2779
  %v2986 = vunpack.c.l.b16 %v2780
  %v2987 = vunpack.c.l.b16 %v2781
  %v2988 = vunpack.c.l.b16 %v2782
  %v2989 = vunpack.c.l.b16 %v2783
  %v2990 = vunpack.c.l.b16 %v2784
  %v2991 = vunpack.c.l.b16 %v2785
  %v2992 = vunpack.c.l.b16 %v2786
  %v2993 = vunpack.c.l.b16 %v2787
  %v2994 = vunpack.c.l.b16 %v2788
  %v2995 = vunpack.c.l.b16 %v2789
  %v2996 = vunpack.c.l.b16 %v2790
  %v2997 = vunpack.c.l.b16 %v2791
  %v2998 = vunpack.c.l.b16 %v2792
  %v2999 = vunpack.c.l.b16 %v2793
  %v3000 = vunpack.c.l.b16 %v2794
  %v3001 = vunpack.c.l.b16 %v2795
  %v3002 = vunpack.c.l.b16 %v2796
  %v3003 = vunpack.c.l.b16 %v2797
  %v3004 = vunpack.c.l.b16 %v2798
  %v3005 = vunpack.c.l.b16 %v2799
  %v3006 = vunpack.c.l.b16 %v2800
  %v3007 = vunpack.c.l.b16 %v2801
  %v3008 = vunpack.c.l.b16 %v2802
  %v3009 = vunpack.c.l.b16 %v2803
  %v3010 = vpack.c.b16 %v2947, %v2946
  %v3011 = vpack.c.b16 %v2949, %v2948
  %v3012 = vpack.c.b16 %v2951, %v2950
  %v3013 = vpack.c.b16 %v2953, %v2952
  %v3014 = vpack.c.b16 %v2955, %v2954
  %v3015 = vpack.c.b16 %v2957, %v2956
  %v3016 = vpack.c.b16 %v2959, %v2958
  %v3017 = vpack.c.b16 %v2961, %v2960
  %v3018 = vpack.c.b16 %v2963, %v2962
  %v3019 = vpack.c.b16 %v2965, %v2964
  %v3020 = vpack.c.b16 %v2967, %v2966
  %v3021 = vpack.c.b16 %v2969, %v2968
  %v3022 = vpack.c.b16 %v2971, %v2970
  %v3023 = vpack.c.b16 %v2973, %v2972
  %v3024 = vpack.c.b16 %v2975, %v2974
  %v3025 = vpack.c.b16 %v2977, %v2976
  %v3026 = vpack.c.b16 %v2979, %v2978
  %v3027 = vpack.c.b16 %v2981, %v2980
  %v3028 = vpack.c.b16 %v2983, %v2982
  %v3029 = vpack.c.b16 %v2985, %v2984
  %v3030 = vpack.c.b16 %v2987, %v2986
  %v3031 = vpack.c.b16 %v2989, %v2988
  %v3032 = vpack.c.b16 %v2991, %v2990
  %v3033 = vpack.c.b16 %v2993, %v2992
  %v3034 = vpack.c.b16 %v2995, %v2994
  %v3035 = vpack.c.b16 %v2997, %v2996
  %v3036 = vpack.c.b16 %v2999, %v2998
  %v3037 = vpack.c.b16 %v3001, %v3000
  %v3038 = vpack.c.b16 %v3003, %v3002
  %v3039 = vpack.c.b16 %v3005, %v3004
  %v3040 = vpack.c.b16 %v3007, %v3006
  %v3041 = vpack.c.b16 %v3009, %v3008
  %3074 = vmatprep.subr.bf16.mxu0 0
  %3075 = vmatpush1.bf16.msra.mxu0 %v3010
  %3076 = vmatprep.subr.bf16.mxu0 0
  %3077 = vmatpush1.bf16.msra.mxu0 %v3011
  %3078 = vmatprep.subr.bf16.mxu0 0
  %3079 = vmatpush1.bf16.msra.mxu0 %v3012
  %3080 = vmatprep.subr.bf16.mxu0 0
  %3081 = vmatpush1.bf16.msra.mxu0 %v3013
  %3082 = vmatprep.subr.bf16.mxu0 0
  %3083 = vmatpush1.bf16.msra.mxu0 %v3014
  %3084 = vmatprep.subr.bf16.mxu0 0
  %3085 = vmatpush1.bf16.msra.mxu0 %v3015
  %3086 = vmatprep.subr.bf16.mxu0 0
  %3087 = vmatpush1.bf16.msra.mxu0 %v3016
  %3088 = vmatprep.subr.bf16.mxu0 0
  %3089 = vmatpush1.bf16.msra.mxu0 %v3017
  %3090 = vmatprep.subr.bf16.mxu0 0
  %3091 = vmatpush1.bf16.msra.mxu0 %v3018
  %3092 = vmatprep.subr.bf16.mxu0 0
  %3093 = vmatpush1.bf16.msra.mxu0 %v3019
  %3094 = vmatprep.subr.bf16.mxu0 0
  %3095 = vmatpush1.bf16.msra.mxu0 %v3020
  %3096 = vmatprep.subr.bf16.mxu0 0
  %3097 = vmatpush1.bf16.msra.mxu0 %v3021
  %3098 = vmatprep.subr.bf16.mxu0 0
  %3099 = vmatpush1.bf16.msra.mxu0 %v3022
  %3100 = vmatprep.subr.bf16.mxu0 0
  %3101 = vmatpush1.bf16.msra.mxu0 %v3023
  %3102 = vmatprep.subr.bf16.mxu0 0
  %3103 = vmatpush1.bf16.msra.mxu0 %v3024
  %3104 = vmatprep.subr.bf16.mxu0 0
  %3105 = vmatpush1.bf16.msra.mxu0 %v3025
  %3106 = vmatprep.mubr.bf16.mxu0 %v2853
  %3107 = vmatmul.mubr.bf16.gmra.mrb[0].mxu0 %v2841
  %v3108 = vpop.f32.mrb[0].mxu0
  %v3109 = vadd.f32 0.0, %v3108
  %v3110 = vpop.f32.mrb[0].mxu0
  %v3111 = vpop.f32.mrb[0].mxu0
  %v3112 = vadd.f32 0.0, %v3111
  %v3113 = vpop.f32.mrb[0].mxu0
  %3114 = vdwg.mxu0
  %3115 = vmatprep.subr.bf16.mxu0 0
  %3116 = vmatpush1.bf16.msra.mxu0 %v3026
  %3117 = vmatprep.subr.bf16.mxu0 0
  %3118 = vmatpush1.bf16.msra.mxu0 %v3027
  %3119 = vmatprep.subr.bf16.mxu0 0
  %3120 = vmatpush1.bf16.msra.mxu0 %v3028
  %3121 = vmatprep.subr.bf16.mxu0 0
  %3122 = vmatpush1.bf16.msra.mxu0 %v3029
  %3123 = vmatprep.subr.bf16.mxu0 0
  %3124 = vmatpush1.bf16.msra.mxu0 %v3030
  %3125 = vmatprep.subr.bf16.mxu0 0
  %3126 = vmatpush1.bf16.msra.mxu0 %v3031
  %3127 = vmatprep.subr.bf16.mxu0 0
  %3128 = vmatpush1.bf16.msra.mxu0 %v3032
  %3129 = vmatprep.subr.bf16.mxu0 0
  %3130 = vmatpush1.bf16.msra.mxu0 %v3033
  %3131 = vmatprep.subr.bf16.mxu0 0
  %3132 = vmatpush1.bf16.msra.mxu0 %v3034
  %3133 = vmatprep.subr.bf16.mxu0 0
  %3134 = vmatpush1.bf16.msra.mxu0 %v3035
  %3135 = vmatprep.subr.bf16.mxu0 0
  %3136 = vmatpush1.bf16.msra.mxu0 %v3036
  %3137 = vmatprep.subr.bf16.mxu0 0
  %3138 = vmatpush1.bf16.msra.mxu0 %v3037
  %3139 = vmatprep.subr.bf16.mxu0 0
  %3140 = vmatpush1.bf16.msra.mxu0 %v3038
  %3141 = vmatprep.subr.bf16.mxu0 0
  %3142 = vmatpush1.bf16.msra.mxu0 %v3039
  %3143 = vmatprep.subr.bf16.mxu0 0
  %3144 = vmatpush1.bf16.msra.mxu0 %v3040
  %3145 = vmatprep.subr.bf16.mxu0 0
  %3146 = vmatpush1.bf16.msra.mxu0 %v3041
  %3147 = vmatprep.mubr.bf16.mxu0 %v2877
  %3148 = vmatmul.mubr.bf16.gmra.mrb[0].mxu0 %v2865
  %v3149 = vpop.f32.mrb[0].mxu0
  %v3150 = vadd.f32 %v3109, %v3149
  %v3151 = vpop.f32.mrb[0].mxu0
  %v3152 = vpop.f32.mrb[0].mxu0
  %v3153 = vadd.f32 %v3112, %v3152
  %v3154 = vpop.f32.mrb[0].mxu0
  %3155 = vdwg.mxu0
  %v3224 = vunpack.c.l.b16 %v2673
  %v3225 = vunpack.c.l.b16 %v2674
  %v3226 = vunpack.c.l.b16 %v2675
  %v3227 = vunpack.c.l.b16 %v2676
  %v3228 = vunpack.c.l.b16 %v2677
  %v3229 = vunpack.c.l.b16 %v2678
  %v3230 = vunpack.c.l.b16 %v2679
  %v3231 = vunpack.c.l.b16 %v2680
  %v3232 = vunpack.c.l.b16 %v2681
  %v3233 = vunpack.c.l.b16 %v2682
  %v3234 = vunpack.c.l.b16 %v2683
  %v3235 = vunpack.c.l.b16 %v2684
  %v3236 = vunpack.c.l.b16 %v2685
  %v3237 = vunpack.c.l.b16 %v2686
  %v3238 = vunpack.c.l.b16 %v2687
  %v3239 = vunpack.c.l.b16 %v2688
  %v3240 = vunpack.c.l.b16 %v2689
  %v3241 = vunpack.c.l.b16 %v2690
  %v3242 = vunpack.c.l.b16 %v2691
  %v3243 = vunpack.c.l.b16 %v2692
  %v3244 = vunpack.c.l.b16 %v2693
  %v3245 = vunpack.c.l.b16 %v2694
  %v3246 = vunpack.c.l.b16 %v2695
  %v3247 = vunpack.c.l.b16 %v2696
  %v3248 = vunpack.c.l.b16 %v2697
  %v3249 = vunpack.c.l.b16 %v2698
  %v3250 = vunpack.c.l.b16 %v2699
  %v3251 = vunpack.c.l.b16 %v2700
  %v3252 = vunpack.c.l.b16 %v2701
  %v3253 = vunpack.c.l.b16 %v2702
  %v3254 = vunpack.c.l.b16 %v2703
  %v3255 = vunpack.c.l.b16 %v2704
  %v3256 = vunpack.c.l.b16 %v2705
  %v3257 = vunpack.c.l.b16 %v2706
  %v3258 = vunpack.c.l.b16 %v2707
  %v3259 = vunpack.c.l.b16 %v2708
  %v3260 = vunpack.c.l.b16 %v2709
  %v3261 = vunpack.c.l.b16 %v2710
  %v3262 = vunpack.c.l.b16 %v2711
  %v3263 = vunpack.c.l.b16 %v2712
  %v3264 = vunpack.c.l.b16 %v2713
  %v3265 = vunpack.c.l.b16 %v2714
  %v3266 = vunpack.c.l.b16 %v2715
  %v3267 = vunpack.c.l.b16 %v2716
  %v3268 = vunpack.c.l.b16 %v2717
  %v3269 = vunpack.c.l.b16 %v2718
  %v3270 = vunpack.c.l.b16 %v2719
  %v3271 = vunpack.c.l.b16 %v2720
  %v3272 = vunpack.c.l.b16 %v2721
  %v3273 = vunpack.c.l.b16 %v2722
  %v3274 = vunpack.c.l.b16 %v2723
  %v3275 = vunpack.c.l.b16 %v2724
  %v3276 = vunpack.c.l.b16 %v2725
  %v3277 = vunpack.c.l.b16 %v2726
  %v3278 = vunpack.c.l.b16 %v2727
  %v3279 = vunpack.c.l.b16 %v2728
  %v3280 = vunpack.c.l.b16 %v2729
  %v3281 = vunpack.c.l.b16 %v2730
  %v3282 = vunpack.c.l.b16 %v2731
  %v3283 = vunpack.c.l.b16 %v2732
  %v3284 = vunpack.c.l.b16 %v2733
  %v3285 = vunpack.c.l.b16 %v2734
  %v3286 = vunpack.c.l.b16 %v2735
  %v3287 = vunpack.c.l.b16 %v2736
  %v3288 = vpack.c.b16 %v3225, %v3224
  %v3289 = vpack.c.b16 %v3227, %v3226
  %v3290 = vpack.c.b16 %v3229, %v3228
  %v3291 = vpack.c.b16 %v3231, %v3230
  %v3292 = vpack.c.b16 %v3233, %v3232
  %v3293 = vpack.c.b16 %v3235, %v3234
  %v3294 = vpack.c.b16 %v3237, %v3236
  %v3295 = vpack.c.b16 %v3239, %v3238
  %v3296 = vpack.c.b16 %v3241, %v3240
  %v3297 = vpack.c.b16 %v3243, %v3242
  %v3298 = vpack.c.b16 %v3245, %v3244
  %v3299 = vpack.c.b16 %v3247, %v3246
  %v3300 = vpack.c.b16 %v3249, %v3248
  %v3301 = vpack.c.b16 %v3251, %v3250
  %v3302 = vpack.c.b16 %v3253, %v3252
  %v3303 = vpack.c.b16 %v3255, %v3254
  %v3304 = vpack.c.b16 %v3257, %v3256
  %v3305 = vpack.c.b16 %v3259, %v3258
  %v3306 = vpack.c.b16 %v3261, %v3260
  %v3307 = vpack.c.b16 %v3263, %v3262
  %v3308 = vpack.c.b16 %v3265, %v3264
  %v3309 = vpack.c.b16 %v3267, %v3266
  %v3310 = vpack.c.b16 %v3269, %v3268
  %v3311 = vpack.c.b16 %v3271, %v3270
  %v3312 = vpack.c.b16 %v3273, %v3272
  %v3313 = vpack.c.b16 %v3275, %v3274
  %v3314 = vpack.c.b16 %v3277, %v3276
  %v3315 = vpack.c.b16 %v3279, %v3278
  %v3316 = vpack.c.b16 %v3281, %v3280
  %v3317 = vpack.c.b16 %v3283, %v3282
  %v3318 = vpack.c.b16 %v3285, %v3284
  %v3319 = vpack.c.b16 %v3287, %v3286
  %3352 = vmatprep.subr.bf16.mxu0 0
  %3353 = vmatpush1.bf16.msra.mxu0 %v3288
  %3354 = vmatprep.subr.bf16.mxu0 0
  %3355 = vmatpush1.bf16.msra.mxu0 %v3289
  %3356 = vmatprep.subr.bf16.mxu0 0
  %3357 = vmatpush1.bf16.msra.mxu0 %v3290
  %3358 = vmatprep.subr.bf16.mxu0 0
  %3359 = vmatpush1.bf16.msra.mxu0 %v3291
  %3360 = vmatprep.subr.bf16.mxu0 0
  %3361 = vmatpush1.bf16.msra.mxu0 %v3292
  %3362 = vmatprep.subr.bf16.mxu0 0
  %3363 = vmatpush1.bf16.msra.mxu0 %v3293
  %3364 = vmatprep.subr.bf16.mxu0 0
  %3365 = vmatpush1.bf16.msra.mxu0 %v3294
  %3366 = vmatprep.subr.bf16.mxu0 0
  %3367 = vmatpush1.bf16.msra.mxu0 %v3295
  %3368 = vmatprep.subr.bf16.mxu0 0
  %3369 = vmatpush1.bf16.msra.mxu0 %v3296
  %3370 = vmatprep.subr.bf16.mxu0 0
  %3371 = vmatpush1.bf16.msra.mxu0 %v3297
  %3372 = vmatprep.subr.bf16.mxu0 0
  %3373 = vmatpush1.bf16.msra.mxu0 %v3298
  %3374 = vmatprep.subr.bf16.mxu0 0
  %3375 = vmatpush1.bf16.msra.mxu0 %v3299
  %3376 = vmatprep.subr.bf16.mxu0 0
  %3377 = vmatpush1.bf16.msra.mxu0 %v3300
  %3378 = vmatprep.subr.bf16.mxu0 0
  %3379 = vmatpush1.bf16.msra.mxu0 %v3301
  %3380 = vmatprep.subr.bf16.mxu0 0
  %3381 = vmatpush1.bf16.msra.mxu0 %v3302
  %3382 = vmatprep.subr.bf16.mxu0 0
  %3383 = vmatpush1.bf16.msra.mxu0 %v3303
  %3384 = vmatprep.mubr.bf16.mxu0 %v2823
  %3385 = vmatmul.mubr.bf16.gmra.mrb[0].mxu0 %v2822
  %v3386 = vpop.f32.mrb[0].mxu0
  %v3387 = vadd.f32 %v3150, %v3386
  %v3388 = vpop.f32.mrb[0].mxu0
  %v3389 = vpop.f32.mrb[0].mxu0
  %v3390 = vadd.f32 %v3153, %v3389
  %v3391 = vpop.f32.mrb[0].mxu0
  %3392 = vdwg.mxu0
  %3393 = vmatprep.subr.bf16.mxu0 0
  %3394 = vmatpush1.bf16.msra.mxu0 %v3304
  %3395 = vmatprep.subr.bf16.mxu0 0
  %3396 = vmatpush1.bf16.msra.mxu0 %v3305
  %3397 = vmatprep.subr.bf16.mxu0 0
  %3398 = vmatpush1.bf16.msra.mxu0 %v3306
  %3399 = vmatprep.subr.bf16.mxu0 0
  %3400 = vmatpush1.bf16.msra.mxu0 %v3307
  %3401 = vmatprep.subr.bf16.mxu0 0
  %3402 = vmatpush1.bf16.msra.mxu0 %v3308
  %3403 = vmatprep.subr.bf16.mxu0 0
  %3404 = vmatpush1.bf16.msra.mxu0 %v3309
  %3405 = vmatprep.subr.bf16.mxu0 0
  %3406 = vmatpush1.bf16.msra.mxu0 %v3310
  %3407 = vmatprep.subr.bf16.mxu0 0
  %3408 = vmatpush1.bf16.msra.mxu0 %v3311
  %3409 = vmatprep.subr.bf16.mxu0 0
  %3410 = vmatpush1.bf16.msra.mxu0 %v3312
  %3411 = vmatprep.subr.bf16.mxu0 0
  %3412 = vmatpush1.bf16.msra.mxu0 %v3313
  %3413 = vmatprep.subr.bf16.mxu0 0
  %3414 = vmatpush1.bf16.msra.mxu0 %v3314
  %3415 = vmatprep.subr.bf16.mxu0 0
  %3416 = vmatpush1.bf16.msra.mxu0 %v3315
  %3417 = vmatprep.subr.bf16.mxu0 0
  %3418 = vmatpush1.bf16.msra.mxu0 %v3316
  %3419 = vmatprep.subr.bf16.mxu0 0
  %3420 = vmatpush1.bf16.msra.mxu0 %v3317
  %3421 = vmatprep.subr.bf16.mxu0 0
  %3422 = vmatpush1.bf16.msra.mxu0 %v3318
  %3423 = vmatprep.subr.bf16.mxu0 0
  %3424 = vmatpush1.bf16.msra.mxu0 %v3319
  %3425 = vmatprep.mubr.bf16.mxu0 %v2825
  %3426 = vmatmul.mubr.bf16.gmra.mrb[0].mxu0 %v2824
  %v3427 = vpop.f32.mrb[0].mxu0
  %v3428 = vadd.f32 %v3387, %v3427
  %v3429 = vpop.f32.mrb[0].mxu0
  %v3430 = vpop.f32.mrb[0].mxu0
  %v3431 = vadd.f32 %v3390, %v3430
  %v3432 = vpop.f32.mrb[0].mxu0
  %3433 = vdwg.mxu0
  %v3434 = vld [vmem:[#allocation3] sm:$0xee]
  %v3435 = vld [vmem:[#allocation3 + $0x8] sm:$0xee]
  %s3436 = scalar_lea.vmem %s5, 512
  %v3437 = vld [vmem:[%s3436] sm:$0xf]
  %v3438 = vld [vmem:[%s3436 + $0x4] sm:$0xf]
  %v3439 = vld [vmem:[%s3436 + $0x8] sm:$0xf]
  %v3440 = vld [vmem:[%s3436 + $0xc] sm:$0xf]
  %v3441 = vld [vmem:[%s3436 + $0x10] sm:$0xf]
  %v3442 = vld [vmem:[%s3436 + $0x14] sm:$0xf]
  %v3443 = vld [vmem:[%s3436 + $0x18] sm:$0xf]
  %v3444 = vld [vmem:[%s3436 + $0x1c] sm:$0xf]
  %v3445 = vld [vmem:[%s3436 + $0x20] sm:$0xf]
  %v3446 = vld [vmem:[%s3436 + $0x24] sm:$0xf]
  %v3447 = vld [vmem:[%s3436 + $0x28] sm:$0xf]
  %v3448 = vld [vmem:[%s3436 + $0x2c] sm:$0xf]
  %v3449 = vld [vmem:[%s3436 + $0x30] sm:$0xf]
  %v3450 = vld [vmem:[%s3436 + $0x34] sm:$0xf]
  %v3451 = vld [vmem:[%s3436 + $0x38] sm:$0xf]
  %v3452 = vld [vmem:[%s3436 + $0x3c] sm:$0xf]
  %v3453 = vld [vmem:[%s3436 + $0x40] sm:$0xf]
  %v3454 = vld [vmem:[%s3436 + $0x44] sm:$0xf]
  %v3455 = vld [vmem:[%s3436 + $0x48] sm:$0xf]
  %v3456 = vld [vmem:[%s3436 + $0x4c] sm:$0xf]
  %v3457 = vld [vmem:[%s3436 + $0x50] sm:$0xf]
  %v3458 = vld [vmem:[%s3436 + $0x54] sm:$0xf]
  %v3459 = vld [vmem:[%s3436 + $0x58] sm:$0xf]
  %v3460 = vld [vmem:[%s3436 + $0x5c] sm:$0xf]
  %v3461 = vld [vmem:[%s3436 + $0x60] sm:$0xf]
  %v3462 = vld [vmem:[%s3436 + $0x64] sm:$0xf]
  %v3463 = vld [vmem:[%s3436 + $0x68] sm:$0xf]
  %v3464 = vld [vmem:[%s3436 + $0x6c] sm:$0xf]
  %v3465 = vld [vmem:[%s3436 + $0x70] sm:$0xf]
  %v3466 = vld [vmem:[%s3436 + $0x74] sm:$0xf]
  %v3467 = vld [vmem:[%s3436 + $0x78] sm:$0xf]
  %v3468 = vld [vmem:[%s3436 + $0x7c] sm:$0xf]
  %v3469 = vld [vmem:[%s3436 + $0x80] sm:$0xf]
  %v3470 = vld [vmem:[%s3436 + $0x84] sm:$0xf]
  %v3471 = vld [vmem:[%s3436 + $0x88] sm:$0xf]
  %v3472 = vld [vmem:[%s3436 + $0x8c] sm:$0xf]
  %v3473 = vld [vmem:[%s3436 + $0x90] sm:$0xf]
  %v3474 = vld [vmem:[%s3436 + $0x94] sm:$0xf]
  %v3475 = vld [vmem:[%s3436 + $0x98] sm:$0xf]
  %v3476 = vld [vmem:[%s3436 + $0x9c] sm:$0xf]
  %v3477 = vld [vmem:[%s3436 + $0xa0] sm:$0xf]
  %v3478 = vld [vmem:[%s3436 + $0xa4] sm:$0xf]
  %v3479 = vld [vmem:[%s3436 + $0xa8] sm:$0xf]
  %v3480 = vld [vmem:[%s3436 + $0xac] sm:$0xf]
  %v3481 = vld [vmem:[%s3436 + $0xb0] sm:$0xf]
  %v3482 = vld [vmem:[%s3436 + $0xb4] sm:$0xf]
  %v3483 = vld [vmem:[%s3436 + $0xb8] sm:$0xf]
  %v3484 = vld [vmem:[%s3436 + $0xbc] sm:$0xf]
  %v3485 = vld [vmem:[%s3436 + $0xc0] sm:$0xf]
  %v3486 = vld [vmem:[%s3436 + $0xc4] sm:$0xf]
  %v3487 = vld [vmem:[%s3436 + $0xc8] sm:$0xf]
  %v3488 = vld [vmem:[%s3436 + $0xcc] sm:$0xf]
  %v3489 = vld [vmem:[%s3436 + $0xd0] sm:$0xf]
  %v3490 = vld [vmem:[%s3436 + $0xd4] sm:$0xf]
  %v3491 = vld [vmem:[%s3436 + $0xd8] sm:$0xf]
  %v3492 = vld [vmem:[%s3436 + $0xdc] sm:$0xf]
  %v3493 = vld [vmem:[%s3436 + $0xe0] sm:$0xf]
  %v3494 = vld [vmem:[%s3436 + $0xe4] sm:$0xf]
  %v3495 = vld [vmem:[%s3436 + $0xe8] sm:$0xf]
  %v3496 = vld [vmem:[%s3436 + $0xec] sm:$0xf]
  %v3497 = vld [vmem:[%s3436 + $0xf0] sm:$0xf]
  %v3498 = vld [vmem:[%s3436 + $0xf4] sm:$0xf]
  %v3499 = vld [vmem:[%s3436 + $0xf8] sm:$0xf]
  %v3500 = vld [vmem:[%s3436 + $0xfc] sm:$0xf]
  %v3503 = vunpack.c.l.b16 %v3434
  %v3504 = vunpack.c.h.b16 %v3434
  %v3505 = vunpack.c.l.b16 %v3435
  %v3506 = vunpack.c.h.b16 %v3435
  %v3507 = vpack.c.b16 %v2814, %v3503
  %v3508 = vpack.c.b16 %v2815, %v3504
  %v3509 = vpack.c.b16 %v2816, %v3505
  %v3510 = vpack.c.b16 %v2817, %v3506
  %v3511 = vrot.slane %v3507, 1
  %v3512 = vrot.slane %v2826, 1
  %v3513 = vsel %vm534, %v3511, %v3512
  %v3514 = vrot.slane %v3508, 1
  %v3515 = vrot.slane %v2827, 1
  %v3516 = vsel %vm534, %v3514, %v3515
  %v3517 = vrot.slane %v3509, 1
  %v3518 = vrot.slane %v2828, 1
  %v3519 = vsel %vm534, %v3517, %v3518
  %v3520 = vrot.slane %v3510, 1
  %v3521 = vrot.slane %v2829, 1
  %v3522 = vsel %vm534, %v3520, %v3521
  %v3591 = vunpack.c.l.b16 %v3437
  %v3592 = vunpack.c.l.b16 %v3438
  %v3593 = vunpack.c.l.b16 %v3439
  %v3594 = vunpack.c.l.b16 %v3440
  %v3595 = vunpack.c.l.b16 %v3441
  %v3596 = vunpack.c.l.b16 %v3442
  %v3597 = vunpack.c.l.b16 %v3443
  %v3598 = vunpack.c.l.b16 %v3444
  %v3599 = vunpack.c.l.b16 %v3445
  %v3600 = vunpack.c.l.b16 %v3446
  %v3601 = vunpack.c.l.b16 %v3447
  %v3602 = vunpack.c.l.b16 %v3448
  %v3603 = vunpack.c.l.b16 %v3449
  %v3604 = vunpack.c.l.b16 %v3450
  %v3605 = vunpack.c.l.b16 %v3451
  %v3606 = vunpack.c.l.b16 %v3452
  %v3607 = vunpack.c.l.b16 %v3453
  %v3608 = vunpack.c.l.b16 %v3454
  %v3609 = vunpack.c.l.b16 %v3455
  %v3610 = vunpack.c.l.b16 %v3456
  %v3611 = vunpack.c.l.b16 %v3457
  %v3612 = vunpack.c.l.b16 %v3458
  %v3613 = vunpack.c.l.b16 %v3459
  %v3614 = vunpack.c.l.b16 %v3460
  %v3615 = vunpack.c.l.b16 %v3461
  %v3616 = vunpack.c.l.b16 %v3462
  %v3617 = vunpack.c.l.b16 %v3463
  %v3618 = vunpack.c.l.b16 %v3464
  %v3619 = vunpack.c.l.b16 %v3465
  %v3620 = vunpack.c.l.b16 %v3466
  %v3621 = vunpack.c.l.b16 %v3467
  %v3622 = vunpack.c.l.b16 %v3468
  %v3623 = vunpack.c.l.b16 %v3469
  %v3624 = vunpack.c.l.b16 %v3470
  %v3625 = vunpack.c.l.b16 %v3471
  %v3626 = vunpack.c.l.b16 %v3472
  %v3627 = vunpack.c.l.b16 %v3473
  %v3628 = vunpack.c.l.b16 %v3474
  %v3629 = vunpack.c.l.b16 %v3475
  %v3630 = vunpack.c.l.b16 %v3476
  %v3631 = vunpack.c.l.b16 %v3477
  %v3632 = vunpack.c.l.b16 %v3478
  %v3633 = vunpack.c.l.b16 %v3479
  %v3634 = vunpack.c.l.b16 %v3480
  %v3635 = vunpack.c.l.b16 %v3481
  %v3636 = vunpack.c.l.b16 %v3482
  %v3637 = vunpack.c.l.b16 %v3483
  %v3638 = vunpack.c.l.b16 %v3484
  %v3639 = vunpack.c.l.b16 %v3485
  %v3640 = vunpack.c.l.b16 %v3486
  %v3641 = vunpack.c.l.b16 %v3487
  %v3642 = vunpack.c.l.b16 %v3488
  %v3643 = vunpack.c.l.b16 %v3489
  %v3644 = vunpack.c.l.b16 %v3490
  %v3645 = vunpack.c.l.b16 %v3491
  %v3646 = vunpack.c.l.b16 %v3492
  %v3647 = vunpack.c.l.b16 %v3493
  %v3648 = vunpack.c.l.b16 %v3494
  %v3649 = vunpack.c.l.b16 %v3495
  %v3650 = vunpack.c.l.b16 %v3496
  %v3651 = vunpack.c.l.b16 %v3497
  %v3652 = vunpack.c.l.b16 %v3498
  %v3653 = vunpack.c.l.b16 %v3499
  %v3654 = vunpack.c.l.b16 %v3500
  %v3655 = vpack.c.b16 %v3592, %v3591
  %v3656 = vpack.c.b16 %v3594, %v3593
  %v3657 = vpack.c.b16 %v3596, %v3595
  %v3658 = vpack.c.b16 %v3598, %v3597
  %v3659 = vpack.c.b16 %v3600, %v3599
  %v3660 = vpack.c.b16 %v3602, %v3601
  %v3661 = vpack.c.b16 %v3604, %v3603
  %v3662 = vpack.c.b16 %v3606, %v3605
  %v3663 = vpack.c.b16 %v3608, %v3607
  %v3664 = vpack.c.b16 %v3610, %v3609
  %v3665 = vpack.c.b16 %v3612, %v3611
  %v3666 = vpack.c.b16 %v3614, %v3613
  %v3667 = vpack.c.b16 %v3616, %v3615
  %v3668 = vpack.c.b16 %v3618, %v3617
  %v3669 = vpack.c.b16 %v3620, %v3619
  %v3670 = vpack.c.b16 %v3622, %v3621
  %v3671 = vpack.c.b16 %v3624, %v3623
  %v3672 = vpack.c.b16 %v3626, %v3625
  %v3673 = vpack.c.b16 %v3628, %v3627
  %v3674 = vpack.c.b16 %v3630, %v3629
  %v3675 = vpack.c.b16 %v3632, %v3631
  %v3676 = vpack.c.b16 %v3634, %v3633
  %v3677 = vpack.c.b16 %v3636, %v3635
  %v3678 = vpack.c.b16 %v3638, %v3637
  %v3679 = vpack.c.b16 %v3640, %v3639
  %v3680 = vpack.c.b16 %v3642, %v3641
  %v3681 = vpack.c.b16 %v3644, %v3643
  %v3682 = vpack.c.b16 %v3646, %v3645
  %v3683 = vpack.c.b16 %v3648, %v3647
  %v3684 = vpack.c.b16 %v3650, %v3649
  %v3685 = vpack.c.b16 %v3652, %v3651
  %v3686 = vpack.c.b16 %v3654, %v3653
  %3719 = vmatprep.subr.bf16.mxu0 0
  %3720 = vmatpush1.bf16.msra.mxu0 %v3655
  %3721 = vmatprep.subr.bf16.mxu0 0
  %3722 = vmatpush1.bf16.msra.mxu0 %v3656
  %3723 = vmatprep.subr.bf16.mxu0 0
  %3724 = vmatpush1.bf16.msra.mxu0 %v3657
  %3725 = vmatprep.subr.bf16.mxu0 0
  %3726 = vmatpush1.bf16.msra.mxu0 %v3658
  %3727 = vmatprep.subr.bf16.mxu0 0
  %3728 = vmatpush1.bf16.msra.mxu0 %v3659
  %3729 = vmatprep.subr.bf16.mxu0 0
  %3730 = vmatpush1.bf16.msra.mxu0 %v3660
  %3731 = vmatprep.subr.bf16.mxu0 0
  %3732 = vmatpush1.bf16.msra.mxu0 %v3661
  %3733 = vmatprep.subr.bf16.mxu0 0
  %3734 = vmatpush1.bf16.msra.mxu0 %v3662
  %3735 = vmatprep.subr.bf16.mxu0 0
  %3736 = vmatpush1.bf16.msra.mxu0 %v3663
  %3737 = vmatprep.subr.bf16.mxu0 0
  %3738 = vmatpush1.bf16.msra.mxu0 %v3664
  %3739 = vmatprep.subr.bf16.mxu0 0
  %3740 = vmatpush1.bf16.msra.mxu0 %v3665
  %3741 = vmatprep.subr.bf16.mxu0 0
  %3742 = vmatpush1.bf16.msra.mxu0 %v3666
  %3743 = vmatprep.subr.bf16.mxu0 0
  %3744 = vmatpush1.bf16.msra.mxu0 %v3667
  %3745 = vmatprep.subr.bf16.mxu0 0
  %3746 = vmatpush1.bf16.msra.mxu0 %v3668
  %3747 = vmatprep.subr.bf16.mxu0 0
  %3748 = vmatpush1.bf16.msra.mxu0 %v3669
  %3749 = vmatprep.subr.bf16.mxu0 0
  %3750 = vmatpush1.bf16.msra.mxu0 %v3670
  %3751 = vmatprep.mubr.bf16.mxu0 %v3516
  %3752 = vmatmul.mubr.bf16.gmra.mrb[0].mxu0 %v3513
  %v3753 = vpop.f32.mrb[0].mxu0
  %v3754 = vadd.f32 0.0, %v3753
  %v3755 = vpop.f32.mrb[0].mxu0
  %v3756 = vpop.f32.mrb[0].mxu0
  %v3757 = vadd.f32 0.0, %v3756
  %v3758 = vpop.f32.mrb[0].mxu0
  %3759 = vdwg.mxu0
  %3760 = vmatprep.subr.bf16.mxu0 0
  %3761 = vmatpush1.bf16.msra.mxu0 %v3671
  %3762 = vmatprep.subr.bf16.mxu0 0
  %3763 = vmatpush1.bf16.msra.mxu0 %v3672
  %3764 = vmatprep.subr.bf16.mxu0 0
  %3765 = vmatpush1.bf16.msra.mxu0 %v3673
  %3766 = vmatprep.subr.bf16.mxu0 0
  %3767 = vmatpush1.bf16.msra.mxu0 %v3674
  %3768 = vmatprep.subr.bf16.mxu0 0
  %3769 = vmatpush1.bf16.msra.mxu0 %v3675
  %3770 = vmatprep.subr.bf16.mxu0 0
  %3771 = vmatpush1.bf16.msra.mxu0 %v3676
  %3772 = vmatprep.subr.bf16.mxu0 0
  %3773 = vmatpush1.bf16.msra.mxu0 %v3677
  %3774 = vmatprep.subr.bf16.mxu0 0
  %3775 = vmatpush1.bf16.msra.mxu0 %v3678
  %3776 = vmatprep.subr.bf16.mxu0 0
  %3777 = vmatpush1.bf16.msra.mxu0 %v3679
  %3778 = vmatprep.subr.bf16.mxu0 0
  %3779 = vmatpush1.bf16.msra.mxu0 %v3680
  %3780 = vmatprep.subr.bf16.mxu0 0
  %3781 = vmatpush1.bf16.msra.mxu0 %v3681
  %3782 = vmatprep.subr.bf16.mxu0 0
  %3783 = vmatpush1.bf16.msra.mxu0 %v3682
  %3784 = vmatprep.subr.bf16.mxu0 0
  %3785 = vmatpush1.bf16.msra.mxu0 %v3683
  %3786 = vmatprep.subr.bf16.mxu0 0
  %3787 = vmatpush1.bf16.msra.mxu0 %v3684
  %3788 = vmatprep.subr.bf16.mxu0 0
  %3789 = vmatpush1.bf16.msra.mxu0 %v3685
  %3790 = vmatprep.subr.bf16.mxu0 0
  %3791 = vmatpush1.bf16.msra.mxu0 %v3686
  %3792 = vmatprep.mubr.bf16.mxu0 %v3522
  %3793 = vmatmul.mubr.bf16.gmra.mrb[0].mxu0 %v3519
  %v3794 = vpop.f32.mrb[0].mxu0
  %v3795 = vadd.f32 %v3754, %v3794
  %v3796 = vpop.f32.mrb[0].mxu0
  %v3797 = vpop.f32.mrb[0].mxu0
  %v3798 = vadd.f32 %v3757, %v3797
  %v3799 = vpop.f32.mrb[0].mxu0
  %3800 = vdwg.mxu0
  %v3801 = vadd.f32 %v3428, %v3795
  %v3802 = vadd.f32 %v3431, %v3798
  %v3803 = vld [vmem:[%s6] sm:$0xff]
  %v3804 = vld [vmem:[%s6 + $0x8] sm:$0xff]
  %v3805 = vadd.f32 %v3801, %v3803
  %v3806 = vadd.f32 %v3802, %v3804
  %3807 = vst [vmem:[%s7] sm:$0xff] %v3805
  %3808 = vst [vmem:[%s7 + $0x8] sm:$0xff] %v3806
  %v3809 = vld [vmem:[#allocation3 + $0x20] sm:$0xee]
  %v3810 = vld [vmem:[#allocation3 + $0x28] sm:$0xee]
  %v3811 = vld [vmem:[#allocation3 + $0x30] sm:$0xff]
  %v3812 = vld [vmem:[#allocation3 + $0x38] sm:$0xff]
  %v3813 = vld [vmem:[#allocation3 + $0x40] sm:$0x11]
  %v3814 = vld [vmem:[#allocation3 + $0x48] sm:$0x11]
  %v3815 = vld [vmem:[%s5] sm:$0xf]
  %v3816 = vld [vmem:[%s5 + $0x4] sm:$0xf]
  %v3817 = vld [vmem:[%s5 + $0x8] sm:$0xf]
  %v3818 = vld [vmem:[%s5 + $0xc] sm:$0xf]
  %v3819 = vld [vmem:[%s5 + $0x10] sm:$0xf]
  %v3820 = vld [vmem:[%s5 + $0x14] sm:$0xf]
  %v3821 = vld [vmem:[%s5 + $0x18] sm:$0xf]
  %v3822 = vld [vmem:[%s5 + $0x1c] sm:$0xf]
  %v3823 = vld [vmem:[%s5 + $0x20] sm:$0xf]
  %v3824 = vld [vmem:[%s5 + $0x24] sm:$0xf]
  %v3825 = vld [vmem:[%s5 + $0x28] sm:$0xf]
  %v3826 = vld [vmem:[%s5 + $0x2c] sm:$0xf]
  %v3827 = vld [vmem:[%s5 + $0x30] sm:$0xf]
  %v3828 = vld [vmem:[%s5 + $0x34] sm:$0xf]
  %v3829 = vld [vmem:[%s5 + $0x38] sm:$0xf]
  %v3830 = vld [vmem:[%s5 + $0x3c] sm:$0xf]
  %v3831 = vld [vmem:[%s5 + $0x40] sm:$0xf]
  %v3832 = vld [vmem:[%s5 + $0x44] sm:$0xf]
  %v3833 = vld [vmem:[%s5 + $0x48] sm:$0xf]
  %v3834 = vld [vmem:[%s5 + $0x4c] sm:$0xf]
  %v3835 = vld [vmem:[%s5 + $0x50] sm:$0xf]
  %v3836 = vld [vmem:[%s5 + $0x54] sm:$0xf]
  %v3837 = vld [vmem:[%s5 + $0x58] sm:$0xf]
  %v3838 = vld [vmem:[%s5 + $0x5c] sm:$0xf]
  %v3839 = vld [vmem:[%s5 + $0x60] sm:$0xf]
  %v3840 = vld [vmem:[%s5 + $0x64] sm:$0xf]
  %v3841 = vld [vmem:[%s5 + $0x68] sm:$0xf]
  %v3842 = vld [vmem:[%s5 + $0x6c] sm:$0xf]
  %v3843 = vld [vmem:[%s5 + $0x70] sm:$0xf]
  %v3844 = vld [vmem:[%s5 + $0x74] sm:$0xf]
  %v3845 = vld [vmem:[%s5 + $0x78] sm:$0xf]
  %v3846 = vld [vmem:[%s5 + $0x7c] sm:$0xf]
  %v3847 = vld [vmem:[%s5 + $0x80] sm:$0xf]
  %v3848 = vld [vmem:[%s5 + $0x84] sm:$0xf]
  %v3849 = vld [vmem:[%s5 + $0x88] sm:$0xf]
  %v3850 = vld [vmem:[%s5 + $0x8c] sm:$0xf]
  %v3851 = vld [vmem:[%s5 + $0x90] sm:$0xf]
  %v3852 = vld [vmem:[%s5 + $0x94] sm:$0xf]
  %v3853 = vld [vmem:[%s5 + $0x98] sm:$0xf]
  %v3854 = vld [vmem:[%s5 + $0x9c] sm:$0xf]
  %v3855 = vld [vmem:[%s5 + $0xa0] sm:$0xf]
  %v3856 = vld [vmem:[%s5 + $0xa4] sm:$0xf]
  %v3857 = vld [vmem:[%s5 + $0xa8] sm:$0xf]
  %v3858 = vld [vmem:[%s5 + $0xac] sm:$0xf]
  %v3859 = vld [vmem:[%s5 + $0xb0] sm:$0xf]
  %v3860 = vld [vmem:[%s5 + $0xb4] sm:$0xf]
  %v3861 = vld [vmem:[%s5 + $0xb8] sm:$0xf]
  %v3862 = vld [vmem:[%s5 + $0xbc] sm:$0xf]
  %v3863 = vld [vmem:[%s5 + $0xc0] sm:$0xf]
  %v3864 = vld [vmem:[%s5 + $0xc4] sm:$0xf]
  %v3865 = vld [vmem:[%s5 + $0xc8] sm:$0xf]
  %v3866 = vld [vmem:[%s5 + $0xcc] sm:$0xf]
  %v3867 = vld [vmem:[%s5 + $0xd0] sm:$0xf]
  %v3868 = vld [vmem:[%s5 + $0xd4] sm:$0xf]
  %v3869 = vld [vmem:[%s5 + $0xd8] sm:$0xf]
  %v3870 = vld [vmem:[%s5 + $0xdc] sm:$0xf]
  %v3871 = vld [vmem:[%s5 + $0xe0] sm:$0xf]
  %v3872 = vld [vmem:[%s5 + $0xe4] sm:$0xf]
  %v3873 = vld [vmem:[%s5 + $0xe8] sm:$0xf]
  %v3874 = vld [vmem:[%s5 + $0xec] sm:$0xf]
  %v3875 = vld [vmem:[%s5 + $0xf0] sm:$0xf]
  %v3876 = vld [vmem:[%s5 + $0xf4] sm:$0xf]
  %v3877 = vld [vmem:[%s5 + $0xf8] sm:$0xf]
  %v3878 = vld [vmem:[%s5 + $0xfc] sm:$0xf]
  %v3879 = vld [vmem:[#allocation3 + $0x40] sm:$0x33]
  %v3880 = vld [vmem:[#allocation3 + $0x48] sm:$0x33]
  %v3881 = vld [vmem:[%s2739] sm:$0xf]
  %v3882 = vld [vmem:[%s2739 + $0x4] sm:$0xf]
  %v3883 = vld [vmem:[%s2739 + $0x8] sm:$0xf]
  %v3884 = vld [vmem:[%s2739 + $0xc] sm:$0xf]
  %v3885 = vld [vmem:[%s2739 + $0x10] sm:$0xf]
  %v3886 = vld [vmem:[%s2739 + $0x14] sm:$0xf]
  %v3887 = vld [vmem:[%s2739 + $0x18] sm:$0xf]
  %v3888 = vld [vmem:[%s2739 + $0x1c] sm:$0xf]
  %v3889 = vld [vmem:[%s2739 + $0x20] sm:$0xf]
  %v3890 = vld [vmem:[%s2739 + $0x24] sm:$0xf]
  %v3891 = vld [vmem:[%s2739 + $0x28] sm:$0xf]
  %v3892 = vld [vmem:[%s2739 + $0x2c] sm:$0xf]
  %v3893 = vld [vmem:[%s2739 + $0x30] sm:$0xf]
  %v3894 = vld [vmem:[%s2739 + $0x34] sm:$0xf]
  %v3895 = vld [vmem:[%s2739 + $0x38] sm:$0xf]
  %v3896 = vld [vmem:[%s2739 + $0x3c] sm:$0xf]
  %v3897 = vld [vmem:[%s2739 + $0x40] sm:$0xf]
  %v3898 = vld [vmem:[%s2739 + $0x44] sm:$0xf]
  %v3899 = vld [vmem:[%s2739 + $0x48] sm:$0xf]
  %v3900 = vld [vmem:[%s2739 + $0x4c] sm:$0xf]
  %v3901 = vld [vmem:[%s2739 + $0x50] sm:$0xf]
  %v3902 = vld [vmem:[%s2739 + $0x54] sm:$0xf]
  %v3903 = vld [vmem:[%s2739 + $0x58] sm:$0xf]
  %v3904 = vld [vmem:[%s2739 + $0x5c] sm:$0xf]
  %v3905 = vld [vmem:[%s2739 + $0x60] sm:$0xf]
  %v3906 = vld [vmem:[%s2739 + $0x64] sm:$0xf]
  %v3907 = vld [vmem:[%s2739 + $0x68] sm:$0xf]
  %v3908 = vld [vmem:[%s2739 + $0x6c] sm:$0xf]
  %v3909 = vld [vmem:[%s2739 + $0x70] sm:$0xf]
  %v3910 = vld [vmem:[%s2739 + $0x74] sm:$0xf]
  %v3911 = vld [vmem:[%s2739 + $0x78] sm:$0xf]
  %v3912 = vld [vmem:[%s2739 + $0x7c] sm:$0xf]
  %v3913 = vld [vmem:[%s2739 + $0x80] sm:$0xf]
  %v3914 = vld [vmem:[%s2739 + $0x84] sm:$0xf]
  %v3915 = vld [vmem:[%s2739 + $0x88] sm:$0xf]
  %v3916 = vld [vmem:[%s2739 + $0x8c] sm:$0xf]
  %v3917 = vld [vmem:[%s2739 + $0x90] sm:$0xf]
  %v3918 = vld [vmem:[%s2739 + $0x94] sm:$0xf]
  %v3919 = vld [vmem:[%s2739 + $0x98] sm:$0xf]
  %v3920 = vld [vmem:[%s2739 + $0x9c] sm:$0xf]
  %v3921 = vld [vmem:[%s2739 + $0xa0] sm:$0xf]
  %v3922 = vld [vmem:[%s2739 + $0xa4] sm:$0xf]
  %v3923 = vld [vmem:[%s2739 + $0xa8] sm:$0xf]
  %v3924 = vld [vmem:[%s2739 + $0xac] sm:$0xf]
  %v3925 = vld [vmem:[%s2739 + $0xb0] sm:$0xf]
  %v3926 = vld [vmem:[%s2739 + $0xb4] sm:$0xf]
  %v3927 = vld [vmem:[%s2739 + $0xb8] sm:$0xf]
  %v3928 = vld [vmem:[%s2739 + $0xbc] sm:$0xf]
  %v3929 = vld [vmem:[%s2739 + $0xc0] sm:$0xf]
  %v3930 = vld [vmem:[%s2739 + $0xc4] sm:$0xf]
  %v3931 = vld [vmem:[%s2739 + $0xc8] sm:$0xf]
  %v3932 = vld [vmem:[%s2739 + $0xcc] sm:$0xf]
  %v3933 = vld [vmem:[%s2739 + $0xd0] sm:$0xf]
  %v3934 = vld [vmem:[%s2739 + $0xd4] sm:$0xf]
  %v3935 = vld [vmem:[%s2739 + $0xd8] sm:$0xf]
  %v3936 = vld [vmem:[%s2739 + $0xdc] sm:$0xf]
  %v3937 = vld [vmem:[%s2739 + $0xe0] sm:$0xf]
  %v3938 = vld [vmem:[%s2739 + $0xe4] sm:$0xf]
  %v3939 = vld [vmem:[%s2739 + $0xe8] sm:$0xf]
  %v3940 = vld [vmem:[%s2739 + $0xec] sm:$0xf]
  %v3941 = vld [vmem:[%s2739 + $0xf0] sm:$0xf]
  %v3942 = vld [vmem:[%s2739 + $0xf4] sm:$0xf]
  %v3943 = vld [vmem:[%s2739 + $0xf8] sm:$0xf]
  %v3944 = vld [vmem:[%s2739 + $0xfc] sm:$0xf]
  %v3951 = vunpack.c.l.b16 %v3809
  %v3952 = vunpack.c.h.b16 %v3809
  %v3953 = vunpack.c.l.b16 %v3810
  %v3954 = vunpack.c.h.b16 %v3810
  %v3955 = vunpack.c.l.b16 %v3811
  %v3956 = vunpack.c.h.b16 %v3811
  %v3957 = vunpack.c.l.b16 %v3812
  %v3958 = vunpack.c.h.b16 %v3812
  %v3959 = vunpack.c.l.b16 %v3879
  %v3960 = vunpack.c.h.b16 %v3879
  %v3961 = vunpack.c.l.b16 %v3880
  %v3962 = vunpack.c.h.b16 %v3880
  %v3963 = vpack.c.b16 %v3955, %v3951
  %v3964 = vpack.c.b16 %v3956, %v3952
  %v3965 = vpack.c.b16 %v3957, %v3953
  %v3966 = vpack.c.b16 %v3958, %v3954
  %v3967 = vpack.c.b16 %v3959, %v3959
  %v3968 = vpack.c.b16 %v3960, %v3960
  %v3969 = vpack.c.b16 %v3961, %v3961
  %v3970 = vpack.c.b16 %v3962, %v3962
  %vm3971 = vsmask.f32 6400
  %v3973 = vshrl.u32 %v3963, 16
  %v3975 = vrot.slane %v3973, 1
  %v3976 = vshll.u32 %v3963, 16
  %v3978 = vrot.slane %v3976, 2
  %v3979 = vor.u32 %v3975, %v3978
  %v3981 = vshrl.u32 %v3967, 16
  %v3983 = vrot.slane %v3981, 1
  %v3984 = vshll.u32 %v3967, 16
  %v3986 = vrot.slane %v3984, 2
  %v3987 = vor.u32 %v3983, %v3986
  %v3988 = vsel %vm3971, %v3979, %v3987
  %v3990 = vshrl.u32 %v3964, 16
  %v3992 = vrot.slane %v3990, 1
  %v3993 = vshll.u32 %v3964, 16
  %v3995 = vrot.slane %v3993, 2
  %v3996 = vor.u32 %v3992, %v3995
  %v3998 = vshrl.u32 %v3968, 16
  %v4000 = vrot.slane %v3998, 1
  %v4001 = vshll.u32 %v3968, 16
  %v4003 = vrot.slane %v4001, 2
  %v4004 = vor.u32 %v4000, %v4003
  %v4005 = vsel %vm3971, %v3996, %v4004
  %v4007 = vshrl.u32 %v3965, 16
  %v4009 = vrot.slane %v4007, 1
  %v4010 = vshll.u32 %v3965, 16
  %v4012 = vrot.slane %v4010, 2
  %v4013 = vor.u32 %v4009, %v4012
  %v4015 = vshrl.u32 %v3969, 16
  %v4017 = vrot.slane %v4015, 1
  %v4018 = vshll.u32 %v3969, 16
  %v4020 = vrot.slane %v4018, 2
  %v4021 = vor.u32 %v4017, %v4020
  %v4022 = vsel %vm3971, %v4013, %v4021
  %v4024 = vshrl.u32 %v3966, 16
  %v4026 = vrot.slane %v4024, 1
  %v4027 = vshll.u32 %v3966, 16
  %v4029 = vrot.slane %v4027, 2
  %v4030 = vor.u32 %v4026, %v4029
  %v4032 = vshrl.u32 %v3970, 16
  %v4034 = vrot.slane %v4032, 1
  %v4035 = vshll.u32 %v3970, 16
  %v4037 = vrot.slane %v4035, 2
  %v4038 = vor.u32 %v4034, %v4037
  %v4039 = vsel %vm3971, %v4030, %v4038
  %v4108 = vunpack.c.l.b16 %v3881
  %v4109 = vunpack.c.l.b16 %v3882
  %v4110 = vunpack.c.l.b16 %v3883
  %v4111 = vunpack.c.l.b16 %v3884
  %v4112 = vunpack.c.l.b16 %v3885
  %v4113 = vunpack.c.l.b16 %v3886
  %v4114 = vunpack.c.l.b16 %v3887
  %v4115 = vunpack.c.l.b16 %v3888
  %v4116 = vunpack.c.l.b16 %v3889
  %v4117 = vunpack.c.l.b16 %v3890
  %v4118 = vunpack.c.l.b16 %v3891
  %v4119 = vunpack.c.l.b16 %v3892
  %v4120 = vunpack.c.l.b16 %v3893
  %v4121 = vunpack.c.l.b16 %v3894
  %v4122 = vunpack.c.l.b16 %v3895
  %v4123 = vunpack.c.l.b16 %v3896
  %v4124 = vunpack.c.l.b16 %v3897
  %v4125 = vunpack.c.l.b16 %v3898
  %v4126 = vunpack.c.l.b16 %v3899
  %v4127 = vunpack.c.l.b16 %v3900
  %v4128 = vunpack.c.l.b16 %v3901
  %v4129 = vunpack.c.l.b16 %v3902
  %v4130 = vunpack.c.l.b16 %v3903
  %v4131 = vunpack.c.l.b16 %v3904
  %v4132 = vunpack.c.l.b16 %v3905
  %v4133 = vunpack.c.l.b16 %v3906
  %v4134 = vunpack.c.l.b16 %v3907
  %v4135 = vunpack.c.l.b16 %v3908
  %v4136 = vunpack.c.l.b16 %v3909
  %v4137 = vunpack.c.l.b16 %v3910
  %v4138 = vunpack.c.l.b16 %v3911
  %v4139 = vunpack.c.l.b16 %v3912
  %v4140 = vunpack.c.l.b16 %v3913
  %v4141 = vunpack.c.l.b16 %v3914
  %v4142 = vunpack.c.l.b16 %v3915
  %v4143 = vunpack.c.l.b16 %v3916
  %v4144 = vunpack.c.l.b16 %v3917
  %v4145 = vunpack.c.l.b16 %v3918
  %v4146 = vunpack.c.l.b16 %v3919
  %v4147 = vunpack.c.l.b16 %v3920
  %v4148 = vunpack.c.l.b16 %v3921
  %v4149 = vunpack.c.l.b16 %v3922
  %v4150 = vunpack.c.l.b16 %v3923
  %v4151 = vunpack.c.l.b16 %v3924
  %v4152 = vunpack.c.l.b16 %v3925
  %v4153 = vunpack.c.l.b16 %v3926
  %v4154 = vunpack.c.l.b16 %v3927
  %v4155 = vunpack.c.l.b16 %v3928
  %v4156 = vunpack.c.l.b16 %v3929
  %v4157 = vunpack.c.l.b16 %v3930
  %v4158 = vunpack.c.l.b16 %v3931
  %v4159 = vunpack.c.l.b16 %v3932
  %v4160 = vunpack.c.l.b16 %v3933
  %v4161 = vunpack.c.l.b16 %v3934
  %v4162 = vunpack.c.l.b16 %v3935
  %v4163 = vunpack.c.l.b16 %v3936
  %v4164 = vunpack.c.l.b16 %v3937
  %v4165 = vunpack.c.l.b16 %v3938
  %v4166 = vunpack.c.l.b16 %v3939
  %v4167 = vunpack.c.l.b16 %v3940
  %v4168 = vunpack.c.l.b16 %v3941
  %v4169 = vunpack.c.l.b16 %v3942
  %v4170 = vunpack.c.l.b16 %v3943
  %v4171 = vunpack.c.l.b16 %v3944
  %v4172 = vpack.c.b16 %v4109, %v4108
  %v4173 = vpack.c.b16 %v4111, %v4110
  %v4174 = vpack.c.b16 %v4113, %v4112
  %v4175 = vpack.c.b16 %v4115, %v4114
  %v4176 = vpack.c.b16 %v4117, %v4116
  %v4177 = vpack.c.b16 %v4119, %v4118
  %v4178 = vpack.c.b16 %v4121, %v4120
  %v4179 = vpack.c.b16 %v4123, %v4122
  %v4180 = vpack.c.b16 %v4125, %v4124
  %v4181 = vpack.c.b16 %v4127, %v4126
  %v4182 = vpack.c.b16 %v4129, %v4128
  %v4183 = vpack.c.b16 %v4131, %v4130
  %v4184 = vpack.c.b16 %v4133, %v4132
  %v4185 = vpack.c.b16 %v4135, %v4134
  %v4186 = vpack.c.b16 %v4137, %v4136
  %v4187 = vpack.c.b16 %v4139, %v4138
  %v4188 = vpack.c.b16 %v4141, %v4140
  %v4189 = vpack.c.b16 %v4143, %v4142
  %v4190 = vpack.c.b16 %v4145, %v4144
  %v4191 = vpack.c.b16 %v4147, %v4146
  %v4192 = vpack.c.b16 %v4149, %v4148
  %v4193 = vpack.c.b16 %v4151, %v4150
  %v4194 = vpack.c.b16 %v4153, %v4152
  %v4195 = vpack.c.b16 %v4155, %v4154
  %v4196 = vpack.c.b16 %v4157, %v4156
  %v4197 = vpack.c.b16 %v4159, %v4158
  %v4198 = vpack.c.b16 %v4161, %v4160
  %v4199 = vpack.c.b16 %v4163, %v4162
  %v4200 = vpack.c.b16 %v4165, %v4164
  %v4201 = vpack.c.b16 %v4167, %v4166
  %v4202 = vpack.c.b16 %v4169, %v4168
  %v4203 = vpack.c.b16 %v4171, %v4170
  %4236 = vmatprep.subr.bf16.mxu0 0
  %4237 = vmatpush1.bf16.msra.mxu0 %v4172
  %4238 = vmatprep.subr.bf16.mxu0 0
  %4239 = vmatpush1.bf16.msra.mxu0 %v4173
  %4240 = vmatprep.subr.bf16.mxu0 0
  %4241 = vmatpush1.bf16.msra.mxu0 %v4174
  %4242 = vmatprep.subr.bf16.mxu0 0
  %4243 = vmatpush1.bf16.msra.mxu0 %v4175
  %4244 = vmatprep.subr.bf16.mxu0 0
  %4245 = vmatpush1.bf16.msra.mxu0 %v4176
  %4246 = vmatprep.subr.bf16.mxu0 0
  %4247 = vmatpush1.bf16.msra.mxu0 %v4177
  %4248 = vmatprep.subr.bf16.mxu0 0
  %4249 = vmatpush1.bf16.msra.mxu0 %v4178
  %4250 = vmatprep.subr.bf16.mxu0 0
  %4251 = vmatpush1.bf16.msra.mxu0 %v4179
  %4252 = vmatprep.subr.bf16.mxu0 0
  %4253 = vmatpush1.bf16.msra.mxu0 %v4180
  %4254 = vmatprep.subr.bf16.mxu0 0
  %4255 = vmatpush1.bf16.msra.mxu0 %v4181
  %4256 = vmatprep.subr.bf16.mxu0 0
  %4257 = vmatpush1.bf16.msra.mxu0 %v4182
  %4258 = vmatprep.subr.bf16.mxu0 0
  %4259 = vmatpush1.bf16.msra.mxu0 %v4183
  %4260 = vmatprep.subr.bf16.mxu0 0
  %4261 = vmatpush1.bf16.msra.mxu0 %v4184
  %4262 = vmatprep.subr.bf16.mxu0 0
  %4263 = vmatpush1.bf16.msra.mxu0 %v4185
  %4264 = vmatprep.subr.bf16.mxu0 0
  %4265 = vmatpush1.bf16.msra.mxu0 %v4186
  %4266 = vmatprep.subr.bf16.mxu0 0
  %4267 = vmatpush1.bf16.msra.mxu0 %v4187
  %4268 = vmatprep.mubr.bf16.mxu0 %v4005
  %4269 = vmatmul.mubr.bf16.gmra.mrb[0].mxu0 %v3988
  %v4270 = vpop.f32.mrb[0].mxu0
  %v4271 = vadd.f32 0.0, %v4270
  %v4272 = vpop.f32.mrb[0].mxu0
  %v4273 = vpop.f32.mrb[0].mxu0
  %v4274 = vadd.f32 0.0, %v4273
  %v4275 = vpop.f32.mrb[0].mxu0
  %4276 = vdwg.mxu0
  %4277 = vmatprep.subr.bf16.mxu0 0
  %4278 = vmatpush1.bf16.msra.mxu0 %v4188
  %4279 = vmatprep.subr.bf16.mxu0 0
  %4280 = vmatpush1.bf16.msra.mxu0 %v4189
  %4281 = vmatprep.subr.bf16.mxu0 0
  %4282 = vmatpush1.bf16.msra.mxu0 %v4190
  %4283 = vmatprep.subr.bf16.mxu0 0
  %4284 = vmatpush1.bf16.msra.mxu0 %v4191
  %4285 = vmatprep.subr.bf16.mxu0 0
  %4286 = vmatpush1.bf16.msra.mxu0 %v4192
  %4287 = vmatprep.subr.bf16.mxu0 0
  %4288 = vmatpush1.bf16.msra.mxu0 %v4193
  %4289 = vmatprep.subr.bf16.mxu0 0
  %4290 = vmatpush1.bf16.msra.mxu0 %v4194
  %4291 = vmatprep.subr.bf16.mxu0 0
  %4292 = vmatpush1.bf16.msra.mxu0 %v4195
  %4293 = vmatprep.subr.bf16.mxu0 0
  %4294 = vmatpush1.bf16.msra.mxu0 %v4196
  %4295 = vmatprep.subr.bf16.mxu0 0
  %4296 = vmatpush1.bf16.msra.mxu0 %v4197
  %4297 = vmatprep.subr.bf16.mxu0 0
  %4298 = vmatpush1.bf16.msra.mxu0 %v4198
  %4299 = vmatprep.subr.bf16.mxu0 0
  %4300 = vmatpush1.bf16.msra.mxu0 %v4199
  %4301 = vmatprep.subr.bf16.mxu0 0
  %4302 = vmatpush1.bf16.msra.mxu0 %v4200
  %4303 = vmatprep.subr.bf16.mxu0 0
  %4304 = vmatpush1.bf16.msra.mxu0 %v4201
  %4305 = vmatprep.subr.bf16.mxu0 0
  %4306 = vmatpush1.bf16.msra.mxu0 %v4202
  %4307 = vmatprep.subr.bf16.mxu0 0
  %4308 = vmatpush1.bf16.msra.mxu0 %v4203
  %4309 = vmatprep.mubr.bf16.mxu0 %v4039
  %4310 = vmatmul.mubr.bf16.gmra.mrb[0].mxu0 %v4022
  %v4311 = vpop.f32.mrb[0].mxu0
  %v4312 = vadd.f32 %v4271, %v4311
  %v4313 = vpop.f32.mrb[0].mxu0
  %v4314 = vpop.f32.mrb[0].mxu0
  %v4315 = vadd.f32 %v4274, %v4314
  %v4316 = vpop.f32.mrb[0].mxu0
  %4317 = vdwg.mxu0
  %v4320 = vunpack.c.l.b16 %v3813
  %v4321 = vunpack.c.h.b16 %v3813
  %v4322 = vunpack.c.l.b16 %v3814
  %v4323 = vunpack.c.h.b16 %v3814
  %v4324 = vpack.c.b16 %v4320, %v4320
  %v4325 = vpack.c.b16 %v4321, %v4321
  %v4326 = vpack.c.b16 %v4322, %v4322
  %v4327 = vpack.c.b16 %v4323, %v4323
  %v4328 = vrot.slane %v3963, 1
  %v4329 = vrot.slane %v4324, 1
  %v4330 = vsel %vm534, %v4328, %v4329
  %v4331 = vrot.slane %v3964, 1
  %v4332 = vrot.slane %v4325, 1
  %v4333 = vsel %vm534, %v4331, %v4332
  %v4334 = vrot.slane %v3965, 1
  %v4335 = vrot.slane %v4326, 1
  %v4336 = vsel %vm534, %v4334, %v4335
  %v4337 = vrot.slane %v3966, 1
  %v4338 = vrot.slane %v4327, 1
  %v4339 = vsel %vm534, %v4337, %v4338
  %v4408 = vunpack.c.l.b16 %v3815
  %v4409 = vunpack.c.l.b16 %v3816
  %v4410 = vunpack.c.l.b16 %v3817
  %v4411 = vunpack.c.l.b16 %v3818
  %v4412 = vunpack.c.l.b16 %v3819
  %v4413 = vunpack.c.l.b16 %v3820
  %v4414 = vunpack.c.l.b16 %v3821
  %v4415 = vunpack.c.l.b16 %v3822
  %v4416 = vunpack.c.l.b16 %v3823
  %v4417 = vunpack.c.l.b16 %v3824
  %v4418 = vunpack.c.l.b16 %v3825
  %v4419 = vunpack.c.l.b16 %v3826
  %v4420 = vunpack.c.l.b16 %v3827
  %v4421 = vunpack.c.l.b16 %v3828
  %v4422 = vunpack.c.l.b16 %v3829
  %v4423 = vunpack.c.l.b16 %v3830
  %v4424 = vunpack.c.l.b16 %v3831
  %v4425 = vunpack.c.l.b16 %v3832
  %v4426 = vunpack.c.l.b16 %v3833
  %v4427 = vunpack.c.l.b16 %v3834
  %v4428 = vunpack.c.l.b16 %v3835
  %v4429 = vunpack.c.l.b16 %v3836
  %v4430 = vunpack.c.l.b16 %v3837
  %v4431 = vunpack.c.l.b16 %v3838
  %v4432 = vunpack.c.l.b16 %v3839
  %v4433 = vunpack.c.l.b16 %v3840
  %v4434 = vunpack.c.l.b16 %v3841
  %v4435 = vunpack.c.l.b16 %v3842
  %v4436 = vunpack.c.l.b16 %v3843
  %v4437 = vunpack.c.l.b16 %v3844
  %v4438 = vunpack.c.l.b16 %v3845
  %v4439 = vunpack.c.l.b16 %v3846
  %v4440 = vunpack.c.l.b16 %v3847
  %v4441 = vunpack.c.l.b16 %v3848
  %v4442 = vunpack.c.l.b16 %v3849
  %v4443 = vunpack.c.l.b16 %v3850
  %v4444 = vunpack.c.l.b16 %v3851
  %v4445 = vunpack.c.l.b16 %v3852
  %v4446 = vunpack.c.l.b16 %v3853
  %v4447 = vunpack.c.l.b16 %v3854
  %v4448 = vunpack.c.l.b16 %v3855
  %v4449 = vunpack.c.l.b16 %v3856
  %v4450 = vunpack.c.l.b16 %v3857
  %v4451 = vunpack.c.l.b16 %v3858
  %v4452 = vunpack.c.l.b16 %v3859
  %v4453 = vunpack.c.l.b16 %v3860
  %v4454 = vunpack.c.l.b16 %v3861
  %v4455 = vunpack.c.l.b16 %v3862
  %v4456 = vunpack.c.l.b16 %v3863
  %v4457 = vunpack.c.l.b16 %v3864
  %v4458 = vunpack.c.l.b16 %v3865
  %v4459 = vunpack.c.l.b16 %v3866
  %v4460 = vunpack.c.l.b16 %v3867
  %v4461 = vunpack.c.l.b16 %v3868
  %v4462 = vunpack.c.l.b16 %v3869
  %v4463 = vunpack.c.l.b16 %v3870
  %v4464 = vunpack.c.l.b16 %v3871
  %v4465 = vunpack.c.l.b16 %v3872
  %v4466 = vunpack.c.l.b16 %v3873
  %v4467 = vunpack.c.l.b16 %v3874
  %v4468 = vunpack.c.l.b16 %v3875
  %v4469 = vunpack.c.l.b16 %v3876
  %v4470 = vunpack.c.l.b16 %v3877
  %v4471 = vunpack.c.l.b16 %v3878
  %v4472 = vpack.c.b16 %v4409, %v4408
  %v4473 = vpack.c.b16 %v4411, %v4410
  %v4474 = vpack.c.b16 %v4413, %v4412
  %v4475 = vpack.c.b16 %v4415, %v4414
  %v4476 = vpack.c.b16 %v4417, %v4416
  %v4477 = vpack.c.b16 %v4419, %v4418
  %v4478 = vpack.c.b16 %v4421, %v4420
  %v4479 = vpack.c.b16 %v4423, %v4422
  %v4480 = vpack.c.b16 %v4425, %v4424
  %v4481 = vpack.c.b16 %v4427, %v4426
  %v4482 = vpack.c.b16 %v4429, %v4428
  %v4483 = vpack.c.b16 %v4431, %v4430
  %v4484 = vpack.c.b16 %v4433, %v4432
  %v4485 = vpack.c.b16 %v4435, %v4434
  %v4486 = vpack.c.b16 %v4437, %v4436
  %v4487 = vpack.c.b16 %v4439, %v4438
  %v4488 = vpack.c.b16 %v4441, %v4440
  %v4489 = vpack.c.b16 %v4443, %v4442
  %v4490 = vpack.c.b16 %v4445, %v4444
  %v4491 = vpack.c.b16 %v4447, %v4446
  %v4492 = vpack.c.b16 %v4449, %v4448
  %v4493 = vpack.c.b16 %v4451, %v4450
  %v4494 = vpack.c.b16 %v4453, %v4452
  %v4495 = vpack.c.b16 %v4455, %v4454
  %v4496 = vpack.c.b16 %v4457, %v4456
  %v4497 = vpack.c.b16 %v4459, %v4458
  %v4498 = vpack.c.b16 %v4461, %v4460
  %v4499 = vpack.c.b16 %v4463, %v4462
  %v4500 = vpack.c.b16 %v4465, %v4464
  %v4501 = vpack.c.b16 %v4467, %v4466
  %v4502 = vpack.c.b16 %v4469, %v4468
  %v4503 = vpack.c.b16 %v4471, %v4470
  %4536 = vmatprep.subr.bf16.mxu0 0
  %4537 = vmatpush1.bf16.msra.mxu0 %v4472
  %4538 = vmatprep.subr.bf16.mxu0 0
  %4539 = vmatpush1.bf16.msra.mxu0 %v4473
  %4540 = vmatprep.subr.bf16.mxu0 0
  %4541 = vmatpush1.bf16.msra.mxu0 %v4474
  %4542 = vmatprep.subr.bf16.mxu0 0
  %4543 = vmatpush1.bf16.msra.mxu0 %v4475
  %4544 = vmatprep.subr.bf16.mxu0 0
  %4545 = vmatpush1.bf16.msra.mxu0 %v4476
  %4546 = vmatprep.subr.bf16.mxu0 0
  %4547 = vmatpush1.bf16.msra.mxu0 %v4477
  %4548 = vmatprep.subr.bf16.mxu0 0
  %4549 = vmatpush1.bf16.msra.mxu0 %v4478
  %4550 = vmatprep.subr.bf16.mxu0 0
  %4551 = vmatpush1.bf16.msra.mxu0 %v4479
  %4552 = vmatprep.subr.bf16.mxu0 0
  %4553 = vmatpush1.bf16.msra.mxu0 %v4480
  %4554 = vmatprep.subr.bf16.mxu0 0
  %4555 = vmatpush1.bf16.msra.mxu0 %v4481
  %4556 = vmatprep.subr.bf16.mxu0 0
  %4557 = vmatpush1.bf16.msra.mxu0 %v4482
  %4558 = vmatprep.subr.bf16.mxu0 0
  %4559 = vmatpush1.bf16.msra.mxu0 %v4483
  %4560 = vmatprep.subr.bf16.mxu0 0
  %4561 = vmatpush1.bf16.msra.mxu0 %v4484
  %4562 = vmatprep.subr.bf16.mxu0 0
  %4563 = vmatpush1.bf16.msra.mxu0 %v4485
  %4564 = vmatprep.subr.bf16.mxu0 0
  %4565 = vmatpush1.bf16.msra.mxu0 %v4486
  %4566 = vmatprep.subr.bf16.mxu0 0
  %4567 = vmatpush1.bf16.msra.mxu0 %v4487
  %4568 = vmatprep.mubr.bf16.mxu0 %v4333
  %4569 = vmatmul.mubr.bf16.gmra.mrb[0].mxu0 %v4330
  %v4570 = vpop.f32.mrb[0].mxu0
  %v4571 = vadd.f32 %v4312, %v4570
  %v4572 = vpop.f32.mrb[0].mxu0
  %v4573 = vpop.f32.mrb[0].mxu0
  %v4574 = vadd.f32 %v4315, %v4573
  %v4575 = vpop.f32.mrb[0].mxu0
  %4576 = vdwg.mxu0
  %4577 = vmatprep.subr.bf16.mxu0 0
  %4578 = vmatpush1.bf16.msra.mxu0 %v4488
  %4579 = vmatprep.subr.bf16.mxu0 0
  %4580 = vmatpush1.bf16.msra.mxu0 %v4489
  %4581 = vmatprep.subr.bf16.mxu0 0
  %4582 = vmatpush1.bf16.msra.mxu0 %v4490
  %4583 = vmatprep.subr.bf16.mxu0 0
  %4584 = vmatpush1.bf16.msra.mxu0 %v4491
  %4585 = vmatprep.subr.bf16.mxu0 0
  %4586 = vmatpush1.bf16.msra.mxu0 %v4492
  %4587 = vmatprep.subr.bf16.mxu0 0
  %4588 = vmatpush1.bf16.msra.mxu0 %v4493
  %4589 = vmatprep.subr.bf16.mxu0 0
  %4590 = vmatpush1.bf16.msra.mxu0 %v4494
  %4591 = vmatprep.subr.bf16.mxu0 0
  %4592 = vmatpush1.bf16.msra.mxu0 %v4495
  %4593 = vmatprep.subr.bf16.mxu0 0
  %4594 = vmatpush1.bf16.msra.mxu0 %v4496
  %4595 = vmatprep.subr.bf16.mxu0 0
  %4596 = vmatpush1.bf16.msra.mxu0 %v4497
  %4597 = vmatprep.subr.bf16.mxu0 0
  %4598 = vmatpush1.bf16.msra.mxu0 %v4498
  %4599 = vmatprep.subr.bf16.mxu0 0
  %4600 = vmatpush1.bf16.msra.mxu0 %v4499
  %4601 = vmatprep.subr.bf16.mxu0 0
  %4602 = vmatpush1.bf16.msra.mxu0 %v4500
  %4603 = vmatprep.subr.bf16.mxu0 0
  %4604 = vmatpush1.bf16.msra.mxu0 %v4501
  %4605 = vmatprep.subr.bf16.mxu0 0
  %4606 = vmatpush1.bf16.msra.mxu0 %v4502
  %4607 = vmatprep.subr.bf16.mxu0 0
  %4608 = vmatpush1.bf16.msra.mxu0 %v4503
  %4609 = vmatprep.mubr.bf16.mxu0 %v4339
  %4610 = vmatmul.mubr.bf16.gmra.mrb[0].mxu0 %v4336
  %v4611 = vpop.f32.mrb[0].mxu0
  %v4612 = vadd.f32 %v4571, %v4611
  %v4613 = vpop.f32.mrb[0].mxu0
  %v4614 = vpop.f32.mrb[0].mxu0
  %v4615 = vadd.f32 %v4574, %v4614
  %v4616 = vpop.f32.mrb[0].mxu0
  %4617 = vdwg.mxu0
  %v4618 = vld [vmem:[#allocation3 + $0x20] sm:$0xcc]
  %v4619 = vld [vmem:[#allocation3 + $0x28] sm:$0xcc]
  %v4620 = vld [vmem:[%s3436] sm:$0xf]
  %v4621 = vld [vmem:[%s3436 + $0x4] sm:$0xf]
  %v4622 = vld [vmem:[%s3436 + $0x8] sm:$0xf]
  %v4623 = vld [vmem:[%s3436 + $0xc] sm:$0xf]
  %v4624 = vld [vmem:[%s3436 + $0x10] sm:$0xf]
  %v4625 = vld [vmem:[%s3436 + $0x14] sm:$0xf]
  %v4626 = vld [vmem:[%s3436 + $0x18] sm:$0xf]
  %v4627 = vld [vmem:[%s3436 + $0x1c] sm:$0xf]
  %v4628 = vld [vmem:[%s3436 + $0x20] sm:$0xf]
  %v4629 = vld [vmem:[%s3436 + $0x24] sm:$0xf]
  %v4630 = vld [vmem:[%s3436 + $0x28] sm:$0xf]
  %v4631 = vld [vmem:[%s3436 + $0x2c] sm:$0xf]
  %v4632 = vld [vmem:[%s3436 + $0x30] sm:$0xf]
  %v4633 = vld [vmem:[%s3436 + $0x34] sm:$0xf]
  %v4634 = vld [vmem:[%s3436 + $0x38] sm:$0xf]
  %v4635 = vld [vmem:[%s3436 + $0x3c] sm:$0xf]
  %v4636 = vld [vmem:[%s3436 + $0x40] sm:$0xf]
  %v4637 = vld [vmem:[%s3436 + $0x44] sm:$0xf]
  %v4638 = vld [vmem:[%s3436 + $0x48] sm:$0xf]
  %v4639 = vld [vmem:[%s3436 + $0x4c] sm:$0xf]
  %v4640 = vld [vmem:[%s3436 + $0x50] sm:$0xf]
  %v4641 = vld [vmem:[%s3436 + $0x54] sm:$0xf]
  %v4642 = vld [vmem:[%s3436 + $0x58] sm:$0xf]
  %v4643 = vld [vmem:[%s3436 + $0x5c] sm:$0xf]
  %v4644 = vld [vmem:[%s3436 + $0x60] sm:$0xf]
  %v4645 = vld [vmem:[%s3436 + $0x64] sm:$0xf]
  %v4646 = vld [vmem:[%s3436 + $0x68] sm:$0xf]
  %v4647 = vld [vmem:[%s3436 + $0x6c] sm:$0xf]
  %v4648 = vld [vmem:[%s3436 + $0x70] sm:$0xf]
  %v4649 = vld [vmem:[%s3436 + $0x74] sm:$0xf]
  %v4650 = vld [vmem:[%s3436 + $0x78] sm:$0xf]
  %v4651 = vld [vmem:[%s3436 + $0x7c] sm:$0xf]
  %v4652 = vld [vmem:[%s3436 + $0x80] sm:$0xf]
  %v4653 = vld [vmem:[%s3436 + $0x84] sm:$0xf]
  %v4654 = vld [vmem:[%s3436 + $0x88] sm:$0xf]
  %v4655 = vld [vmem:[%s3436 + $0x8c] sm:$0xf]
  %v4656 = vld [vmem:[%s3436 + $0x90] sm:$0xf]
  %v4657 = vld [vmem:[%s3436 + $0x94] sm:$0xf]
  %v4658 = vld [vmem:[%s3436 + $0x98] sm:$0xf]
  %v4659 = vld [vmem:[%s3436 + $0x9c] sm:$0xf]
  %v4660 = vld [vmem:[%s3436 + $0xa0] sm:$0xf]
  %v4661 = vld [vmem:[%s3436 + $0xa4] sm:$0xf]
  %v4662 = vld [vmem:[%s3436 + $0xa8] sm:$0xf]
  %v4663 = vld [vmem:[%s3436 + $0xac] sm:$0xf]
  %v4664 = vld [vmem:[%s3436 + $0xb0] sm:$0xf]
  %v4665 = vld [vmem:[%s3436 + $0xb4] sm:$0xf]
  %v4666 = vld [vmem:[%s3436 + $0xb8] sm:$0xf]
  %v4667 = vld [vmem:[%s3436 + $0xbc] sm:$0xf]
  %v4668 = vld [vmem:[%s3436 + $0xc0] sm:$0xf]
  %v4669 = vld [vmem:[%s3436 + $0xc4] sm:$0xf]
  %v4670 = vld [vmem:[%s3436 + $0xc8] sm:$0xf]
  %v4671 = vld [vmem:[%s3436 + $0xcc] sm:$0xf]
  %v4672 = vld [vmem:[%s3436 + $0xd0] sm:$0xf]
  %v4673 = vld [vmem:[%s3436 + $0xd4] sm:$0xf]
  %v4674 = vld [vmem:[%s3436 + $0xd8] sm:$0xf]
  %v4675 = vld [vmem:[%s3436 + $0xdc] sm:$0xf]
  %v4676 = vld [vmem:[%s3436 + $0xe0] sm:$0xf]
  %v4677 = vld [vmem:[%s3436 + $0xe4] sm:$0xf]
  %v4678 = vld [vmem:[%s3436 + $0xe8] sm:$0xf]
  %v4679 = vld [vmem:[%s3436 + $0xec] sm:$0xf]
  %v4680 = vld [vmem:[%s3436 + $0xf0] sm:$0xf]
  %v4681 = vld [vmem:[%s3436 + $0xf4] sm:$0xf]
  %v4682 = vld [vmem:[%s3436 + $0xf8] sm:$0xf]
  %v4683 = vld [vmem:[%s3436 + $0xfc] sm:$0xf]
  %v4686 = vunpack.c.l.b16 %v4618
  %v4687 = vunpack.c.h.b16 %v4618
  %v4688 = vunpack.c.l.b16 %v4619
  %v4689 = vunpack.c.h.b16 %v4619
  %v4690 = vpack.c.b16 %v3955, %v4686
  %v4691 = vpack.c.b16 %v3956, %v4687
  %v4692 = vpack.c.b16 %v3957, %v4688
  %v4693 = vpack.c.b16 %v3958, %v4689
  %vm4694 = vcmask 1045504
  %v4695 = vrot.slane %v4690, 2
  %v4696 = vrot.slane %v3967, 2
  %v4697 = vsel %vm4694, %v4695, %v4696
  %v4698 = vrot.slane %v4691, 2
  %v4699 = vrot.slane %v3968, 2
  %v4700 = vsel %vm4694, %v4698, %v4699
  %v4701 = vrot.slane %v4692, 2
  %v4702 = vrot.slane %v3969, 2
  %v4703 = vsel %vm4694, %v4701, %v4702
  %v4704 = vrot.slane %v4693, 2
  %v4705 = vrot.slane %v3970, 2
  %v4706 = vsel %vm4694, %v4704, %v4705
  %v4775 = vunpack.c.l.b16 %v4620
  %v4776 = vunpack.c.l.b16 %v4621
  %v4777 = vunpack.c.l.b16 %v4622
  %v4778 = vunpack.c.l.b16 %v4623
  %v4779 = vunpack.c.l.b16 %v4624
  %v4780 = vunpack.c.l.b16 %v4625
  %v4781 = vunpack.c.l.b16 %v4626
  %v4782 = vunpack.c.l.b16 %v4627
  %v4783 = vunpack.c.l.b16 %v4628
  %v4784 = vunpack.c.l.b16 %v4629
  %v4785 = vunpack.c.l.b16 %v4630
  %v4786 = vunpack.c.l.b16 %v4631
  %v4787 = vunpack.c.l.b16 %v4632
  %v4788 = vunpack.c.l.b16 %v4633
  %v4789 = vunpack.c.l.b16 %v4634
  %v4790 = vunpack.c.l.b16 %v4635
  %v4791 = vunpack.c.l.b16 %v4636
  %v4792 = vunpack.c.l.b16 %v4637
  %v4793 = vunpack.c.l.b16 %v4638
  %v4794 = vunpack.c.l.b16 %v4639
  %v4795 = vunpack.c.l.b16 %v4640
  %v4796 = vunpack.c.l.b16 %v4641
  %v4797 = vunpack.c.l.b16 %v4642
  %v4798 = vunpack.c.l.b16 %v4643
  %v4799 = vunpack.c.l.b16 %v4644
  %v4800 = vunpack.c.l.b16 %v4645
  %v4801 = vunpack.c.l.b16 %v4646
  %v4802 = vunpack.c.l.b16 %v4647
  %v4803 = vunpack.c.l.b16 %v4648
  %v4804 = vunpack.c.l.b16 %v4649
  %v4805 = vunpack.c.l.b16 %v4650
  %v4806 = vunpack.c.l.b16 %v4651
  %v4807 = vunpack.c.l.b16 %v4652
  %v4808 = vunpack.c.l.b16 %v4653
  %v4809 = vunpack.c.l.b16 %v4654
  %v4810 = vunpack.c.l.b16 %v4655
  %v4811 = vunpack.c.l.b16 %v4656
  %v4812 = vunpack.c.l.b16 %v4657
  %v4813 = vunpack.c.l.b16 %v4658
  %v4814 = vunpack.c.l.b16 %v4659
  %v4815 = vunpack.c.l.b16 %v4660
  %v4816 = vunpack.c.l.b16 %v4661
  %v4817 = vunpack.c.l.b16 %v4662
  %v4818 = vunpack.c.l.b16 %v4663
  %v4819 = vunpack.c.l.b16 %v4664
  %v4820 = vunpack.c.l.b16 %v4665
  %v4821 = vunpack.c.l.b16 %v4666
  %v4822 = vunpack.c.l.b16 %v4667
  %v4823 = vunpack.c.l.b16 %v4668
  %v4824 = vunpack.c.l.b16 %v4669
  %v4825 = vunpack.c.l.b16 %v4670
  %v4826 = vunpack.c.l.b16 %v4671
  %v4827 = vunpack.c.l.b16 %v4672
  %v4828 = vunpack.c.l.b16 %v4673
  %v4829 = vunpack.c.l.b16 %v4674
  %v4830 = vunpack.c.l.b16 %v4675
  %v4831 = vunpack.c.l.b16 %v4676
  %v4832 = vunpack.c.l.b16 %v4677
  %v4833 = vunpack.c.l.b16 %v4678
  %v4834 = vunpack.c.l.b16 %v4679
  %v4835 = vunpack.c.l.b16 %v4680
  %v4836 = vunpack.c.l.b16 %v4681
  %v4837 = vunpack.c.l.b16 %v4682
  %v4838 = vunpack.c.l.b16 %v4683
  %v4839 = vpack.c.b16 %v4776, %v4775
  %v4840 = vpack.c.b16 %v4778, %v4777
  %v4841 = vpack.c.b16 %v4780, %v4779
  %v4842 = vpack.c.b16 %v4782, %v4781
  %v4843 = vpack.c.b16 %v4784, %v4783
  %v4844 = vpack.c.b16 %v4786, %v4785
  %v4845 = vpack.c.b16 %v4788, %v4787
  %v4846 = vpack.c.b16 %v4790, %v4789
  %v4847 = vpack.c.b16 %v4792, %v4791
  %v4848 = vpack.c.b16 %v4794, %v4793
  %v4849 = vpack.c.b16 %v4796, %v4795
  %v4850 = vpack.c.b16 %v4798, %v4797
  %v4851 = vpack.c.b16 %v4800, %v4799
  %v4852 = vpack.c.b16 %v4802, %v4801
  %v4853 = vpack.c.b16 %v4804, %v4803
  %v4854 = vpack.c.b16 %v4806, %v4805
  %v4855 = vpack.c.b16 %v4808, %v4807
  %v4856 = vpack.c.b16 %v4810, %v4809
  %v4857 = vpack.c.b16 %v4812, %v4811
  %v4858 = vpack.c.b16 %v4814, %v4813
  %v4859 = vpack.c.b16 %v4816, %v4815
  %v4860 = vpack.c.b16 %v4818, %v4817
  %v4861 = vpack.c.b16 %v4820, %v4819
  %v4862 = vpack.c.b16 %v4822, %v4821
  %v4863 = vpack.c.b16 %v4824, %v4823
  %v4864 = vpack.c.b16 %v4826, %v4825
  %v4865 = vpack.c.b16 %v4828, %v4827
  %v4866 = vpack.c.b16 %v4830, %v4829
  %v4867 = vpack.c.b16 %v4832, %v4831
  %v4868 = vpack.c.b16 %v4834, %v4833
  %v4869 = vpack.c.b16 %v4836, %v4835
  %v4870 = vpack.c.b16 %v4838, %v4837
  %4903 = vmatprep.subr.bf16.mxu0 0
  %4904 = vmatpush1.bf16.msra.mxu0 %v4839
  %4905 = vmatprep.subr.bf16.mxu0 0
  %4906 = vmatpush1.bf16.msra.mxu0 %v4840
  %4907 = vmatprep.subr.bf16.mxu0 0
  %4908 = vmatpush1.bf16.msra.mxu0 %v4841
  %4909 = vmatprep.subr.bf16.mxu0 0
  %4910 = vmatpush1.bf16.msra.mxu0 %v4842
  %4911 = vmatprep.subr.bf16.mxu0 0
  %4912 = vmatpush1.bf16.msra.mxu0 %v4843
  %4913 = vmatprep.subr.bf16.mxu0 0
  %4914 = vmatpush1.bf16.msra.mxu0 %v4844
  %4915 = vmatprep.subr.bf16.mxu0 0
  %4916 = vmatpush1.bf16.msra.mxu0 %v4845
  %4917 = vmatprep.subr.bf16.mxu0 0
  %4918 = vmatpush1.bf16.msra.mxu0 %v4846
  %4919 = vmatprep.subr.bf16.mxu0 0
  %4920 = vmatpush1.bf16.msra.mxu0 %v4847
  %4921 = vmatprep.subr.bf16.mxu0 0
  %4922 = vmatpush1.bf16.msra.mxu0 %v4848
  %4923 = vmatprep.subr.bf16.mxu0 0
  %4924 = vmatpush1.bf16.msra.mxu0 %v4849
  %4925 = vmatprep.subr.bf16.mxu0 0
  %4926 = vmatpush1.bf16.msra.mxu0 %v4850
  %4927 = vmatprep.subr.bf16.mxu0 0
  %4928 = vmatpush1.bf16.msra.mxu0 %v4851
  %4929 = vmatprep.subr.bf16.mxu0 0
  %4930 = vmatpush1.bf16.msra.mxu0 %v4852
  %4931 = vmatprep.subr.bf16.mxu0 0
  %4932 = vmatpush1.bf16.msra.mxu0 %v4853
  %4933 = vmatprep.subr.bf16.mxu0 0
  %4934 = vmatpush1.bf16.msra.mxu0 %v4854
  %4935 = vmatprep.mubr.bf16.mxu0 %v4700
  %4936 = vmatmul.mubr.bf16.gmra.mrb[0].mxu0 %v4697
  %v4937 = vpop.f32.mrb[0].mxu0
  %v4938 = vadd.f32 0.0, %v4937
  %v4939 = vpop.f32.mrb[0].mxu0
  %v4940 = vpop.f32.mrb[0].mxu0
  %v4941 = vadd.f32 0.0, %v4940
  %v4942 = vpop.f32.mrb[0].mxu0
  %4943 = vdwg.mxu0
  %4944 = vmatprep.subr.bf16.mxu0 0
  %4945 = vmatpush1.bf16.msra.mxu0 %v4855
  %4946 = vmatprep.subr.bf16.mxu0 0
  %4947 = vmatpush1.bf16.msra.mxu0 %v4856
  %4948 = vmatprep.subr.bf16.mxu0 0
  %4949 = vmatpush1.bf16.msra.mxu0 %v4857
  %4950 = vmatprep.subr.bf16.mxu0 0
  %4951 = vmatpush1.bf16.msra.mxu0 %v4858
  %4952 = vmatprep.subr.bf16.mxu0 0
  %4953 = vmatpush1.bf16.msra.mxu0 %v4859
  %4954 = vmatprep.subr.bf16.mxu0 0
  %4955 = vmatpush1.bf16.msra.mxu0 %v4860
  %4956 = vmatprep.subr.bf16.mxu0 0
  %4957 = vmatpush1.bf16.msra.mxu0 %v4861
  %4958 = vmatprep.subr.bf16.mxu0 0
  %4959 = vmatpush1.bf16.msra.mxu0 %v4862
  %4960 = vmatprep.subr.bf16.mxu0 0
  %4961 = vmatpush1.bf16.msra.mxu0 %v4863
  %4962 = vmatprep.subr.bf16.mxu0 0
  %4963 = vmatpush1.bf16.msra.mxu0 %v4864
  %4964 = vmatprep.subr.bf16.mxu0 0
  %4965 = vmatpush1.bf16.msra.mxu0 %v4865
  %4966 = vmatprep.subr.bf16.mxu0 0
  %4967 = vmatpush1.bf16.msra.mxu0 %v4866
  %4968 = vmatprep.subr.bf16.mxu0 0
  %4969 = vmatpush1.bf16.msra.mxu0 %v4867
  %4970 = vmatprep.subr.bf16.mxu0 0
  %4971 = vmatpush1.bf16.msra.mxu0 %v4868
  %4972 = vmatprep.subr.bf16.mxu0 0
  %4973 = vmatpush1.bf16.msra.mxu0 %v4869
  %4974 = vmatprep.subr.bf16.mxu0 0
  %4975 = vmatpush1.bf16.msra.mxu0 %v4870
  %4976 = vmatprep.mubr.bf16.mxu0 %v4706
  %4977 = vmatmul.mubr.bf16.gmra.mrb[0].mxu0 %v4703
  %v4978 = vpop.f32.mrb[0].mxu0
  %v4979 = vadd.f32 %v4938, %v4978
  %v4980 = vpop.f32.mrb[0].mxu0
  %v4981 = vpop.f32.mrb[0].mxu0
  %v4982 = vadd.f32 %v4941, %v4981
  %v4983 = vpop.f32.mrb[0].mxu0
  %4984 = vdwg.mxu0
  %v4985 = vadd.f32 %v4612, %v4979
  %v4986 = vadd.f32 %v4615, %v4982
  %v4987 = vld [vmem:[%s6] sm:$0xff]
  %v4988 = vld [vmem:[%s6 + $0x8] sm:$0xff]
  %v4989 = vadd.f32 %v4985, %v4987
  %v4990 = vadd.f32 %v4986, %v4988
  %s4991 = scalar_lea.vmem %s7, 16
  %4992 = vst [vmem:[%s4991] sm:$0xff] %v4989
  %4993 = vst [vmem:[%s4991 + $0x8] sm:$0xff] %v4990
  // Predicated region
  $region30: #{nn_forward.1} parent=0 // pred_check
    _
  $region31: #{nn_forward.1} parent=0 // pred_check_branch
    %4995 = sbr.rel (0) target = $region33
  $region32: #{nn_forward.1} parent=0 // pred_region
    _
  $region33: #{nn_forward.1} parent=0 // pred_fallthru
    _
  // Predicated region
  $region34: #{nn_forward.1} parent=0 // pred_check
    _
  $region35: #{nn_forward.1} parent=0 // pred_check_branch
    %4997 = sbr.rel (0) target = $region37
  $region36: #{nn_forward.1} parent=0 // pred_region
    _
  $region37: #{nn_forward.1} parent=0 // pred_fallthru
    _

</llo_original>
